<compile_context>
chip_gen: v6e
topology: v6e:2x2x1
jax: 0.10.0
libtpu: 0.0.40
codegen_flags: <defaults>
</compile_context>

<pallas_src>
import functools

import jax
import jax.numpy as jnp
from jax.experimental import pallas as pl
from jax.experimental.pallas import tpu as pltpu

# ----------------------------- config (mirrors TagGCN._config) ---------------
DIM_LATENT = 32          # embedding dim
DIM_WEIGHT = 8           # edge-weight embedding dim
DIM_ATTEN = 16           # attention dim
NEIGHBOR_K = 4           # sampled neighbors per node
DIM_LAYER_LIST = [DIM_LATENT]          # one BasicLayer -> num_layer == 1
NUM_LAYER = len(DIM_LAYER_LIST)
PACK = 64                # per-neighbor packed lane width: [ej|ew|pad] -> 64
                         # K * PACK = 256 lanes (2 full vregs)

NUM_USER, NUM_ITEM, NUM_TAG, NUM_WEIGHT = 8, 12, 10, 6
NUM_LIST = [NUM_USER, NUM_ITEM, NUM_TAG]


def _round_up(x, m):
    return (x + m - 1) // m * m


def _block_diag(w, k):
    r, c = w.shape
    out = jnp.zeros((k * r, k * c), w.dtype)
    for kk in range(k):
        out = out.at[kk * r:(kk + 1) * r, kk * c:(kk + 1) * c].set(w)
    return out


# ----------------------------- Pallas kernels --------------------------------
def _node_layer_kernel(ev_ref, xa_ref, xb_ref,
                       wblk_a_ref, w1v_a_ref, bt_a_ref, vt_a_ref,
                       wblk_b_ref, w1v_b_ref, bt_b_ref, vt_b_ref,
                       u_ref, q_ref, p_ref, out_ref, *, k, d, pack):
    """Fused per-node-type layer: 2x Attention1 + _atten2 + L2 normalize.

    ev    : (tm, d)        center embeddings for this node tile
    xa/xb : (tm, k*pack)   packed gathered neighbors, [ej | ew | 0] per k
    wblk  : (k*pack, k*A)  block-diag of [W_2 ; W_1[d:] ; 0]  (fused matmul)
    w1v   : (d, A)         W_1[:d]      bt/vt : (1, k*A) pre-tiled b / v
    U/q/p : _atten2 params
    out   : (tm, 2d)       [original embedding | normalized layer output]
    """
    ev = ev_ref[...]
    tm = ev.shape[0]

    def attention1(x_ref, wblk_ref, w1v_ref, bt_ref, vt_ref):
        a_dim = w1v_ref.shape[1]
        xp = x_ref[...]                                   # (tm, k*pack)
        # single fused MXU contraction: [ej_k|ew_k] @ [W_2; W_1[d:]] for all k
        av = jnp.dot(xp, wblk_ref[...],
                     preferred_element_type=jnp.float32)  # (tm, k*A)
        # shared center term ev @ W_1[:d] + b
        c = jnp.dot(ev, w1v_ref[...],
                    preferred_element_type=jnp.float32)   # (tm, A)
        av = av + jnp.concatenate([c] * k, axis=1) + bt_ref[...]
        x = jnp.maximum(av, 0.0)
        xv = x * vt_ref[...]                              # (tm, k*A)
        # per-neighbor logits (unrolled; small lane-group reductions)
        s = [jnp.sum(xv[:, kk * a_dim:(kk + 1) * a_dim], axis=1, keepdims=True)
             for kk in range(k)]
        m = s[0]
        for kk in range(1, k):
            m = jnp.maximum(m, s[kk])
        w = [jnp.exp(sk - m) for sk in s]
        denom = w[0]
        for kk in range(1, k):
            denom = denom + w[kk]
        inv = pl.reciprocal(denom, approx=True)
        # weighted neighbor sum, unrolled over K on (tm, d) slices of xp
        acc = w[0] * xp[:, 0:d]
        for kk in range(1, k):
            acc = acc + w[kk] * xp[:, kk * pack:kk * pack + d]
        return acc * inv                                  # (tm, d)

    e_a = attention1(xa_ref, wblk_a_ref, w1v_a_ref, bt_a_ref, vt_a_ref)
    e_b = attention1(xb_ref, wblk_b_ref, w1v_b_ref, bt_b_ref, vt_b_ref)

    # _atten2 over {center, branch A, branch B}: one stacked matmul for the
    # three views.  softmax + weighted sum is permutation invariant, so the
    # (user, item, tag) stacking order of the reference does not matter.
    stacked = jnp.concatenate([ev, e_a, e_b], axis=0)     # (3*tm, d)
    h = jnp.dot(stacked, u_ref[...],
                preferred_element_type=jnp.float32) + q_ref[...]
    h = jnp.maximum(h, 0.0)
    sc = jnp.sum(h * p_ref[...], axis=1, keepdims=True)   # (3*tm, 1)
    s_v, s_a, s_b = sc[0:tm], sc[tm:2 * tm], sc[2 * tm:3 * tm]
    m2 = jnp.maximum(jnp.maximum(s_v, s_a), s_b)
    w_v = jnp.exp(s_v - m2)
    w_a = jnp.exp(s_a - m2)
    w_b = jnp.exp(s_b - m2)
    inv2 = pl.reciprocal(w_v + w_a + w_b, approx=True)
    e_new = (w_v * ev + w_a * e_a + w_b * e_b) * inv2     # (tm, d)

    # fused F.normalize(p=2, dim=1) epilogue (dropout = identity in eval mode)
    nrm = jnp.sqrt(jnp.sum(e_new * e_new, axis=1, keepdims=True))
    e_norm = e_new * pl.reciprocal(jnp.maximum(nrm, 1e-12), approx=True)

    # single wide store: [original embedding | normalized layer-1 output]
    out_ref[...] = jnp.concatenate([ev, e_norm], axis=1)


def _adj_matmul_kernel(adj_ref, e_ref, out_ref, acc_ref):
    """Tiled adjacency propagation: out[i] = sum_k adj[i,k] @ e[k]."""
    @pl.when(pl.program_id(1) == 0)
    def _():
        acc_ref[...] = jnp.zeros_like(acc_ref)

    acc_ref[...] += jnp.dot(adj_ref[...], e_ref[...],
                            preferred_element_type=jnp.float32)

    @pl.when(pl.program_id(1) == pl.num_programs(1) - 1)
    def _():
        out_ref[...] = acc_ref[...]


# ----------------------------- Pallas wrappers --------------------------------
def _prep_attn1(p, k=NEIGHBOR_K, pack=PACK):
    """Precompute block-diagonal / pre-tiled weights for one Attention1."""
    d = p['W_2'].shape[0]
    a = p['W_2'].shape[1]
    dw = p['W_1'].shape[0] - d
    w1v = p['W_1'][:d]                                   # center part of W_1
    w1w = p['W_1'][d:]                                   # edge-weight part
    wcat = jnp.concatenate(
        [p['W_2'], w1w, jnp.zeros((pack - d - dw, a), p['W_1'].dtype)], axis=0)
    wblk = _block_diag(wcat, k)                          # (k*pack, k*A)
    bt = jnp.tile(p['b'], (1, k))                        # (1, k*A) hoisted bcast
    vt = jnp.tile(p['v'], (1, k))                        # (1, k*A)
    return wblk, w1v, bt, vt


def _pack_neighbors(ej, ew, v_j, v_w, pack=PACK):
    """Gather + lane-dense pack of neighbors: (N, K*PACK), [ej | ew | 0]/k."""
    # TODO(synk): move this gather inside the kernel (scalar-prefetch index
    # tables + make_async_copy) at real graph sizes to avoid the extra HBM
    # round trip of the XLA gather.
    zeroj = jnp.zeros((1, ej.shape[1]), ej.dtype)
    zerow = jnp.zeros((1, ew.shape[1]), ew.dtype)
    enj = jnp.concatenate([zeroj, ej], axis=0)[v_j]      # (N, K, D)
    enw = jnp.concatenate([zerow, ew], axis=0)[v_w]      # (N, K, Dw)
    n, k, d = enj.shape
    dw = enw.shape[-1]
    zpad = jnp.zeros((n, k, pack - d - dw), enj.dtype)
    return jnp.concatenate([enj, enw, zpad], axis=-1).reshape(n, k * pack)


def node_layer_pallas(ev, xa, xb, prep_a, prep_b, u, q, p, tm=8):
    """One fused pallas_call per node type; grid tiled over nodes."""
    n, d = ev.shape
    k = NEIGHBOR_K
    pack = PACK
    npad = _round_up(n, tm)
    if npad != n:        # zero-row padding; padded rows produce zeros (sliced)
        ev = jnp.pad(ev, ((0, npad - n), (0, 0)))
        xa = jnp.pad(xa, ((0, npad - n), (0, 0)))
        xb = jnp.pad(xb, ((0, npad - n), (0, 0)))

    def const_spec(arr):
        zeros = (0,) * arr.ndim
        return pl.BlockSpec(arr.shape, lambda i, _z=zeros: _z)

    wblk_a, w1v_a, bt_a, vt_a = prep_a
    wblk_b, w1v_b, bt_b, vt_b = prep_b

    out = pl.pallas_call(
        functools.partial(_node_layer_kernel, k=k, d=d, pack=pack),
        out_shape=jax.ShapeDtypeStruct((npad, 2 * d), jnp.float32),
        grid_spec=pltpu.PrefetchScalarGridSpec(
            num_scalar_prefetch=0,
            grid=(npad // tm,),
            in_specs=[
                pl.BlockSpec((tm, d), lambda i: (i, 0)),
                pl.BlockSpec((tm, k * pack), lambda i: (i, 0)),
                pl.BlockSpec((tm, k * pack), lambda i: (i, 0)),
                const_spec(wblk_a), const_spec(w1v_a),
                const_spec(bt_a), const_spec(vt_a),
                const_spec(wblk_b), const_spec(w1v_b),
                const_spec(bt_b), const_spec(vt_b),
                const_spec(u), const_spec(q), const_spec(p),
            ],
            out_specs=pl.BlockSpec((tm, 2 * d), lambda i: (i, 0)),
        ),
        compiler_params=pltpu.CompilerParams(
            dimension_semantics=("parallel",)),
    )(ev, xa, xb, wblk_a, w1v_a, bt_a, vt_a,
      wblk_b, w1v_b, bt_b, vt_b, u, q, p)
    return out[:n]


def adj_matmul_pallas(adj, e, tm=8, tk=128):
    """Tiled adj @ e.  Toy tiles here; use tm/tk of 256-512 at real sizes
    (re-derive for 64 MiB VMEM on v7x vs 128 MiB on v5e/v6e)."""
    n = adj.shape[0]
    f = e.shape[1]
    mp = _round_up(n, tm)
    kp = _round_up(n, tk)
    adj_p = jnp.pad(adj, ((0, mp - n), (0, kp - n)))
    e_p = jnp.pad(e, ((0, kp - n), (0, 0)))
    out = pl.pallas_call(
        _adj_matmul_kernel,
        out_shape=jax.ShapeDtypeStruct((mp, f), jnp.float32),
        grid_spec=pltpu.PrefetchScalarGridSpec(
            num_scalar_prefetch=0,
            grid=(mp // tm, kp // tk),
            in_specs=[pl.BlockSpec((tm, tk), lambda i, kk: (i, kk)),
                      pl.BlockSpec((tk, f), lambda i, kk: (kk, 0))],
            out_specs=pl.BlockSpec((tm, f), lambda i, kk: (i, 0)),
            scratch_shapes=[pltpu.VMEM((tm, f), jnp.float32)]),
        compiler_params=pltpu.CompilerParams(
            dimension_semantics=("parallel", "arbitrary")),
    )(adj_p, e_p)
    return out[:n]


# ----------------------------- model (glue + kernels) -------------------------
def basic_layer_forward(lp, eu, ei, et, ew, u_iw, u_tw, i_uw, i_tw, t_uw, t_iw):
    prep_user = _prep_attn1(lp['user'])
    prep_item = _prep_attn1(lp['item'])
    prep_tag = _prep_attn1(lp['tag'])
    U, q, p = lp['U'], lp['q'], lp['p']

    x_u_i = _pack_neighbors(ei, ew, *u_iw)
    x_u_t = _pack_neighbors(et, ew, *u_tw)
    x_i_u = _pack_neighbors(eu, ew, *i_uw)
    x_i_t = _pack_neighbors(et, ew, *i_tw)
    x_t_u = _pack_neighbors(eu, ew, *t_uw)
    x_t_i = _pack_neighbors(ei, ew, *t_iw)

    slab_u = node_layer_pallas(eu, x_u_i, x_u_t, prep_item, prep_tag, U, q, p)
    slab_i = node_layer_pallas(ei, x_i_u, x_i_t, prep_user, prep_tag, U, q, p)
    slab_t = node_layer_pallas(et, x_t_u, x_t_i, prep_user, prep_item, U, q, p)
    return slab_u, slab_i, slab_t


def l2_normalize(x, eps=1e-12):   # F.normalize(p=2, dim=1), reference only
    n = jnp.sqrt(jnp.sum(x * x, axis=1, keepdims=True))
    return x / jnp.maximum(n, eps)


@jax.jit
def taggcn_forward(params, neighbors, norm_adj):
    eu, ei = params['embed']['user'], params['embed']['item']
    et, ew = params['embed']['tag'], params['embed']['weight']
    u_iw, u_tw, i_uw, i_tw, t_uw, t_iw = neighbors

    # fused layer: slabs are already [orig | normalized layer output]
    slab_u, slab_i, slab_t = basic_layer_forward(
        params['layer0'], eu, ei, et, ew, u_iw, u_tw, i_uw, i_tw, t_uw, t_iw)
    all_embed = jnp.concatenate([slab_u, slab_i, slab_t], axis=0)

    # TODO(synk): utils.creat_adj / node_drop / split_mm depend on the dataset
    # object; norm_adj here is a synthetic dense row-normalized adjacency and
    # node_drop is a no-op in eval mode.
    acc = all_embed
    cur = all_embed
    for _ in range(NUM_LAYER):
        cur = adj_matmul_pallas(norm_adj, cur)
        acc = acc + cur
    all_embed = acc / float(NUM_LAYER + 1)

    out, off = [], 0
    for n in NUM_LIST:
        out.append(all_embed[off:off + n])
        off += n
    return tuple(out)


# ----------------------------- pure-JAX reference (for self-check) -----------
def _attention1_ref(p, ev, ej, ew, v_j, v_w):
    zeroj = jnp.zeros((1, ej.shape[1]), ej.dtype)
    zerow = jnp.zeros((1, ew.shape[1]), ew.dtype)
    ej = jnp.concatenate([zeroj, ej], axis=0)
    ew = jnp.concatenate([zerow, ew], axis=0)
    k = v_j.shape[1]
    eNj = ej[v_j]
    eNw = ew[v_w]
    eNv = jnp.repeat(ev[:, None, :], k, axis=1)
    eN_vw = jnp.concatenate([eNv, eNw], axis=-1)
    av_j = eN_vw @ p['W_1'] + eNj @ p['W_2'] + p['b']
    x = jnp.maximum(av_j, 0.0) @ p['v'].T
    a = jax.nn.softmax(x, axis=1)
    return jnp.sum(a * eNj, axis=1)


def _atten2_ref(lp, u, i, t):
    uit = jnp.stack([u, i, t], axis=1)
    x = uit @ lp['U'] + lp['q']
    x = jnp.maximum(x, 0.0) @ lp['p'].T
    b = jax.nn.softmax(x, axis=1)
    return (b * uit).sum(axis=1)


def taggcn_forward_ref(params, neighbors, norm_adj):
    lp = params['layer0']
    eu, ei = params['embed']['user'], params['embed']['item']
    et, ew = params['embed']['tag'], params['embed']['weight']
    embs_u, embs_i, embs_t = [eu], [ei], [et]
    u_iw, u_tw, i_uw, i_tw, t_uw, t_iw = neighbors
    eu_iN = _attention1_ref(lp['item'], eu, ei, ew, *u_iw)
    eu_tN = _attention1_ref(lp['tag'], eu, et, ew, *u_tw)
    ei_uN = _attention1_ref(lp['user'], ei, eu, ew, *i_uw)
    ei_tN = _attention1_ref(lp['tag'], ei, et, ew, *i_tw)
    et_uN = _attention1_ref(lp['user'], et, eu, ew, *t_uw)
    et_iN = _attention1_ref(lp['item'], et, ei, ew, *t_iw)
    euN = _atten2_ref(lp, eu, eu_iN, eu_tN)
    eiN = _atten2_ref(lp, ei_uN, ei, ei_tN)
    etN = _atten2_ref(lp, et_uN, et_iN, et)
    embs_u.append(l2_normalize(euN))
    embs_i.append(l2_normalize(eiN))
    embs_t.append(l2_normalize(etN))
    all_embed = jnp.concatenate(
        [jnp.concatenate(embs_u, axis=1),
         jnp.concatenate(embs_i, axis=1),
         jnp.concatenate(embs_t, axis=1)], axis=0)
    all_list = [all_embed]
    cur = all_embed
    for _ in range(NUM_LAYER):
        cur = norm_adj @ cur
        all_list.append(cur)
    all_embed = jnp.mean(jnp.stack(all_list, axis=1), axis=1)
    out, off = [], 0
    for n in NUM_LIST:
        out.append(all_embed[off:off + n])
        off += n
    return tuple(out)


# ----------------------------- deterministic init ----------------------------
def _xavier(key, shape):
    fan_out, fan_in = shape[0], shape[1]
    a = (6.0 / (fan_in + fan_out)) ** 0.5
    return jax.random.uniform(key, shape, jnp.float32, -a, a)


def init_params(key):
    keys = iter(jax.random.split(key, 32))

    def attn1_params():
        return {
            'W_1': _xavier(next(keys), (DIM_LATENT + DIM_WEIGHT, DIM_ATTEN)),
            'W_2': _xavier(next(keys), (DIM_LATENT, DIM_ATTEN)),
            'b': _xavier(next(keys), (1, DIM_ATTEN)),
            'v': _xavier(next(keys), (1, DIM_ATTEN)),
        }

    layer0 = {
        'user': attn1_params(),
        'item': attn1_params(),
        'tag': attn1_params(),
        'U': _xavier(next(keys), (DIM_LATENT, DIM_ATTEN)),
        'q': _xavier(next(keys), (1, DIM_ATTEN)),
        'p': _xavier(next(keys), (1, DIM_ATTEN)),
    }
    embed = {
        'user': _xavier(next(keys), (NUM_USER, DIM_LATENT)),
        'item': _xavier(next(keys), (NUM_ITEM, DIM_LATENT)),
        'tag': _xavier(next(keys), (NUM_TAG, DIM_LATENT)),
        'weight': _xavier(next(keys), (NUM_WEIGHT, DIM_WEIGHT)),
    }
    return {'embed': embed, 'layer0': layer0}


def sample_neighbors(key):
    # (neighbor index, weight index), both 1-based with 0 = "no neighbor"
    # (index 0 hits the zero row prepended inside the Attention1 gather).
    specs = [(NUM_USER, NUM_ITEM), (NUM_USER, NUM_TAG),
             (NUM_ITEM, NUM_USER), (NUM_ITEM, NUM_TAG),
             (NUM_TAG, NUM_USER), (NUM_TAG, NUM_ITEM)]
    keys = jax.random.split(key, 2 * len(specs))
    out = []
    for idx, (n_src, n_tgt) in enumerate(specs):
        vj = jax.random.randint(keys[2 * idx], (n_src, NEIGHBOR_K), 0, n_tgt + 1)
        vw = jax.random.randint(keys[2 * idx + 1], (n_src, NEIGHBOR_K), 0,
                                NUM_WEIGHT + 1)
        out.append((vj, vw))
    return out


def make_norm_adj(key):
    n = sum(NUM_LIST)
    a = jax.random.bernoulli(key, 0.3, (n, n)).astype(jnp.float32)
    a = jnp.maximum(a, a.T) + jnp.eye(n, dtype=jnp.float32)
    deg = jnp.sum(a, axis=1, keepdims=True)
    return a / jnp.maximum(deg, 1.0)


# ----------------------------- main -------------------------------------------
if __name__ == "__main__":
    key = jax.random.PRNGKey(0)
    k_params, k_nbr, k_adj = jax.random.split(key, 3)

    params = init_params(k_params)
    neighbors = sample_neighbors(k_nbr)
    norm_adj = make_norm_adj(k_adj)

    out = jax.block_until_ready(taggcn_forward(params, neighbors, norm_adj))
    ref = jax.block_until_ready(taggcn_forward_ref(params, neighbors, norm_adj))

    # tolerance covers the approx-reciprocal (EUP) softmax / normalize path
    for o, r, n in zip(out, ref, NUM_LIST):
        assert o.shape == (n, 2 * DIM_LATENT), o.shape
        assert bool(jnp.all(jnp.isfinite(o)))
        assert bool(jnp.allclose(o, r, atol=2e-3, rtol=2e-3)), \
            float(jnp.max(jnp.abs(o - r)))

    print("KERNEL_OK")
</pallas_src>

<mosaic_0001>
module attributes {stable_mosaic.version = 11 : i64} {
  func.func @_node_layer_kernel(%arg0: i32, %arg1: memref<8x32xf32, #tpu.memory_space<vmem>>, %arg2: memref<8x256xf32, #tpu.memory_space<vmem>>, %arg3: memref<8x256xf32, #tpu.memory_space<vmem>>, %arg4: memref<256x64xf32, #tpu.memory_space<vmem>>, %arg5: memref<32x16xf32, #tpu.memory_space<vmem>>, %arg6: memref<1x64xf32, #tpu.memory_space<vmem>>, %arg7: memref<1x64xf32, #tpu.memory_space<vmem>>, %arg8: memref<256x64xf32, #tpu.memory_space<vmem>>, %arg9: memref<32x16xf32, #tpu.memory_space<vmem>>, %arg10: memref<1x64xf32, #tpu.memory_space<vmem>>, %arg11: memref<1x64xf32, #tpu.memory_space<vmem>>, %arg12: memref<32x16xf32, #tpu.memory_space<vmem>>, %arg13: memref<1x16xf32, #tpu.memory_space<vmem>>, %arg14: memref<1x16xf32, #tpu.memory_space<vmem>>, %arg15: memref<8x64xf32, #tpu.memory_space<vmem>>) attributes {dimension_semantics = [#tpu.dimension_semantics<parallel>], iteration_bounds = array<i64: 2>, scalar_prefetch = 0 : i64, scratch_operands = 0 : i64, tpu.core_type = #tpu.core_type<tc>, window_params = [{transform_indices = @transform_0, window_bounds = array<i64: 8, 32>}, {transform_indices = @transform_1, window_bounds = array<i64: 8, 256>}, {transform_indices = @transform_2, window_bounds = array<i64: 8, 256>}, {pipeline_mode = #tpu.pipeline_mode<synchronous>, transform_indices = @transform_3, window_bounds = array<i64: 256, 64>}, {pipeline_mode = #tpu.pipeline_mode<synchronous>, transform_indices = @transform_4, window_bounds = array<i64: 32, 16>}, {pipeline_mode = #tpu.pipeline_mode<synchronous>, transform_indices = @transform_5, window_bounds = array<i64: 1, 64>}, {pipeline_mode = #tpu.pipeline_mode<synchronous>, transform_indices = @transform_6, window_bounds = array<i64: 1, 64>}, {pipeline_mode = #tpu.pipeline_mode<synchronous>, transform_indices = @transform_7, window_bounds = array<i64: 256, 64>}, {pipeline_mode = #tpu.pipeline_mode<synchronous>, transform_indices = @transform_8, window_bounds = array<i64: 32, 16>}, {pipeline_mode = #tpu.pipeline_mode<synchronous>, transform_indices = @transform_9, window_bounds = array<i64: 1, 64>}, {pipeline_mode = #tpu.pipeline_mode<synchronous>, transform_indices = @transform_10, window_bounds = array<i64: 1, 64>}, {pipeline_mode = #tpu.pipeline_mode<synchronous>, transform_indices = @transform_11, window_bounds = array<i64: 32, 16>}, {pipeline_mode = #tpu.pipeline_mode<synchronous>, transform_indices = @transform_12, window_bounds = array<i64: 1, 16>}, {pipeline_mode = #tpu.pipeline_mode<synchronous>, transform_indices = @transform_13, window_bounds = array<i64: 1, 16>}, {transform_indices = @transform_14, window_bounds = array<i64: 8, 64>}]} {
    %c0 = arith.constant 0 : index
    %c0_0 = arith.constant 0 : index
    %0 = vector.load %arg1[%c0, %c0_0] : memref<8x32xf32, #tpu.memory_space<vmem>>, vector<8x32xf32>
    %c0_1 = arith.constant 0 : index
    %c0_2 = arith.constant 0 : index
    %1 = vector.load %arg2[%c0_1, %c0_2] : memref<8x256xf32, #tpu.memory_space<vmem>>, vector<8x256xf32>
    %c0_3 = arith.constant 0 : index
    %c0_4 = arith.constant 0 : index
    %2 = vector.load %arg4[%c0_3, %c0_4] : memref<256x64xf32, #tpu.memory_space<vmem>>, vector<256x64xf32>
    %cst = arith.constant dense<0.000000e+00> : vector<8x64xf32>
    %3 = tpu.matmul %1, %2, %cst {dimension_numbers = #tpu.dot_dimension_numbers<[1], [0], [0], [1], [0, 0, 1, 1], [], []>} : vector<8x256xf32>, vector<256x64xf32>, vector<8x64xf32> -> vector<8x64xf32>
    %c0_5 = arith.constant 0 : index
    %c0_6 = arith.constant 0 : index
    %4 = vector.load %arg5[%c0_5, %c0_6] : memref<32x16xf32, #tpu.memory_space<vmem>>, vector<32x16xf32>
    %cst_7 = arith.constant dense<0.000000e+00> : vector<8x16xf32>
    %5 = tpu.matmul %0, %4, %cst_7 {dimension_numbers = #tpu.dot_dimension_numbers<[1], [0], [0], [1], [0, 0, 1, 1], [], []>} : vector<8x32xf32>, vector<32x16xf32>, vector<8x16xf32> -> vector<8x16xf32>
    %6 = tpu.concatenate %5, %5, %5, %5 in 1 : vector<8x16xf32>, vector<8x16xf32>, vector<8x16xf32>, vector<8x16xf32> -> vector<8x64xf32>
    %7 = arith.addf %3, %6 : vector<8x64xf32>
    %c0_8 = arith.constant 0 : index
    %c0_9 = arith.constant 0 : index
    %8 = vector.load %arg6[%c0_8, %c0_9] : memref<1x64xf32, #tpu.memory_space<vmem>>, vector<1x64xf32>
    %9 = vector.broadcast %8 : vector<1x64xf32> to vector<8x64xf32>
    %10 = arith.addf %7, %9 : vector<8x64xf32>
    %cst_10 = arith.constant 0.000000e+00 : f32
    %11 = vector.broadcast %cst_10 : f32 to vector<8x64xf32>
    %12 = arith.maximumf %10, %11 : vector<8x64xf32>
    %c0_11 = arith.constant 0 : index
    %c0_12 = arith.constant 0 : index
    %13 = vector.load %arg7[%c0_11, %c0_12] : memref<1x64xf32, #tpu.memory_space<vmem>>, vector<1x64xf32>
    %14 = vector.broadcast %13 : vector<1x64xf32> to vector<8x64xf32>
    %15 = arith.mulf %12, %14 : vector<8x64xf32>
    %16 = vector.extract_strided_slice %15 {offsets = [0, 0], sizes = [8, 16], strides = [1, 1]} : vector<8x64xf32> to vector<8x16xf32>
    %cst_13 = arith.constant dense<0.000000e+00> : vector<8xf32>
    %17 = vector.multi_reduction <add>, %16, %cst_13 [1] : vector<8x16xf32> to vector<8xf32>
    %18 = vector.shape_cast %17 : vector<8xf32> to vector<8x1xf32>
    %19 = vector.extract_strided_slice %15 {offsets = [0, 16], sizes = [8, 16], strides = [1, 1]} : vector<8x64xf32> to vector<8x16xf32>
    %cst_14 = arith.constant dense<0.000000e+00> : vector<8xf32>
    %20 = vector.multi_reduction <add>, %19, %cst_14 [1] : vector<8x16xf32> to vector<8xf32>
    %21 = vector.shape_cast %20 : vector<8xf32> to vector<8x1xf32>
    %22 = vector.extract_strided_slice %15 {offsets = [0, 32], sizes = [8, 16], strides = [1, 1]} : vector<8x64xf32> to vector<8x16xf32>
    %cst_15 = arith.constant dense<0.000000e+00> : vector<8xf32>
    %23 = vector.multi_reduction <add>, %22, %cst_15 [1] : vector<8x16xf32> to vector<8xf32>
    %24 = vector.shape_cast %23 : vector<8xf32> to vector<8x1xf32>
    %25 = vector.extract_strided_slice %15 {offsets = [0, 48], sizes = [8, 16], strides = [1, 1]} : vector<8x64xf32> to vector<8x16xf32>
    %cst_16 = arith.constant dense<0.000000e+00> : vector<8xf32>
    %26 = vector.multi_reduction <add>, %25, %cst_16 [1] : vector<8x16xf32> to vector<8xf32>
    %27 = vector.shape_cast %26 : vector<8xf32> to vector<8x1xf32>
    %28 = arith.maximumf %18, %21 : vector<8x1xf32>
    %29 = arith.maximumf %28, %24 : vector<8x1xf32>
    %30 = arith.maximumf %29, %27 : vector<8x1xf32>
    %31 = arith.subf %18, %30 : vector<8x1xf32>
    %32 = math.exp %31 : vector<8x1xf32>
    %33 = arith.subf %21, %30 : vector<8x1xf32>
    %34 = math.exp %33 : vector<8x1xf32>
    %35 = arith.subf %24, %30 : vector<8x1xf32>
    %36 = math.exp %35 : vector<8x1xf32>
    %37 = arith.subf %27, %30 : vector<8x1xf32>
    %38 = math.exp %37 : vector<8x1xf32>
    %39 = arith.addf %32, %34 : vector<8x1xf32>
    %40 = arith.addf %39, %36 : vector<8x1xf32>
    %41 = arith.addf %40, %38 : vector<8x1xf32>
    %42 = tpu.reciprocal %41 {approx = true} : vector<8x1xf32> -> vector<8x1xf32>
    %43 = vector.extract_strided_slice %1 {offsets = [0, 0], sizes = [8, 32], strides = [1, 1]} : vector<8x256xf32> to vector<8x32xf32>
    %44 = vector.broadcast %32 : vector<8x1xf32> to vector<8x32xf32>
    %45 = arith.mulf %44, %43 : vector<8x32xf32>
    %46 = vector.extract_strided_slice %1 {offsets = [0, 64], sizes = [8, 32], strides = [1, 1]} : vector<8x256xf32> to vector<8x32xf32>
    %47 = vector.broadcast %34 : vector<8x1xf32> to vector<8x32xf32>
    %48 = arith.mulf %47, %46 : vector<8x32xf32>
    %49 = arith.addf %45, %48 : vector<8x32xf32>
    %50 = vector.extract_strided_slice %1 {offsets = [0, 128], sizes = [8, 32], strides = [1, 1]} : vector<8x256xf32> to vector<8x32xf32>
    %51 = vector.broadcast %36 : vector<8x1xf32> to vector<8x32xf32>
    %52 = arith.mulf %51, %50 : vector<8x32xf32>
    %53 = arith.addf %49, %52 : vector<8x32xf32>
    %54 = vector.extract_strided_slice %1 {offsets = [0, 192], sizes = [8, 32], strides = [1, 1]} : vector<8x256xf32> to vector<8x32xf32>
    %55 = vector.broadcast %38 : vector<8x1xf32> to vector<8x32xf32>
    %56 = arith.mulf %55, %54 : vector<8x32xf32>
    %57 = arith.addf %53, %56 : vector<8x32xf32>
    %58 = vector.broadcast %42 : vector<8x1xf32> to vector<8x32xf32>
    %59 = arith.mulf %57, %58 : vector<8x32xf32>
    %c0_17 = arith.constant 0 : index
    %c0_18 = arith.constant 0 : index
    %60 = vector.load %arg3[%c0_17, %c0_18] : memref<8x256xf32, #tpu.memory_space<vmem>>, vector<8x256xf32>
    %c0_19 = arith.constant 0 : index
    %c0_20 = arith.constant 0 : index
    %61 = vector.load %arg8[%c0_19, %c0_20] : memref<256x64xf32, #tpu.memory_space<vmem>>, vector<256x64xf32>
    %cst_21 = arith.constant dense<0.000000e+00> : vector<8x64xf32>
    %62 = tpu.matmul %60, %61, %cst_21 {dimension_numbers = #tpu.dot_dimension_numbers<[1], [0], [0], [1], [0, 0, 1, 1], [], []>} : vector<8x256xf32>, vector<256x64xf32>, vector<8x64xf32> -> vector<8x64xf32>
    %c0_22 = arith.constant 0 : index
    %c0_23 = arith.constant 0 : index
    %63 = vector.load %arg9[%c0_22, %c0_23] : memref<32x16xf32, #tpu.memory_space<vmem>>, vector<32x16xf32>
    %cst_24 = arith.constant dense<0.000000e+00> : vector<8x16xf32>
    %64 = tpu.matmul %0, %63, %cst_24 {dimension_numbers = #tpu.dot_dimension_numbers<[1], [0], [0], [1], [0, 0, 1, 1], [], []>} : vector<8x32xf32>, vector<32x16xf32>, vector<8x16xf32> -> vector<8x16xf32>
    %65 = tpu.concatenate %64, %64, %64, %64 in 1 : vector<8x16xf32>, vector<8x16xf32>, vector<8x16xf32>, vector<8x16xf32> -> vector<8x64xf32>
    %66 = arith.addf %62, %65 : vector<8x64xf32>
    %c0_25 = arith.constant 0 : index
    %c0_26 = arith.constant 0 : index
    %67 = vector.load %arg10[%c0_25, %c0_26] : memref<1x64xf32, #tpu.memory_space<vmem>>, vector<1x64xf32>
    %68 = vector.broadcast %67 : vector<1x64xf32> to vector<8x64xf32>
    %69 = arith.addf %66, %68 : vector<8x64xf32>
    %cst_27 = arith.constant 0.000000e+00 : f32
    %70 = vector.broadcast %cst_27 : f32 to vector<8x64xf32>
    %71 = arith.maximumf %69, %70 : vector<8x64xf32>
    %c0_28 = arith.constant 0 : index
    %c0_29 = arith.constant 0 : index
    %72 = vector.load %arg11[%c0_28, %c0_29] : memref<1x64xf32, #tpu.memory_space<vmem>>, vector<1x64xf32>
    %73 = vector.broadcast %72 : vector<1x64xf32> to vector<8x64xf32>
    %74 = arith.mulf %71, %73 : vector<8x64xf32>
    %75 = vector.extract_strided_slice %74 {offsets = [0, 0], sizes = [8, 16], strides = [1, 1]} : vector<8x64xf32> to vector<8x16xf32>
    %cst_30 = arith.constant dense<0.000000e+00> : vector<8xf32>
    %76 = vector.multi_reduction <add>, %75, %cst_30 [1] : vector<8x16xf32> to vector<8xf32>
    %77 = vector.shape_cast %76 : vector<8xf32> to vector<8x1xf32>
    %78 = vector.extract_strided_slice %74 {offsets = [0, 16], sizes = [8, 16], strides = [1, 1]} : vector<8x64xf32> to vector<8x16xf32>
    %cst_31 = arith.constant dense<0.000000e+00> : vector<8xf32>
    %79 = vector.multi_reduction <add>, %78, %cst_31 [1] : vector<8x16xf32> to vector<8xf32>
    %80 = vector.shape_cast %79 : vector<8xf32> to vector<8x1xf32>
    %81 = vector.extract_strided_slice %74 {offsets = [0, 32], sizes = [8, 16], strides = [1, 1]} : vector<8x64xf32> to vector<8x16xf32>
    %cst_32 = arith.constant dense<0.000000e+00> : vector<8xf32>
    %82 = vector.multi_reduction <add>, %81, %cst_32 [1] : vector<8x16xf32> to vector<8xf32>
    %83 = vector.shape_cast %82 : vector<8xf32> to vector<8x1xf32>
    %84 = vector.extract_strided_slice %74 {offsets = [0, 48], sizes = [8, 16], strides = [1, 1]} : vector<8x64xf32> to vector<8x16xf32>
    %cst_33 = arith.constant dense<0.000000e+00> : vector<8xf32>
    %85 = vector.multi_reduction <add>, %84, %cst_33 [1] : vector<8x16xf32> to vector<8xf32>
    %86 = vector.shape_cast %85 : vector<8xf32> to vector<8x1xf32>
    %87 = arith.maximumf %77, %80 : vector<8x1xf32>
    %88 = arith.maximumf %87, %83 : vector<8x1xf32>
    %89 = arith.maximumf %88, %86 : vector<8x1xf32>
    %90 = arith.subf %77, %89 : vector<8x1xf32>
    %91 = math.exp %90 : vector<8x1xf32>
    %92 = arith.subf %80, %89 : vector<8x1xf32>
    %93 = math.exp %92 : vector<8x1xf32>
    %94 = arith.subf %83, %89 : vector<8x1xf32>
    %95 = math.exp %94 : vector<8x1xf32>
    %96 = arith.subf %86, %89 : vector<8x1xf32>
    %97 = math.exp %96 : vector<8x1xf32>
    %98 = arith.addf %91, %93 : vector<8x1xf32>
    %99 = arith.addf %98, %95 : vector<8x1xf32>
    %100 = arith.addf %99, %97 : vector<8x1xf32>
    %101 = tpu.reciprocal %100 {approx = true} : vector<8x1xf32> -> vector<8x1xf32>
    %102 = vector.extract_strided_slice %60 {offsets = [0, 0], sizes = [8, 32], strides = [1, 1]} : vector<8x256xf32> to vector<8x32xf32>
    %103 = vector.broadcast %91 : vector<8x1xf32> to vector<8x32xf32>
    %104 = arith.mulf %103, %102 : vector<8x32xf32>
    %105 = vector.extract_strided_slice %60 {offsets = [0, 64], sizes = [8, 32], strides = [1, 1]} : vector<8x256xf32> to vector<8x32xf32>
    %106 = vector.broadcast %93 : vector<8x1xf32> to vector<8x32xf32>
    %107 = arith.mulf %106, %105 : vector<8x32xf32>
    %108 = arith.addf %104, %107 : vector<8x32xf32>
    %109 = vector.extract_strided_slice %60 {offsets = [0, 128], sizes = [8, 32], strides = [1, 1]} : vector<8x256xf32> to vector<8x32xf32>
    %110 = vector.broadcast %95 : vector<8x1xf32> to vector<8x32xf32>
    %111 = arith.mulf %110, %109 : vector<8x32xf32>
    %112 = arith.addf %108, %111 : vector<8x32xf32>
    %113 = vector.extract_strided_slice %60 {offsets = [0, 192], sizes = [8, 32], strides = [1, 1]} : vector<8x256xf32> to vector<8x32xf32>
    %114 = vector.broadcast %97 : vector<8x1xf32> to vector<8x32xf32>
    %115 = arith.mulf %114, %113 : vector<8x32xf32>
    %116 = arith.addf %112, %115 : vector<8x32xf32>
    %117 = vector.broadcast %101 : vector<8x1xf32> to vector<8x32xf32>
    %118 = arith.mulf %116, %117 : vector<8x32xf32>
    %119 = tpu.concatenate %0, %59, %118 in 0 : vector<8x32xf32>, vector<8x32xf32>, vector<8x32xf32> -> vector<24x32xf32>
    %c0_34 = arith.constant 0 : index
    %c0_35 = arith.constant 0 : index
    %120 = vector.load %arg12[%c0_34, %c0_35] : memref<32x16xf32, #tpu.memory_space<vmem>>, vector<32x16xf32>
    %cst_36 = arith.constant dense<0.000000e+00> : vector<24x16xf32>
    %121 = tpu.matmul %119, %120, %cst_36 {dimension_numbers = #tpu.dot_dimension_numbers<[1], [0], [0], [1], [0, 0, 1, 1], [], []>} : vector<24x32xf32>, vector<32x16xf32>, vector<24x16xf32> -> vector<24x16xf32>
    %c0_37 = arith.constant 0 : index
    %c0_38 = arith.constant 0 : index
    %122 = vector.load %arg13[%c0_37, %c0_38] : memref<1x16xf32, #tpu.memory_space<vmem>>, vector<1x16xf32>
    %123 = vector.broadcast %122 : vector<1x16xf32> to vector<24x16xf32>
    %124 = arith.addf %121, %123 : vector<24x16xf32>
    %cst_39 = arith.constant 0.000000e+00 : f32
    %125 = vector.broadcast %cst_39 : f32 to vector<24x16xf32>
    %126 = arith.maximumf %124, %125 : vector<24x16xf32>
    %c0_40 = arith.constant 0 : index
    %c0_41 = arith.constant 0 : index
    %127 = vector.load %arg14[%c0_40, %c0_41] : memref<1x16xf32, #tpu.memory_space<vmem>>, vector<1x16xf32>
    %128 = vector.broadcast %127 : vector<1x16xf32> to vector<24x16xf32>
    %129 = arith.mulf %126, %128 : vector<24x16xf32>
    %cst_42 = arith.constant dense<0.000000e+00> : vector<24xf32>
    %130 = vector.multi_reduction <add>, %129, %cst_42 [1] : vector<24x16xf32> to vector<24xf32>
    %131 = vector.shape_cast %130 : vector<24xf32> to vector<24x1xf32>
    %132 = vector.extract_strided_slice %131 {offsets = [0, 0], sizes = [8, 1], strides = [1, 1]} : vector<24x1xf32> to vector<8x1xf32>
    %133 = vector.extract_strided_slice %131 {offsets = [8, 0], sizes = [8, 1], strides = [1, 1]} : vector<24x1xf32> to vector<8x1xf32>
    %134 = vector.extract_strided_slice %131 {offsets = [16, 0], sizes = [8, 1], strides = [1, 1]} : vector<24x1xf32> to vector<8x1xf32>
    %135 = arith.maximumf %132, %133 : vector<8x1xf32>
    %136 = arith.maximumf %135, %134 : vector<8x1xf32>
    %137 = arith.subf %132, %136 : vector<8x1xf32>
    %138 = math.exp %137 : vector<8x1xf32>
    %139 = arith.subf %133, %136 : vector<8x1xf32>
    %140 = math.exp %139 : vector<8x1xf32>
    %141 = arith.subf %134, %136 : vector<8x1xf32>
    %142 = math.exp %141 : vector<8x1xf32>
    %143 = arith.addf %138, %140 : vector<8x1xf32>
    %144 = arith.addf %143, %142 : vector<8x1xf32>
    %145 = tpu.reciprocal %144 {approx = true} : vector<8x1xf32> -> vector<8x1xf32>
    %146 = vector.broadcast %138 : vector<8x1xf32> to vector<8x32xf32>
    %147 = arith.mulf %146, %0 : vector<8x32xf32>
    %148 = vector.broadcast %140 : vector<8x1xf32> to vector<8x32xf32>
    %149 = arith.mulf %148, %59 : vector<8x32xf32>
    %150 = arith.addf %147, %149 : vector<8x32xf32>
    %151 = vector.broadcast %142 : vector<8x1xf32> to vector<8x32xf32>
    %152 = arith.mulf %151, %118 : vector<8x32xf32>
    %153 = arith.addf %150, %152 : vector<8x32xf32>
    %154 = vector.broadcast %145 : vector<8x1xf32> to vector<8x32xf32>
    %155 = arith.mulf %153, %154 : vector<8x32xf32>
    %156 = arith.mulf %155, %155 : vector<8x32xf32>
    %cst_43 = arith.constant dense<0.000000e+00> : vector<8xf32>
    %157 = vector.multi_reduction <add>, %156, %cst_43 [1] : vector<8x32xf32> to vector<8xf32>
    %158 = vector.shape_cast %157 : vector<8xf32> to vector<8x1xf32>
    %159 = math.sqrt %158 : vector<8x1xf32>
    %cst_44 = arith.constant 9.99999996E-13 : f32
    %160 = vector.broadcast %cst_44 : f32 to vector<8x1xf32>
    %161 = arith.maximumf %159, %160 : vector<8x1xf32>
    %162 = tpu.reciprocal %161 {approx = true} : vector<8x1xf32> -> vector<8x1xf32>
    %163 = vector.broadcast %162 : vector<8x1xf32> to vector<8x32xf32>
    %164 = arith.mulf %155, %163 : vector<8x32xf32>
    %165 = tpu.concatenate %0, %164 in 1 : vector<8x32xf32>, vector<8x32xf32> -> vector<8x64xf32>
    %c0_45 = arith.constant 0 : index
    %c0_46 = arith.constant 0 : index
    %166 = vector.load %arg15[%c0_45, %c0_46] : memref<8x64xf32, #tpu.memory_space<vmem>>, vector<8x64xf32>
    tpu.vector_store %arg15[%c0_45, %c0_46], %165 {strides = array<i32>} : memref<8x64xf32, #tpu.memory_space<vmem>>, vector<8x64xf32>,
    return
  }
  func.func @transform_0(%arg0: i32) -> (i32, i32) {
    %c0_i32 = arith.constant 0 : i32
    %c0_i32_0 = arith.constant 0 : i32
    return %arg0, %c0_i32 : i32, i32
  }
  func.func @transform_1(%arg0: i32) -> (i32, i32) {
    %c0_i32 = arith.constant 0 : i32
    %c0_i32_0 = arith.constant 0 : i32
    return %arg0, %c0_i32 : i32, i32
  }
  func.func @transform_2(%arg0: i32) -> (i32, i32) {
    %c0_i32 = arith.constant 0 : i32
    %c0_i32_0 = arith.constant 0 : i32
    return %arg0, %c0_i32 : i32, i32
  }
  func.func @transform_3(%arg0: i32) -> (i32, i32) {
    %c0_i32 = arith.constant 0 : i32
    %c0_i32_0 = arith.constant 0 : i32
    %c0_i32_1 = arith.constant 0 : i32
    return %c0_i32, %c0_i32_0 : i32, i32
  }
  func.func @transform_4(%arg0: i32) -> (i32, i32) {
    %c0_i32 = arith.constant 0 : i32
    %c0_i32_0 = arith.constant 0 : i32
    %c0_i32_1 = arith.constant 0 : i32
    return %c0_i32, %c0_i32_0 : i32, i32
  }
  func.func @transform_5(%arg0: i32) -> (i32, i32) {
    %c0_i32 = arith.constant 0 : i32
    %c0_i32_0 = arith.constant 0 : i32
    %c0_i32_1 = arith.constant 0 : i32
    return %c0_i32, %c0_i32_0 : i32, i32
  }
  func.func @transform_6(%arg0: i32) -> (i32, i32) {
    %c0_i32 = arith.constant 0 : i32
    %c0_i32_0 = arith.constant 0 : i32
    %c0_i32_1 = arith.constant 0 : i32
    return %c0_i32, %c0_i32_0 : i32, i32
  }
  func.func @transform_7(%arg0: i32) -> (i32, i32) {
    %c0_i32 = arith.constant 0 : i32
    %c0_i32_0 = arith.constant 0 : i32
    %c0_i32_1 = arith.constant 0 : i32
    return %c0_i32, %c0_i32_0 : i32, i32
  }
  func.func @transform_8(%arg0: i32) -> (i32, i32) {
    %c0_i32 = arith.constant 0 : i32
    %c0_i32_0 = arith.constant 0 : i32
    %c0_i32_1 = arith.constant 0 : i32
    return %c0_i32, %c0_i32_0 : i32, i32
  }
  func.func @transform_9(%arg0: i32) -> (i32, i32) {
    %c0_i32 = arith.constant 0 : i32
    %c0_i32_0 = arith.constant 0 : i32
    %c0_i32_1 = arith.constant 0 : i32
    return %c0_i32, %c0_i32_0 : i32, i32
  }
  func.func @transform_10(%arg0: i32) -> (i32, i32) {
    %c0_i32 = arith.constant 0 : i32
    %c0_i32_0 = arith.constant 0 : i32
    %c0_i32_1 = arith.constant 0 : i32
    return %c0_i32, %c0_i32_0 : i32, i32
  }
  func.func @transform_11(%arg0: i32) -> (i32, i32) {
    %c0_i32 = arith.constant 0 : i32
    %c0_i32_0 = arith.constant 0 : i32
    %c0_i32_1 = arith.constant 0 : i32
    return %c0_i32, %c0_i32_0 : i32, i32
  }
  func.func @transform_12(%arg0: i32) -> (i32, i32) {
    %c0_i32 = arith.constant 0 : i32
    %c0_i32_0 = arith.constant 0 : i32
    %c0_i32_1 = arith.constant 0 : i32
    return %c0_i32, %c0_i32_0 : i32, i32
  }
  func.func @transform_13(%arg0: i32) -> (i32, i32) {
    %c0_i32 = arith.constant 0 : i32
    %c0_i32_0 = arith.constant 0 : i32
    %c0_i32_1 = arith.constant 0 : i32
    return %c0_i32, %c0_i32_0 : i32, i32
  }
  func.func @transform_14(%arg0: i32) -> (i32, i32) {
    %c0_i32 = arith.constant 0 : i32
    %c0_i32_0 = arith.constant 0 : i32
    return %arg0, %c0_i32 : i32, i32
  }
}

module attributes {stable_mosaic.version = 11 : i64} {
  func.func @_node_layer_kernel(%arg0: i32, %arg1: memref<8x32xf32, #tpu.memory_space<vmem>>, %arg2: memref<8x256xf32, #tpu.memory_space<vmem>>, %arg3: memref<8x256xf32, #tpu.memory_space<vmem>>, %arg4: memref<256x64xf32, #tpu.memory_space<vmem>>, %arg5: memref<32x16xf32, #tpu.memory_space<vmem>>, %arg6: memref<1x64xf32, #tpu.memory_space<vmem>>, %arg7: memref<1x64xf32, #tpu.memory_space<vmem>>, %arg8: memref<256x64xf32, #tpu.memory_space<vmem>>, %arg9: memref<32x16xf32, #tpu.memory_space<vmem>>, %arg10: memref<1x64xf32, #tpu.memory_space<vmem>>, %arg11: memref<1x64xf32, #tpu.memory_space<vmem>>, %arg12: memref<32x16xf32, #tpu.memory_space<vmem>>, %arg13: memref<1x16xf32, #tpu.memory_space<vmem>>, %arg14: memref<1x16xf32, #tpu.memory_space<vmem>>, %arg15: memref<8x64xf32, #tpu.memory_space<vmem>>) attributes {dimension_semantics = [#tpu.dimension_semantics<parallel>], iteration_bounds = array<i64: 1>, scalar_prefetch = 0 : i64, scratch_operands = 0 : i64, tpu.core_type = #tpu.core_type<tc>, window_params = [{transform_indices = @transform_0, window_bounds = array<i64: 8, 32>}, {transform_indices = @transform_1, window_bounds = array<i64: 8, 256>}, {transform_indices = @transform_2, window_bounds = array<i64: 8, 256>}, {pipeline_mode = #tpu.pipeline_mode<synchronous>, transform_indices = @transform_3, window_bounds = array<i64: 256, 64>}, {pipeline_mode = #tpu.pipeline_mode<synchronous>, transform_indices = @transform_4, window_bounds = array<i64: 32, 16>}, {pipeline_mode = #tpu.pipeline_mode<synchronous>, transform_indices = @transform_5, window_bounds = array<i64: 1, 64>}, {pipeline_mode = #tpu.pipeline_mode<synchronous>, transform_indices = @transform_6, window_bounds = array<i64: 1, 64>}, {pipeline_mode = #tpu.pipeline_mode<synchronous>, transform_indices = @transform_7, window_bounds = array<i64: 256, 64>}, {pipeline_mode = #tpu.pipeline_mode<synchronous>, transform_indices = @transform_8, window_bounds = array<i64: 32, 16>}, {pipeline_mode = #tpu.pipeline_mode<synchronous>, transform_indices = @transform_9, window_bounds = array<i64: 1, 64>}, {pipeline_mode = #tpu.pipeline_mode<synchronous>, transform_indices = @transform_10, window_bounds = array<i64: 1, 64>}, {pipeline_mode = #tpu.pipeline_mode<synchronous>, transform_indices = @transform_11, window_bounds = array<i64: 32, 16>}, {pipeline_mode = #tpu.pipeline_mode<synchronous>, transform_indices = @transform_12, window_bounds = array<i64: 1, 16>}, {pipeline_mode = #tpu.pipeline_mode<synchronous>, transform_indices = @transform_13, window_bounds = array<i64: 1, 16>}, {transform_indices = @transform_14, window_bounds = array<i64: 8, 64>}]} {
    %c0 = arith.constant 0 : index
    %c0_0 = arith.constant 0 : index
    %0 = vector.load %arg1[%c0, %c0_0] : memref<8x32xf32, #tpu.memory_space<vmem>>, vector<8x32xf32>
    %c0_1 = arith.constant 0 : index
    %c0_2 = arith.constant 0 : index
    %1 = vector.load %arg2[%c0_1, %c0_2] : memref<8x256xf32, #tpu.memory_space<vmem>>, vector<8x256xf32>
    %c0_3 = arith.constant 0 : index
    %c0_4 = arith.constant 0 : index
    %2 = vector.load %arg4[%c0_3, %c0_4] : memref<256x64xf32, #tpu.memory_space<vmem>>, vector<256x64xf32>
    %cst = arith.constant dense<0.000000e+00> : vector<8x64xf32>
    %3 = tpu.matmul %1, %2, %cst {dimension_numbers = #tpu.dot_dimension_numbers<[1], [0], [0], [1], [0, 0, 1, 1], [], []>} : vector<8x256xf32>, vector<256x64xf32>, vector<8x64xf32> -> vector<8x64xf32>
    %c0_5 = arith.constant 0 : index
    %c0_6 = arith.constant 0 : index
    %4 = vector.load %arg5[%c0_5, %c0_6] : memref<32x16xf32, #tpu.memory_space<vmem>>, vector<32x16xf32>
    %cst_7 = arith.constant dense<0.000000e+00> : vector<8x16xf32>
    %5 = tpu.matmul %0, %4, %cst_7 {dimension_numbers = #tpu.dot_dimension_numbers<[1], [0], [0], [1], [0, 0, 1, 1], [], []>} : vector<8x32xf32>, vector<32x16xf32>, vector<8x16xf32> -> vector<8x16xf32>
    %6 = tpu.concatenate %5, %5, %5, %5 in 1 : vector<8x16xf32>, vector<8x16xf32>, vector<8x16xf32>, vector<8x16xf32> -> vector<8x64xf32>
    %7 = arith.addf %3, %6 : vector<8x64xf32>
    %c0_8 = arith.constant 0 : index
    %c0_9 = arith.constant 0 : index
    %8 = vector.load %arg6[%c0_8, %c0_9] : memref<1x64xf32, #tpu.memory_space<vmem>>, vector<1x64xf32>
    %9 = vector.broadcast %8 : vector<1x64xf32> to vector<8x64xf32>
    %10 = arith.addf %7, %9 : vector<8x64xf32>
    %cst_10 = arith.constant 0.000000e+00 : f32
    %11 = vector.broadcast %cst_10 : f32 to vector<8x64xf32>
    %12 = arith.maximumf %10, %11 : vector<8x64xf32>
    %c0_11 = arith.constant 0 : index
    %c0_12 = arith.constant 0 : index
    %13 = vector.load %arg7[%c0_11, %c0_12] : memref<1x64xf32, #tpu.memory_space<vmem>>, vector<1x64xf32>
    %14 = vector.broadcast %13 : vector<1x64xf32> to vector<8x64xf32>
    %15 = arith.mulf %12, %14 : vector<8x64xf32>
    %16 = vector.extract_strided_slice %15 {offsets = [0, 0], sizes = [8, 16], strides = [1, 1]} : vector<8x64xf32> to vector<8x16xf32>
    %cst_13 = arith.constant dense<0.000000e+00> : vector<8xf32>
    %17 = vector.multi_reduction <add>, %16, %cst_13 [1] : vector<8x16xf32> to vector<8xf32>
    %18 = vector.shape_cast %17 : vector<8xf32> to vector<8x1xf32>
    %19 = vector.extract_strided_slice %15 {offsets = [0, 16], sizes = [8, 16], strides = [1, 1]} : vector<8x64xf32> to vector<8x16xf32>
    %cst_14 = arith.constant dense<0.000000e+00> : vector<8xf32>
    %20 = vector.multi_reduction <add>, %19, %cst_14 [1] : vector<8x16xf32> to vector<8xf32>
    %21 = vector.shape_cast %20 : vector<8xf32> to vector<8x1xf32>
    %22 = vector.extract_strided_slice %15 {offsets = [0, 32], sizes = [8, 16], strides = [1, 1]} : vector<8x64xf32> to vector<8x16xf32>
    %cst_15 = arith.constant dense<0.000000e+00> : vector<8xf32>
    %23 = vector.multi_reduction <add>, %22, %cst_15 [1] : vector<8x16xf32> to vector<8xf32>
    %24 = vector.shape_cast %23 : vector<8xf32> to vector<8x1xf32>
    %25 = vector.extract_strided_slice %15 {offsets = [0, 48], sizes = [8, 16], strides = [1, 1]} : vector<8x64xf32> to vector<8x16xf32>
    %cst_16 = arith.constant dense<0.000000e+00> : vector<8xf32>
    %26 = vector.multi_reduction <add>, %25, %cst_16 [1] : vector<8x16xf32> to vector<8xf32>
    %27 = vector.shape_cast %26 : vector<8xf32> to vector<8x1xf32>
    %28 = arith.maximumf %18, %21 : vector<8x1xf32>
    %29 = arith.maximumf %28, %24 : vector<8x1xf32>
    %30 = arith.maximumf %29, %27 : vector<8x1xf32>
    %31 = arith.subf %18, %30 : vector<8x1xf32>
    %32 = math.exp %31 : vector<8x1xf32>
    %33 = arith.subf %21, %30 : vector<8x1xf32>
    %34 = math.exp %33 : vector<8x1xf32>
    %35 = arith.subf %24, %30 : vector<8x1xf32>
    %36 = math.exp %35 : vector<8x1xf32>
    %37 = arith.subf %27, %30 : vector<8x1xf32>
    %38 = math.exp %37 : vector<8x1xf32>
    %39 = arith.addf %32, %34 : vector<8x1xf32>
    %40 = arith.addf %39, %36 : vector<8x1xf32>
    %41 = arith.addf %40, %38 : vector<8x1xf32>
    %42 = tpu.reciprocal %41 {approx = true} : vector<8x1xf32> -> vector<8x1xf32>
    %43 = vector.extract_strided_slice %1 {offsets = [0, 0], sizes = [8, 32], strides = [1, 1]} : vector<8x256xf32> to vector<8x32xf32>
    %44 = vector.broadcast %32 : vector<8x1xf32> to vector<8x32xf32>
    %45 = arith.mulf %44, %43 : vector<8x32xf32>
    %46 = vector.extract_strided_slice %1 {offsets = [0, 64], sizes = [8, 32], strides = [1, 1]} : vector<8x256xf32> to vector<8x32xf32>
    %47 = vector.broadcast %34 : vector<8x1xf32> to vector<8x32xf32>
    %48 = arith.mulf %47, %46 : vector<8x32xf32>
    %49 = arith.addf %45, %48 : vector<8x32xf32>
    %50 = vector.extract_strided_slice %1 {offsets = [0, 128], sizes = [8, 32], strides = [1, 1]} : vector<8x256xf32> to vector<8x32xf32>
    %51 = vector.broadcast %36 : vector<8x1xf32> to vector<8x32xf32>
    %52 = arith.mulf %51, %50 : vector<8x32xf32>
    %53 = arith.addf %49, %52 : vector<8x32xf32>
    %54 = vector.extract_strided_slice %1 {offsets = [0, 192], sizes = [8, 32], strides = [1, 1]} : vector<8x256xf32> to vector<8x32xf32>
    %55 = vector.broadcast %38 : vector<8x1xf32> to vector<8x32xf32>
    %56 = arith.mulf %55, %54 : vector<8x32xf32>
    %57 = arith.addf %53, %56 : vector<8x32xf32>
    %58 = vector.broadcast %42 : vector<8x1xf32> to vector<8x32xf32>
    %59 = arith.mulf %57, %58 : vector<8x32xf32>
    %c0_17 = arith.constant 0 : index
    %c0_18 = arith.constant 0 : index
    %60 = vector.load %arg3[%c0_17, %c0_18] : memref<8x256xf32, #tpu.memory_space<vmem>>, vector<8x256xf32>
    %c0_19 = arith.constant 0 : index
    %c0_20 = arith.constant 0 : index
    %61 = vector.load %arg8[%c0_19, %c0_20] : memref<256x64xf32, #tpu.memory_space<vmem>>, vector<256x64xf32>
    %cst_21 = arith.constant dense<0.000000e+00> : vector<8x64xf32>
    %62 = tpu.matmul %60, %61, %cst_21 {dimension_numbers = #tpu.dot_dimension_numbers<[1], [0], [0], [1], [0, 0, 1, 1], [], []>} : vector<8x256xf32>, vector<256x64xf32>, vector<8x64xf32> -> vector<8x64xf32>
    %c0_22 = arith.constant 0 : index
    %c0_23 = arith.constant 0 : index
    %63 = vector.load %arg9[%c0_22, %c0_23] : memref<32x16xf32, #tpu.memory_space<vmem>>, vector<32x16xf32>
    %cst_24 = arith.constant dense<0.000000e+00> : vector<8x16xf32>
    %64 = tpu.matmul %0, %63, %cst_24 {dimension_numbers = #tpu.dot_dimension_numbers<[1], [0], [0], [1], [0, 0, 1, 1], [], []>} : vector<8x32xf32>, vector<32x16xf32>, vector<8x16xf32> -> vector<8x16xf32>
    %65 = tpu.concatenate %64, %64, %64, %64 in 1 : vector<8x16xf32>, vector<8x16xf32>, vector<8x16xf32>, vector<8x16xf32> -> vector<8x64xf32>
    %66 = arith.addf %62, %65 : vector<8x64xf32>
    %c0_25 = arith.constant 0 : index
    %c0_26 = arith.constant 0 : index
    %67 = vector.load %arg10[%c0_25, %c0_26] : memref<1x64xf32, #tpu.memory_space<vmem>>, vector<1x64xf32>
    %68 = vector.broadcast %67 : vector<1x64xf32> to vector<8x64xf32>
    %69 = arith.addf %66, %68 : vector<8x64xf32>
    %cst_27 = arith.constant 0.000000e+00 : f32
    %70 = vector.broadcast %cst_27 : f32 to vector<8x64xf32>
    %71 = arith.maximumf %69, %70 : vector<8x64xf32>
    %c0_28 = arith.constant 0 : index
    %c0_29 = arith.constant 0 : index
    %72 = vector.load %arg11[%c0_28, %c0_29] : memref<1x64xf32, #tpu.memory_space<vmem>>, vector<1x64xf32>
    %73 = vector.broadcast %72 : vector<1x64xf32> to vector<8x64xf32>
    %74 = arith.mulf %71, %73 : vector<8x64xf32>
    %75 = vector.extract_strided_slice %74 {offsets = [0, 0], sizes = [8, 16], strides = [1, 1]} : vector<8x64xf32> to vector<8x16xf32>
    %cst_30 = arith.constant dense<0.000000e+00> : vector<8xf32>
    %76 = vector.multi_reduction <add>, %75, %cst_30 [1] : vector<8x16xf32> to vector<8xf32>
    %77 = vector.shape_cast %76 : vector<8xf32> to vector<8x1xf32>
    %78 = vector.extract_strided_slice %74 {offsets = [0, 16], sizes = [8, 16], strides = [1, 1]} : vector<8x64xf32> to vector<8x16xf32>
    %cst_31 = arith.constant dense<0.000000e+00> : vector<8xf32>
    %79 = vector.multi_reduction <add>, %78, %cst_31 [1] : vector<8x16xf32> to vector<8xf32>
    %80 = vector.shape_cast %79 : vector<8xf32> to vector<8x1xf32>
    %81 = vector.extract_strided_slice %74 {offsets = [0, 32], sizes = [8, 16], strides = [1, 1]} : vector<8x64xf32> to vector<8x16xf32>
    %cst_32 = arith.constant dense<0.000000e+00> : vector<8xf32>
    %82 = vector.multi_reduction <add>, %81, %cst_32 [1] : vector<8x16xf32> to vector<8xf32>
    %83 = vector.shape_cast %82 : vector<8xf32> to vector<8x1xf32>
    %84 = vector.extract_strided_slice %74 {offsets = [0, 48], sizes = [8, 16], strides = [1, 1]} : vector<8x64xf32> to vector<8x16xf32>
    %cst_33 = arith.constant dense<0.000000e+00> : vector<8xf32>
    %85 = vector.multi_reduction <add>, %84, %cst_33 [1] : vector<8x16xf32> to vector<8xf32>
    %86 = vector.shape_cast %85 : vector<8xf32> to vector<8x1xf32>
    %87 = arith.maximumf %77, %80 : vector<8x1xf32>
    %88 = arith.maximumf %87, %83 : vector<8x1xf32>
    %89 = arith.maximumf %88, %86 : vector<8x1xf32>
    %90 = arith.subf %77, %89 : vector<8x1xf32>
    %91 = math.exp %90 : vector<8x1xf32>
    %92 = arith.subf %80, %89 : vector<8x1xf32>
    %93 = math.exp %92 : vector<8x1xf32>
    %94 = arith.subf %83, %89 : vector<8x1xf32>
    %95 = math.exp %94 : vector<8x1xf32>
    %96 = arith.subf %86, %89 : vector<8x1xf32>
    %97 = math.exp %96 : vector<8x1xf32>
    %98 = arith.addf %91, %93 : vector<8x1xf32>
    %99 = arith.addf %98, %95 : vector<8x1xf32>
    %100 = arith.addf %99, %97 : vector<8x1xf32>
    %101 = tpu.reciprocal %100 {approx = true} : vector<8x1xf32> -> vector<8x1xf32>
    %102 = vector.extract_strided_slice %60 {offsets = [0, 0], sizes = [8, 32], strides = [1, 1]} : vector<8x256xf32> to vector<8x32xf32>
    %103 = vector.broadcast %91 : vector<8x1xf32> to vector<8x32xf32>
    %104 = arith.mulf %103, %102 : vector<8x32xf32>
    %105 = vector.extract_strided_slice %60 {offsets = [0, 64], sizes = [8, 32], strides = [1, 1]} : vector<8x256xf32> to vector<8x32xf32>
    %106 = vector.broadcast %93 : vector<8x1xf32> to vector<8x32xf32>
    %107 = arith.mulf %106, %105 : vector<8x32xf32>
    %108 = arith.addf %104, %107 : vector<8x32xf32>
    %109 = vector.extract_strided_slice %60 {offsets = [0, 128], sizes = [8, 32], strides = [1, 1]} : vector<8x256xf32> to vector<8x32xf32>
    %110 = vector.broadcast %95 : vector<8x1xf32> to vector<8x32xf32>
    %111 = arith.mulf %110, %109 : vector<8x32xf32>
    %112 = arith.addf %108, %111 : vector<8x32xf32>
    %113 = vector.extract_strided_slice %60 {offsets = [0, 192], sizes = [8, 32], strides = [1, 1]} : vector<8x256xf32> to vector<8x32xf32>
    %114 = vector.broadcast %97 : vector<8x1xf32> to vector<8x32xf32>
    %115 = arith.mulf %114, %113 : vector<8x32xf32>
    %116 = arith.addf %112, %115 : vector<8x32xf32>
    %117 = vector.broadcast %101 : vector<8x1xf32> to vector<8x32xf32>
    %118 = arith.mulf %116, %117 : vector<8x32xf32>
    %119 = tpu.concatenate %0, %59, %118 in 0 : vector<8x32xf32>, vector<8x32xf32>, vector<8x32xf32> -> vector<24x32xf32>
    %c0_34 = arith.constant 0 : index
    %c0_35 = arith.constant 0 : index
    %120 = vector.load %arg12[%c0_34, %c0_35] : memref<32x16xf32, #tpu.memory_space<vmem>>, vector<32x16xf32>
    %cst_36 = arith.constant dense<0.000000e+00> : vector<24x16xf32>
    %121 = tpu.matmul %119, %120, %cst_36 {dimension_numbers = #tpu.dot_dimension_numbers<[1], [0], [0], [1], [0, 0, 1, 1], [], []>} : vector<24x32xf32>, vector<32x16xf32>, vector<24x16xf32> -> vector<24x16xf32>
    %c0_37 = arith.constant 0 : index
    %c0_38 = arith.constant 0 : index
    %122 = vector.load %arg13[%c0_37, %c0_38] : memref<1x16xf32, #tpu.memory_space<vmem>>, vector<1x16xf32>
    %123 = vector.broadcast %122 : vector<1x16xf32> to vector<24x16xf32>
    %124 = arith.addf %121, %123 : vector<24x16xf32>
    %cst_39 = arith.constant 0.000000e+00 : f32
    %125 = vector.broadcast %cst_39 : f32 to vector<24x16xf32>
    %126 = arith.maximumf %124, %125 : vector<24x16xf32>
    %c0_40 = arith.constant 0 : index
    %c0_41 = arith.constant 0 : index
    %127 = vector.load %arg14[%c0_40, %c0_41] : memref<1x16xf32, #tpu.memory_space<vmem>>, vector<1x16xf32>
    %128 = vector.broadcast %127 : vector<1x16xf32> to vector<24x16xf32>
    %129 = arith.mulf %126, %128 : vector<24x16xf32>
    %cst_42 = arith.constant dense<0.000000e+00> : vector<24xf32>
    %130 = vector.multi_reduction <add>, %129, %cst_42 [1] : vector<24x16xf32> to vector<24xf32>
    %131 = vector.shape_cast %130 : vector<24xf32> to vector<24x1xf32>
    %132 = vector.extract_strided_slice %131 {offsets = [0, 0], sizes = [8, 1], strides = [1, 1]} : vector<24x1xf32> to vector<8x1xf32>
    %133 = vector.extract_strided_slice %131 {offsets = [8, 0], sizes = [8, 1], strides = [1, 1]} : vector<24x1xf32> to vector<8x1xf32>
    %134 = vector.extract_strided_slice %131 {offsets = [16, 0], sizes = [8, 1], strides = [1, 1]} : vector<24x1xf32> to vector<8x1xf32>
    %135 = arith.maximumf %132, %133 : vector<8x1xf32>
    %136 = arith.maximumf %135, %134 : vector<8x1xf32>
    %137 = arith.subf %132, %136 : vector<8x1xf32>
    %138 = math.exp %137 : vector<8x1xf32>
    %139 = arith.subf %133, %136 : vector<8x1xf32>
    %140 = math.exp %139 : vector<8x1xf32>
    %141 = arith.subf %134, %136 : vector<8x1xf32>
    %142 = math.exp %141 : vector<8x1xf32>
    %143 = arith.addf %138, %140 : vector<8x1xf32>
    %144 = arith.addf %143, %142 : vector<8x1xf32>
    %145 = tpu.reciprocal %144 {approx = true} : vector<8x1xf32> -> vector<8x1xf32>
    %146 = vector.broadcast %138 : vector<8x1xf32> to vector<8x32xf32>
    %147 = arith.mulf %146, %0 : vector<8x32xf32>
    %148 = vector.broadcast %140 : vector<8x1xf32> to vector<8x32xf32>
    %149 = arith.mulf %148, %59 : vector<8x32xf32>
    %150 = arith.addf %147, %149 : vector<8x32xf32>
    %151 = vector.broadcast %142 : vector<8x1xf32> to vector<8x32xf32>
    %152 = arith.mulf %151, %118 : vector<8x32xf32>
    %153 = arith.addf %150, %152 : vector<8x32xf32>
    %154 = vector.broadcast %145 : vector<8x1xf32> to vector<8x32xf32>
    %155 = arith.mulf %153, %154 : vector<8x32xf32>
    %156 = arith.mulf %155, %155 : vector<8x32xf32>
    %cst_43 = arith.constant dense<0.000000e+00> : vector<8xf32>
    %157 = vector.multi_reduction <add>, %156, %cst_43 [1] : vector<8x32xf32> to vector<8xf32>
    %158 = vector.shape_cast %157 : vector<8xf32> to vector<8x1xf32>
    %159 = math.sqrt %158 : vector<8x1xf32>
    %cst_44 = arith.constant 9.99999996E-13 : f32
    %160 = vector.broadcast %cst_44 : f32 to vector<8x1xf32>
    %161 = arith.maximumf %159, %160 : vector<8x1xf32>
    %162 = tpu.reciprocal %161 {approx = true} : vector<8x1xf32> -> vector<8x1xf32>
    %163 = vector.broadcast %162 : vector<8x1xf32> to vector<8x32xf32>
    %164 = arith.mulf %155, %163 : vector<8x32xf32>
    %165 = tpu.concatenate %0, %164 in 1 : vector<8x32xf32>, vector<8x32xf32> -> vector<8x64xf32>
    %c0_45 = arith.constant 0 : index
    %c0_46 = arith.constant 0 : index
    %166 = vector.load %arg15[%c0_45, %c0_46] : memref<8x64xf32, #tpu.memory_space<vmem>>, vector<8x64xf32>
    tpu.vector_store %arg15[%c0_45, %c0_46], %165 {strides = array<i32>} : memref<8x64xf32, #tpu.memory_space<vmem>>, vector<8x64xf32>,
    return
  }
  func.func @transform_0(%arg0: i32) -> (i32, i32) {
    %c0_i32 = arith.constant 0 : i32
    %c0_i32_0 = arith.constant 0 : i32
    return %arg0, %c0_i32 : i32, i32
  }
  func.func @transform_1(%arg0: i32) -> (i32, i32) {
    %c0_i32 = arith.constant 0 : i32
    %c0_i32_0 = arith.constant 0 : i32
    return %arg0, %c0_i32 : i32, i32
  }
  func.func @transform_2(%arg0: i32) -> (i32, i32) {
    %c0_i32 = arith.constant 0 : i32
    %c0_i32_0 = arith.constant 0 : i32
    return %arg0, %c0_i32 : i32, i32
  }
  func.func @transform_3(%arg0: i32) -> (i32, i32) {
    %c0_i32 = arith.constant 0 : i32
    %c0_i32_0 = arith.constant 0 : i32
    %c0_i32_1 = arith.constant 0 : i32
    return %c0_i32, %c0_i32_0 : i32, i32
  }
  func.func @transform_4(%arg0: i32) -> (i32, i32) {
    %c0_i32 = arith.constant 0 : i32
    %c0_i32_0 = arith.constant 0 : i32
    %c0_i32_1 = arith.constant 0 : i32
    return %c0_i32, %c0_i32_0 : i32, i32
  }
  func.func @transform_5(%arg0: i32) -> (i32, i32) {
    %c0_i32 = arith.constant 0 : i32
    %c0_i32_0 = arith.constant 0 : i32
    %c0_i32_1 = arith.constant 0 : i32
    return %c0_i32, %c0_i32_0 : i32, i32
  }
  func.func @transform_6(%arg0: i32) -> (i32, i32) {
    %c0_i32 = arith.constant 0 : i32
    %c0_i32_0 = arith.constant 0 : i32
    %c0_i32_1 = arith.constant 0 : i32
    return %c0_i32, %c0_i32_0 : i32, i32
  }
  func.func @transform_7(%arg0: i32) -> (i32, i32) {
    %c0_i32 = arith.constant 0 : i32
    %c0_i32_0 = arith.constant 0 : i32
    %c0_i32_1 = arith.constant 0 : i32
    return %c0_i32, %c0_i32_0 : i32, i32
  }
  func.func @transform_8(%arg0: i32) -> (i32, i32) {
    %c0_i32 = arith.constant 0 : i32
    %c0_i32_0 = arith.constant 0 : i32
    %c0_i32_1 = arith.constant 0 : i32
    return %c0_i32, %c0_i32_0 : i32, i32
  }
  func.func @transform_9(%arg0: i32) -> (i32, i32) {
    %c0_i32 = arith.constant 0 : i32
    %c0_i32_0 = arith.constant 0 : i32
    %c0_i32_1 = arith.constant 0 : i32
    return %c0_i32, %c0_i32_0 : i32, i32
  }
  func.func @transform_10(%arg0: i32) -> (i32, i32) {
    %c0_i32 = arith.constant 0 : i32
    %c0_i32_0 = arith.constant 0 : i32
    %c0_i32_1 = arith.constant 0 : i32
    return %c0_i32, %c0_i32_0 : i32, i32
  }
  func.func @transform_11(%arg0: i32) -> (i32, i32) {
    %c0_i32 = arith.constant 0 : i32
    %c0_i32_0 = arith.constant 0 : i32
    %c0_i32_1 = arith.constant 0 : i32
    return %c0_i32, %c0_i32_0 : i32, i32
  }
  func.func @transform_12(%arg0: i32) -> (i32, i32) {
    %c0_i32 = arith.constant 0 : i32
    %c0_i32_0 = arith.constant 0 : i32
    %c0_i32_1 = arith.constant 0 : i32
    return %c0_i32, %c0_i32_0 : i32, i32
  }
  func.func @transform_13(%arg0: i32) -> (i32, i32) {
    %c0_i32 = arith.constant 0 : i32
    %c0_i32_0 = arith.constant 0 : i32
    %c0_i32_1 = arith.constant 0 : i32
    return %c0_i32, %c0_i32_0 : i32, i32
  }
  func.func @transform_14(%arg0: i32) -> (i32, i32) {
    %c0_i32 = arith.constant 0 : i32
    %c0_i32_0 = arith.constant 0 : i32
    return %arg0, %c0_i32 : i32, i32
  }
}

module attributes {stable_mosaic.version = 11 : i64} {
  func.func @_adj_matmul_kernel(%arg0: i32, %arg1: i32, %arg2: memref<8x128xf32, #tpu.memory_space<vmem>>, %arg3: memref<128x64xf32, #tpu.memory_space<vmem>>, %arg4: memref<8x64xf32, #tpu.memory_space<vmem>>, %arg5: memref<8x64xf32, #tpu.memory_space<vmem>>) attributes {dimension_semantics = [#tpu.dimension_semantics<parallel>, #tpu.dimension_semantics<arbitrary>], iteration_bounds = array<i64: 4, 1>, scalar_prefetch = 0 : i64, scratch_operands = 1 : i64, tpu.core_type = #tpu.core_type<tc>, window_params = [{transform_indices = @transform_0, window_bounds = array<i64: 8, 128>}, {transform_indices = @transform_1, window_bounds = array<i64: 128, 64>}, {transform_indices = @transform_2, window_bounds = array<i64: 8, 64>}]} {
    %c0_i32 = arith.constant 0 : i32
    %0 = arith.cmpi eq, %arg1, %c0_i32 : i32
    %1 = arith.extui %0 : i1 to i32
    %c0_i32_0 = arith.constant 0 : i32
    %2 = arith.cmpi ne, %1, %c0_i32_0 : i32
    scf.if %2 {
      %cst_10 = arith.constant 0.000000e+00 : f32
      %12 = vector.broadcast %cst_10 : f32 to vector<8x64xf32>
      %c0_11 = arith.constant 0 : index
      %c0_12 = arith.constant 0 : index
      %13 = vector.load %arg5[%c0_11, %c0_12] : memref<8x64xf32, #tpu.memory_space<vmem>>, vector<8x64xf32>
      tpu.vector_store %arg5[%c0_11, %c0_12], %12 {strides = array<i32>} : memref<8x64xf32, #tpu.memory_space<vmem>>, vector<8x64xf32>,
    } else {
    }
    %c0 = arith.constant 0 : index
    %c0_1 = arith.constant 0 : index
    %3 = vector.load %arg5[%c0, %c0_1] : memref<8x64xf32, #tpu.memory_space<vmem>>, vector<8x64xf32>
    %c0_2 = arith.constant 0 : index
    %c0_3 = arith.constant 0 : index
    %4 = vector.load %arg2[%c0_2, %c0_3] : memref<8x128xf32, #tpu.memory_space<vmem>>, vector<8x128xf32>
    %c0_4 = arith.constant 0 : index
    %c0_5 = arith.constant 0 : index
    %5 = vector.load %arg3[%c0_4, %c0_5] : memref<128x64xf32, #tpu.memory_space<vmem>>, vector<128x64xf32>
    %cst = arith.constant dense<0.000000e+00> : vector<8x64xf32>
    %6 = tpu.matmul %4, %5, %cst {dimension_numbers = #tpu.dot_dimension_numbers<[1], [0], [0], [1], [0, 0, 1, 1], [], []>} : vector<8x128xf32>, vector<128x64xf32>, vector<8x64xf32> -> vector<8x64xf32>
    %7 = arith.addf %3, %6 : vector<8x64xf32>
    %c0_6 = arith.constant 0 : index
    %c0_7 = arith.constant 0 : index
    %8 = vector.load %arg5[%c0_6, %c0_7] : memref<8x64xf32, #tpu.memory_space<vmem>>, vector<8x64xf32>
    tpu.vector_store %arg5[%c0_6, %c0_7], %7 {strides = array<i32>} : memref<8x64xf32, #tpu.memory_space<vmem>>, vector<8x64xf32>,
    %c0_i32_8 = arith.constant 0 : i32
    %9 = arith.cmpi eq, %arg1, %c0_i32_8 : i32
    %10 = arith.extui %9 : i1 to i32
    %c0_i32_9 = arith.constant 0 : i32
    %11 = arith.cmpi ne, %10, %c0_i32_9 : i32
    scf.if %11 {
      %c0_10 = arith.constant 0 : index
      %c0_11 = arith.constant 0 : index
      %12 = vector.load %arg5[%c0_10, %c0_11] : memref<8x64xf32, #tpu.memory_space<vmem>>, vector<8x64xf32>
      %c0_12 = arith.constant 0 : index
      %c0_13 = arith.constant 0 : index
      %13 = vector.load %arg4[%c0_12, %c0_13] : memref<8x64xf32, #tpu.memory_space<vmem>>, vector<8x64xf32>
      tpu.vector_store %arg4[%c0_12, %c0_13], %12 {strides = array<i32>} : memref<8x64xf32, #tpu.memory_space<vmem>>, vector<8x64xf32>,
    } else {
    }
    return
  }
  func.func @transform_0(%arg0: i32, %arg1: i32) -> (i32, i32) {
    %c0_i32 = arith.constant 0 : i32
    return %arg0, %arg1 : i32, i32
  }
  func.func @transform_1(%arg0: i32, %arg1: i32) -> (i32, i32) {
    %c0_i32 = arith.constant 0 : i32
    %c0_i32_0 = arith.constant 0 : i32
    return %arg1, %c0_i32 : i32, i32
  }
  func.func @transform_2(%arg0: i32, %arg1: i32) -> (i32, i32) {
    %c0_i32 = arith.constant 0 : i32
    %c0_i32_0 = arith.constant 0 : i32
    return %arg0, %c0_i32 : i32, i32
  }
}

</mosaic_0001>

<llo_original>
// kernel: taggcn_forward.4
$region0: #{taggcn_forward.4}
  #allocation0 [shape = 'u32[]', space=smem, size = 0x4, offset = 0x4, fixed_abs, tag = 'smem constant byte address 0x4 - core index']
  #allocation1 [shape = 'u32[144,128]{1,0:T(1,128)}', space=vmem, size = 0x12000, scoped, tag = 'internal scratch']
  %s0 = inlined_call_operand.vmem [shape: f32[8,32], index: 0, kind: input, shape index: {}]
  %s1 = inlined_call_operand.vmem [shape: f32[8,256], index: 1, kind: input, shape index: {}]
  %s2 = inlined_call_operand.vmem [shape: f32[8,256], index: 2, kind: input, shape index: {}]
  %s3 = inlined_call_operand.vmem [shape: f32[256,64], index: 3, kind: input, shape index: {}]
  %s4 = inlined_call_operand.vmem [shape: f32[32,16], index: 4, kind: input, shape index: {}]
  %s5 = inlined_call_operand.vmem [shape: f32[1,64], index: 5, kind: input, shape index: {}]
  %s6 = inlined_call_operand.vmem [shape: f32[1,64], index: 6, kind: input, shape index: {}]
  %s7 = inlined_call_operand.vmem [shape: f32[256,64], index: 7, kind: input, shape index: {}]
  %s8 = inlined_call_operand.vmem [shape: f32[32,16], index: 8, kind: input, shape index: {}]
  %s9 = inlined_call_operand.vmem [shape: f32[1,64], index: 9, kind: input, shape index: {}]
  %s10 = inlined_call_operand.vmem [shape: f32[1,64], index: 10, kind: input, shape index: {}]
  %s11 = inlined_call_operand.vmem [shape: f32[32,16], index: 11, kind: input, shape index: {}]
  %s12 = inlined_call_operand.vmem [shape: f32[1,16], index: 12, kind: input, shape index: {}]
  %s13 = inlined_call_operand.vmem [shape: f32[1,16], index: 13, kind: input, shape index: {}]
  %s14 = inlined_call_operand.vmem [shape: f32[8,64], index: 14, kind: output, shape index: {}]
  %s15 = sld [smem:[#allocation0]]
  $region66: #{taggcn_forward.4} parent=0
    _
  %s17 = ssub.s32 1, %s15
  %s18 = scalar_select 0, %s17, %s15
  // Predicated region
  $region2: #{taggcn_forward.4} parent=0 // pred_check
    _
  $region3: #{taggcn_forward.4} parent=0 // pred_check_branch
    %20 = sbr.rel (0) target = $region5
  $region4: #{taggcn_forward.4} parent=0 // pred_region
    _
  $region5: #{taggcn_forward.4} parent=0 // pred_fallthru
    _
  // Predicated region
  $region6: #{taggcn_forward.4} parent=0 // pred_check
    _
  $region7: #{taggcn_forward.4} parent=0 // pred_check_branch
    %22 = sbr.rel (0) target = $region9
  $region8: #{taggcn_forward.4} parent=0 // pred_region
    _
  $region9: #{taggcn_forward.4} parent=0 // pred_fallthru
    _
  // Predicated region
  $region10: #{taggcn_forward.4} parent=0 // pred_check
    _
  $region11: #{taggcn_forward.4} parent=0 // pred_check_branch
    %24 = sbr.rel (0) target = $region13
  $region12: #{taggcn_forward.4} parent=0 // pred_region
    _
  $region13: #{taggcn_forward.4} parent=0 // pred_fallthru
    _
  // Predicated region
  $region14: #{taggcn_forward.4} parent=0 // pred_check
    _
  $region15: #{taggcn_forward.4} parent=0 // pred_check_branch
    %26 = sbr.rel (0) target = $region17
  $region16: #{taggcn_forward.4} parent=0 // pred_region
    _
  $region17: #{taggcn_forward.4} parent=0 // pred_fallthru
    _
  // Predicated region
  $region18: #{taggcn_forward.4} parent=0 // pred_check
    _
  $region19: #{taggcn_forward.4} parent=0 // pred_check_branch
    %28 = sbr.rel (0) target = $region21
  $region20: #{taggcn_forward.4} parent=0 // pred_region
    _
  $region21: #{taggcn_forward.4} parent=0 // pred_fallthru
    _
  // Predicated region
  $region22: #{taggcn_forward.4} parent=0 // pred_check
    _
  $region23: #{taggcn_forward.4} parent=0 // pred_check_branch
    %30 = sbr.rel (0) target = $region25
  $region24: #{taggcn_forward.4} parent=0 // pred_region
    _
  $region25: #{taggcn_forward.4} parent=0 // pred_fallthru
    _
  // Predicated region
  $region26: #{taggcn_forward.4} parent=0 // pred_check
    _
  $region27: #{taggcn_forward.4} parent=0 // pred_check_branch
    %32 = sbr.rel (0) target = $region29
  $region28: #{taggcn_forward.4} parent=0 // pred_region
    _
  $region29: #{taggcn_forward.4} parent=0 // pred_fallthru
    _
  // Predicated region
  $region30: #{taggcn_forward.4} parent=0 // pred_check
    _
  $region31: #{taggcn_forward.4} parent=0 // pred_check_branch
    %34 = sbr.rel (0) target = $region33
  $region32: #{taggcn_forward.4} parent=0 // pred_region
    _
  $region33: #{taggcn_forward.4} parent=0 // pred_fallthru
    _
  // Predicated region
  $region34: #{taggcn_forward.4} parent=0 // pred_check
    _
  $region35: #{taggcn_forward.4} parent=0 // pred_check_branch
    %36 = sbr.rel (0) target = $region37
  $region36: #{taggcn_forward.4} parent=0 // pred_region
    _
  $region37: #{taggcn_forward.4} parent=0 // pred_fallthru
    _
  // Predicated region
  $region38: #{taggcn_forward.4} parent=0 // pred_check
    _
  $region39: #{taggcn_forward.4} parent=0 // pred_check_branch
    %38 = sbr.rel (0) target = $region41
  $region40: #{taggcn_forward.4} parent=0 // pred_region
    _
  $region41: #{taggcn_forward.4} parent=0 // pred_fallthru
    _
  // Predicated region
  $region42: #{taggcn_forward.4} parent=0 // pred_check
    _
  $region43: #{taggcn_forward.4} parent=0 // pred_check_branch
    %40 = sbr.rel (0) target = $region45
  $region44: #{taggcn_forward.4} parent=0 // pred_region
    _
  $region45: #{taggcn_forward.4} parent=0 // pred_fallthru
    _
  // Predicated region
  $region46: #{taggcn_forward.4} parent=0 // pred_check
    _
  $region47: #{taggcn_forward.4} parent=0 // pred_check_branch
    %42 = sbr.rel (0) target = $region49
  $region48: #{taggcn_forward.4} parent=0 // pred_region
    _
  $region49: #{taggcn_forward.4} parent=0 // pred_fallthru
    _
  // Predicated region
  $region50: #{taggcn_forward.4} parent=0 // pred_check
    _
  $region51: #{taggcn_forward.4} parent=0 // pred_check_branch
    %44 = sbr.rel (0) target = $region53
  $region52: #{taggcn_forward.4} parent=0 // pred_region
    _
  $region53: #{taggcn_forward.4} parent=0 // pred_fallthru
    _
  // Predicated region
  $region54: #{taggcn_forward.4} parent=0 // pred_check
    _
  $region55: #{taggcn_forward.4} parent=0 // pred_check_branch
    %46 = sbr.rel (0) target = $region57
  $region56: #{taggcn_forward.4} parent=0 // pred_region
    _
  $region57: #{taggcn_forward.4} parent=0 // pred_fallthru
    _
  %v47 = vld [vmem:[%s0] sm:$0xff]
  %v48 = vld [vmem:[%s1] sm:$0xff]
  %v49 = vld [vmem:[%s1 + $0x8] sm:$0xff]
  %v50 = vld [vmem:[%s3] sm:$0xff]
  %v51 = vld [vmem:[%s3 + $0x8] sm:$0xff]
  %v52 = vld [vmem:[%s3 + $0x10] sm:$0xff]
  %v53 = vld [vmem:[%s3 + $0x18] sm:$0xff]
  %v54 = vld [vmem:[%s3 + $0x20] sm:$0xff]
  %v55 = vld [vmem:[%s3 + $0x28] sm:$0xff]
  %v56 = vld [vmem:[%s3 + $0x30] sm:$0xff]
  %v57 = vld [vmem:[%s3 + $0x38] sm:$0xff]
  %v58 = vld [vmem:[%s3 + $0x40] sm:$0xff]
  %v59 = vld [vmem:[%s3 + $0x48] sm:$0xff]
  %v60 = vld [vmem:[%s3 + $0x50] sm:$0xff]
  %v61 = vld [vmem:[%s3 + $0x58] sm:$0xff]
  %v62 = vld [vmem:[%s3 + $0x60] sm:$0xff]
  %v63 = vld [vmem:[%s3 + $0x68] sm:$0xff]
  %v64 = vld [vmem:[%s3 + $0x70] sm:$0xff]
  %v65 = vld [vmem:[%s3 + $0x78] sm:$0xff]
  %v66 = vld [vmem:[%s3 + $0x80] sm:$0xff]
  %v67 = vld [vmem:[%s3 + $0x88] sm:$0xff]
  %v68 = vld [vmem:[%s3 + $0x90] sm:$0xff]
  %v69 = vld [vmem:[%s3 + $0x98] sm:$0xff]
  %v70 = vld [vmem:[%s3 + $0xa0] sm:$0xff]
  %v71 = vld [vmem:[%s3 + $0xa8] sm:$0xff]
  %v72 = vld [vmem:[%s3 + $0xb0] sm:$0xff]
  %v73 = vld [vmem:[%s3 + $0xb8] sm:$0xff]
  %v74 = vld [vmem:[%s3 + $0xc0] sm:$0xff]
  %v75 = vld [vmem:[%s3 + $0xc8] sm:$0xff]
  %v76 = vld [vmem:[%s3 + $0xd0] sm:$0xff]
  %v77 = vld [vmem:[%s3 + $0xd8] sm:$0xff]
  %v78 = vld [vmem:[%s3 + $0xe0] sm:$0xff]
  %v79 = vld [vmem:[%s3 + $0xe8] sm:$0xff]
  %v80 = vld [vmem:[%s3 + $0xf0] sm:$0xff]
  %v81 = vld [vmem:[%s3 + $0xf8] sm:$0xff]
  %v82 = vld [vmem:[%s4] sm:$0xff]
  %v83 = vld [vmem:[%s4 + $0x8] sm:$0xff]
  %v84 = vld [vmem:[%s4 + $0x10] sm:$0xff]
  %v85 = vld [vmem:[%s4 + $0x18] sm:$0xff]
  %vm86 = vcmask 261120
  %v88 = vsel %vm86, %v47, 0
  %90 = vmatprep.subr.mxu0 0.0
  %91 = vmatpush1.msra.mxu0 0.0
  %92 = vmatprep.subr.mxu0 0.0
  %93 = vmatpush1.msra.mxu0 0.0
  %94 = vmatprep.subr.mxu0 0.0
  %95 = vmatpush1.msra.mxu0 0.0
  %96 = vmatprep.subr.mxu0 0.0
  %97 = vmatpush1.msra.mxu0 0.0
  %98 = vmatprep.subr.mxu0 0.0
  %99 = vmatpush1.msra.mxu0 0.0
  %100 = vmatprep.subr.mxu0 0.0
  %101 = vmatpush1.msra.mxu0 0.0
  %102 = vmatprep.subr.mxu0 0.0
  %103 = vmatpush1.msra.mxu0 0.0
  %104 = vmatprep.subr.mxu0 0.0
  %105 = vmatpush1.msra.mxu0 0.0
  %106 = vmatprep.subr.mxu0 0.0
  %107 = vmatpush1.msra.mxu0 0.0
  %108 = vmatprep.subr.mxu0 0.0
  %109 = vmatpush1.msra.mxu0 0.0
  %110 = vmatprep.subr.mxu0 0.0
  %111 = vmatpush1.msra.mxu0 0.0
  %112 = vmatprep.subr.mxu0 0.0
  %113 = vmatpush1.msra.mxu0 0.0
  %114 = vmatprep.subr.mxu0 0.0
  %115 = vmatpush1.msra.mxu0 %v85
  %116 = vmatprep.subr.mxu0 0.0
  %117 = vmatpush1.msra.mxu0 %v84
  %118 = vmatprep.subr.mxu0 0.0
  %119 = vmatpush1.msra.mxu0 %v83
  %120 = vmatprep.subr.mxu0 0.0
  %121 = vmatpush1.msra.mxu0 %v82
  %122 = vmatprep.subr.mxu0 0.0
  %123 = vmatpush2.msra.mxu0 0.0
  %124 = vmatprep.subr.mxu0 0.0
  %125 = vmatpush2.msra.mxu0 0.0
  %126 = vmatprep.subr.mxu0 0.0
  %127 = vmatpush2.msra.mxu0 0.0
  %128 = vmatprep.subr.mxu0 0.0
  %129 = vmatpush2.msra.mxu0 0.0
  %130 = vmatprep.subr.mxu0 0.0
  %131 = vmatpush2.msra.mxu0 0.0
  %132 = vmatprep.subr.mxu0 0.0
  %133 = vmatpush2.msra.mxu0 0.0
  %134 = vmatprep.subr.mxu0 0.0
  %135 = vmatpush2.msra.mxu0 0.0
  %136 = vmatprep.subr.mxu0 0.0
  %137 = vmatpush2.msra.mxu0 0.0
  %138 = vmatprep.subr.mxu0 0.0
  %139 = vmatpush2.msra.mxu0 0.0
  %140 = vmatprep.subr.mxu0 0.0
  %141 = vmatpush2.msra.mxu0 0.0
  %142 = vmatprep.subr.mxu0 0.0
  %143 = vmatpush2.msra.mxu0 0.0
  %144 = vmatprep.subr.mxu0 0.0
  %145 = vmatpush2.msra.mxu0 0.0
  %146 = vmatprep.subr.mxu0 0.0
  %147 = vmatpush2.msra.mxu0 0.0
  %148 = vmatprep.subr.mxu0 0.0
  %149 = vmatpush2.msra.mxu0 0.0
  %150 = vmatprep.subr.mxu0 0.0
  %151 = vmatpush2.msra.mxu0 0.0
  %152 = vmatprep.subr.mxu0 0.0
  %153 = vmatpush2.msra.mxu0 0.0
  %154 = vmatprep.mubr.f32.mxu0 0.0
  %155 = vmatmul.mubr.f32.gmra.mxu0 %v88
  %v156 = vpop.f32.mrf.mxu0
  %v157 = vadd.f32 0.0, %v156
  %v158 = vpop.f32.mrf.mxu0
  %159 = vdwg.mxu0
  %161 = vrot.lane.b32.xlu0 %v157, 16
  %v162 = vpop.permute.xlu0 %161
  %164 = vrot.lane.b32.xlu0 %v157, 32
  %v165 = vpop.permute.xlu0 %164
  %167 = vrot.lane.b32.xlu0 %v157, 48
  %v168 = vpop.permute.xlu0 %167
  %vm170 = vcmask 130048
  %v171 = vsel %vm170, %v157, %v162
  %v172 = vsel %vm86, %v171, %v165
  %vm173 = vcmask 392192
  %v174 = vsel %vm173, %v172, %v168
  %175 = vmatprep.subr.mxu0 0.0
  %176 = vmatpush1.msra.mxu0 %v65
  %177 = vmatprep.subr.mxu0 0.0
  %178 = vmatpush1.msra.mxu0 %v64
  %179 = vmatprep.subr.mxu0 0.0
  %180 = vmatpush1.msra.mxu0 %v63
  %181 = vmatprep.subr.mxu0 0.0
  %182 = vmatpush1.msra.mxu0 %v62
  %183 = vmatprep.subr.mxu0 0.0
  %184 = vmatpush1.msra.mxu0 %v61
  %185 = vmatprep.subr.mxu0 0.0
  %186 = vmatpush1.msra.mxu0 %v60
  %187 = vmatprep.subr.mxu0 0.0
  %188 = vmatpush1.msra.mxu0 %v59
  %189 = vmatprep.subr.mxu0 0.0
  %190 = vmatpush1.msra.mxu0 %v58
  %191 = vmatprep.subr.mxu0 0.0
  %192 = vmatpush1.msra.mxu0 %v57
  %193 = vmatprep.subr.mxu0 0.0
  %194 = vmatpush1.msra.mxu0 %v56
  %195 = vmatprep.subr.mxu0 0.0
  %196 = vmatpush1.msra.mxu0 %v55
  %197 = vmatprep.subr.mxu0 0.0
  %198 = vmatpush1.msra.mxu0 %v54
  %199 = vmatprep.subr.mxu0 0.0
  %200 = vmatpush1.msra.mxu0 %v53
  %201 = vmatprep.subr.mxu0 0.0
  %202 = vmatpush1.msra.mxu0 %v52
  %203 = vmatprep.subr.mxu0 0.0
  %204 = vmatpush1.msra.mxu0 %v51
  %205 = vmatprep.subr.mxu0 0.0
  %206 = vmatpush1.msra.mxu0 %v50
  %207 = vmatprep.subr.mxu0 0.0
  %208 = vmatpush2.msra.mxu0 %v81
  %209 = vmatprep.subr.mxu0 0.0
  %210 = vmatpush2.msra.mxu0 %v80
  %211 = vmatprep.subr.mxu0 0.0
  %212 = vmatpush2.msra.mxu0 %v79
  %213 = vmatprep.subr.mxu0 0.0
  %214 = vmatpush2.msra.mxu0 %v78
  %215 = vmatprep.subr.mxu0 0.0
  %216 = vmatpush2.msra.mxu0 %v77
  %217 = vmatprep.subr.mxu0 0.0
  %218 = vmatpush2.msra.mxu0 %v76
  %219 = vmatprep.subr.mxu0 0.0
  %220 = vmatpush2.msra.mxu0 %v75
  %221 = vmatprep.subr.mxu0 0.0
  %222 = vmatpush2.msra.mxu0 %v74
  %223 = vmatprep.subr.mxu0 0.0
  %224 = vmatpush2.msra.mxu0 %v73
  %225 = vmatprep.subr.mxu0 0.0
  %226 = vmatpush2.msra.mxu0 %v72
  %227 = vmatprep.subr.mxu0 0.0
  %228 = vmatpush2.msra.mxu0 %v71
  %229 = vmatprep.subr.mxu0 0.0
  %230 = vmatpush2.msra.mxu0 %v70
  %231 = vmatprep.subr.mxu0 0.0
  %232 = vmatpush2.msra.mxu0 %v69
  %233 = vmatprep.subr.mxu0 0.0
  %234 = vmatpush2.msra.mxu0 %v68
  %235 = vmatprep.subr.mxu0 0.0
  %236 = vmatpush2.msra.mxu0 %v67
  %237 = vmatprep.subr.mxu0 0.0
  %238 = vmatpush2.msra.mxu0 %v66
  %239 = vmatprep.mubr.f32.mxu0 %v49
  %240 = vmatmul.mubr.f32.gmra.mxu0 %v48
  %v241 = vpop.f32.mrf.mxu0
  %v242 = vadd.f32 %v174, %v241
  %v243 = vpop.f32.mrf.mxu0
  %244 = vdwg.mxu0
  %v245 = vld [vmem:[%s5] sm:$0x1]
  %v247 = vlaneseq
  %v248 = vshrl.u32 %v247, 7
  %v249 = vsub.s32 0, %v248
  %v250 = vrot.slane %v245, %v249
  %v252 = vadd.f32 %v242, %v250
  %v253 = vmax.f32 %v252, 0.0
  %v254 = vld [vmem:[%s6] sm:$0x1]
  %v256 = vlaneseq
  %v257 = vshrl.u32 %v256, 7
  %v258 = vsub.s32 0, %v257
  %v259 = vrot.slane %v254, %v258
  %v261 = vmul.f32 %v253, %v259
  %v262 = vsel %vm170, %v261, 0.0
  %263 = vadd.xlane.f32.xlu0 %v262
  %v264 = vpop.xlane.xlu0 %263
  %266 = vrot.lane.b32.xlu0 %v261, 112
  %v267 = vpop.permute.xlu0 %266
  %v269 = vsel %vm170, %v267, 0.0
  %270 = vadd.xlane.f32.xlu0 %v269
  %v271 = vpop.xlane.xlu0 %270
  %272 = vrot.lane.b32.xlu0 %v261, 96
  %v273 = vpop.permute.xlu0 %272
  %v275 = vsel %vm170, %v273, 0.0
  %276 = vadd.xlane.f32.xlu0 %v275
  %v277 = vpop.xlane.xlu0 %276
  %278 = vrot.lane.b32.xlu0 %v261, 80
  %v279 = vpop.permute.xlu0 %278
  %v281 = vsel %vm170, %v279, 0.0
  %282 = vadd.xlane.f32.xlu0 %v281
  %v283 = vpop.xlane.xlu0 %282
  %v284 = vmax.f32 %v264, %v271
  %v285 = vmax.f32 %v284, %v277
  %v286 = vmax.f32 %v285, %v283
  %v287 = vsub.f32 %v264, %v286
  %v288 = vmul.f32 %v287, 1.442695
  %v289 = vpow.pop %v288
  %v290 = vsub.f32 %v271, %v286
  %v291 = vmul.f32 %v290, 1.442695
  %v292 = vpow.pop %v291
  %v293 = vsub.f32 %v277, %v286
  %v294 = vmul.f32 %v293, 1.442695
  %v295 = vpow.pop %v294
  %v296 = vsub.f32 %v283, %v286
  %v297 = vmul.f32 %v296, 1.442695
  %v298 = vpow.pop %v297
  %v299 = vadd.f32 %v289, %v292
  %v300 = vadd.f32 %v299, %v295
  %v301 = vadd.f32 %v300, %v298
  %v302 = vrcp.pop %v301
  %v303 = vmul.f32 %v289, %v48
  %v304 = vmul.f32 %v292, %v48
  %306 = vrot.lane.b32.xlu0 %v304, 64
  %v307 = vpop.permute.xlu0 %306
  %v309 = vadd.f32 %v303, %v307
  %v310 = vmul.f32 %v295, %v49
  %v311 = vadd.f32 %v309, %v310
  %v312 = vmul.f32 %v298, %v49
  %314 = vrot.lane.b32.xlu0 %v312, 64
  %v315 = vpop.permute.xlu0 %314
  %v317 = vadd.f32 %v311, %v315
  %v318 = vmul.f32 %v317, %v302
  %v319 = vld [vmem:[%s2] sm:$0xff]
  %v320 = vld [vmem:[%s2 + $0x8] sm:$0xff]
  %v321 = vld [vmem:[%s7] sm:$0xff]
  %v322 = vld [vmem:[%s7 + $0x8] sm:$0xff]
  %v323 = vld [vmem:[%s7 + $0x10] sm:$0xff]
  %v324 = vld [vmem:[%s7 + $0x18] sm:$0xff]
  %v325 = vld [vmem:[%s7 + $0x20] sm:$0xff]
  %v326 = vld [vmem:[%s7 + $0x28] sm:$0xff]
  %v327 = vld [vmem:[%s7 + $0x30] sm:$0xff]
  %v328 = vld [vmem:[%s7 + $0x38] sm:$0xff]
  %v329 = vld [vmem:[%s7 + $0x40] sm:$0xff]
  %v330 = vld [vmem:[%s7 + $0x48] sm:$0xff]
  %v331 = vld [vmem:[%s7 + $0x50] sm:$0xff]
  %v332 = vld [vmem:[%s7 + $0x58] sm:$0xff]
  %v333 = vld [vmem:[%s7 + $0x60] sm:$0xff]
  %v334 = vld [vmem:[%s7 + $0x68] sm:$0xff]
  %v335 = vld [vmem:[%s7 + $0x70] sm:$0xff]
  %v336 = vld [vmem:[%s7 + $0x78] sm:$0xff]
  %v337 = vld [vmem:[%s7 + $0x80] sm:$0xff]
  %v338 = vld [vmem:[%s7 + $0x88] sm:$0xff]
  %v339 = vld [vmem:[%s7 + $0x90] sm:$0xff]
  %v340 = vld [vmem:[%s7 + $0x98] sm:$0xff]
  %v341 = vld [vmem:[%s7 + $0xa0] sm:$0xff]
  %v342 = vld [vmem:[%s7 + $0xa8] sm:$0xff]
  %v343 = vld [vmem:[%s7 + $0xb0] sm:$0xff]
  %v344 = vld [vmem:[%s7 + $0xb8] sm:$0xff]
  %v345 = vld [vmem:[%s7 + $0xc0] sm:$0xff]
  %v346 = vld [vmem:[%s7 + $0xc8] sm:$0xff]
  %v347 = vld [vmem:[%s7 + $0xd0] sm:$0xff]
  %v348 = vld [vmem:[%s7 + $0xd8] sm:$0xff]
  %v349 = vld [vmem:[%s7 + $0xe0] sm:$0xff]
  %v350 = vld [vmem:[%s7 + $0xe8] sm:$0xff]
  %v351 = vld [vmem:[%s7 + $0xf0] sm:$0xff]
  %v352 = vld [vmem:[%s7 + $0xf8] sm:$0xff]
  %v353 = vld [vmem:[%s8] sm:$0xff]
  %v354 = vld [vmem:[%s8 + $0x8] sm:$0xff]
  %v355 = vld [vmem:[%s8 + $0x10] sm:$0xff]
  %v356 = vld [vmem:[%s8 + $0x18] sm:$0xff]
  %357 = vmatprep.subr.mxu0 0.0
  %358 = vmatpush1.msra.mxu0 0.0
  %359 = vmatprep.subr.mxu0 0.0
  %360 = vmatpush1.msra.mxu0 0.0
  %361 = vmatprep.subr.mxu0 0.0
  %362 = vmatpush1.msra.mxu0 0.0
  %363 = vmatprep.subr.mxu0 0.0
  %364 = vmatpush1.msra.mxu0 0.0
  %365 = vmatprep.subr.mxu0 0.0
  %366 = vmatpush1.msra.mxu0 0.0
  %367 = vmatprep.subr.mxu0 0.0
  %368 = vmatpush1.msra.mxu0 0.0
  %369 = vmatprep.subr.mxu0 0.0
  %370 = vmatpush1.msra.mxu0 0.0
  %371 = vmatprep.subr.mxu0 0.0
  %372 = vmatpush1.msra.mxu0 0.0
  %373 = vmatprep.subr.mxu0 0.0
  %374 = vmatpush1.msra.mxu0 0.0
  %375 = vmatprep.subr.mxu0 0.0
  %376 = vmatpush1.msra.mxu0 0.0
  %377 = vmatprep.subr.mxu0 0.0
  %378 = vmatpush1.msra.mxu0 0.0
  %379 = vmatprep.subr.mxu0 0.0
  %380 = vmatpush1.msra.mxu0 0.0
  %381 = vmatprep.subr.mxu0 0.0
  %382 = vmatpush1.msra.mxu0 %v356
  %383 = vmatprep.subr.mxu0 0.0
  %384 = vmatpush1.msra.mxu0 %v355
  %385 = vmatprep.subr.mxu0 0.0
  %386 = vmatpush1.msra.mxu0 %v354
  %387 = vmatprep.subr.mxu0 0.0
  %388 = vmatpush1.msra.mxu0 %v353
  %389 = vmatprep.subr.mxu0 0.0
  %390 = vmatpush2.msra.mxu0 0.0
  %391 = vmatprep.subr.mxu0 0.0
  %392 = vmatpush2.msra.mxu0 0.0
  %393 = vmatprep.subr.mxu0 0.0
  %394 = vmatpush2.msra.mxu0 0.0
  %395 = vmatprep.subr.mxu0 0.0
  %396 = vmatpush2.msra.mxu0 0.0
  %397 = vmatprep.subr.mxu0 0.0
  %398 = vmatpush2.msra.mxu0 0.0
  %399 = vmatprep.subr.mxu0 0.0
  %400 = vmatpush2.msra.mxu0 0.0
  %401 = vmatprep.subr.mxu0 0.0
  %402 = vmatpush2.msra.mxu0 0.0
  %403 = vmatprep.subr.mxu0 0.0
  %404 = vmatpush2.msra.mxu0 0.0
  %405 = vmatprep.subr.mxu0 0.0
  %406 = vmatpush2.msra.mxu0 0.0
  %407 = vmatprep.subr.mxu0 0.0
  %408 = vmatpush2.msra.mxu0 0.0
  %409 = vmatprep.subr.mxu0 0.0
  %410 = vmatpush2.msra.mxu0 0.0
  %411 = vmatprep.subr.mxu0 0.0
  %412 = vmatpush2.msra.mxu0 0.0
  %413 = vmatprep.subr.mxu0 0.0
  %414 = vmatpush2.msra.mxu0 0.0
  %415 = vmatprep.subr.mxu0 0.0
  %416 = vmatpush2.msra.mxu0 0.0
  %417 = vmatprep.subr.mxu0 0.0
  %418 = vmatpush2.msra.mxu0 0.0
  %419 = vmatprep.subr.mxu0 0.0
  %420 = vmatpush2.msra.mxu0 0.0
  %421 = vmatprep.mubr.f32.mxu0 0.0
  %422 = vmatmul.mubr.f32.gmra.mxu0 %v88
  %v423 = vpop.f32.mrf.mxu0
  %v424 = vadd.f32 0.0, %v423
  %v425 = vpop.f32.mrf.mxu0
  %426 = vdwg.mxu0
  %428 = vrot.lane.b32.xlu0 %v424, 16
  %v429 = vpop.permute.xlu0 %428
  %431 = vrot.lane.b32.xlu0 %v424, 32
  %v432 = vpop.permute.xlu0 %431
  %434 = vrot.lane.b32.xlu0 %v424, 48
  %v435 = vpop.permute.xlu0 %434
  %v437 = vsel %vm170, %v424, %v429
  %v438 = vsel %vm86, %v437, %v432
  %v439 = vsel %vm173, %v438, %v435
  %440 = vmatprep.subr.mxu0 0.0
  %441 = vmatpush1.msra.mxu0 %v336
  %442 = vmatprep.subr.mxu0 0.0
  %443 = vmatpush1.msra.mxu0 %v335
  %444 = vmatprep.subr.mxu0 0.0
  %445 = vmatpush1.msra.mxu0 %v334
  %446 = vmatprep.subr.mxu0 0.0
  %447 = vmatpush1.msra.mxu0 %v333
  %448 = vmatprep.subr.mxu0 0.0
  %449 = vmatpush1.msra.mxu0 %v332
  %450 = vmatprep.subr.mxu0 0.0
  %451 = vmatpush1.msra.mxu0 %v331
  %452 = vmatprep.subr.mxu0 0.0
  %453 = vmatpush1.msra.mxu0 %v330
  %454 = vmatprep.subr.mxu0 0.0
  %455 = vmatpush1.msra.mxu0 %v329
  %456 = vmatprep.subr.mxu0 0.0
  %457 = vmatpush1.msra.mxu0 %v328
  %458 = vmatprep.subr.mxu0 0.0
  %459 = vmatpush1.msra.mxu0 %v327
  %460 = vmatprep.subr.mxu0 0.0
  %461 = vmatpush1.msra.mxu0 %v326
  %462 = vmatprep.subr.mxu0 0.0
  %463 = vmatpush1.msra.mxu0 %v325
  %464 = vmatprep.subr.mxu0 0.0
  %465 = vmatpush1.msra.mxu0 %v324
  %466 = vmatprep.subr.mxu0 0.0
  %467 = vmatpush1.msra.mxu0 %v323
  %468 = vmatprep.subr.mxu0 0.0
  %469 = vmatpush1.msra.mxu0 %v322
  %470 = vmatprep.subr.mxu0 0.0
  %471 = vmatpush1.msra.mxu0 %v321
  %472 = vmatprep.subr.mxu0 0.0
  %473 = vmatpush2.msra.mxu0 %v352
  %474 = vmatprep.subr.mxu0 0.0
  %475 = vmatpush2.msra.mxu0 %v351
  %476 = vmatprep.subr.mxu0 0.0
  %477 = vmatpush2.msra.mxu0 %v350
  %478 = vmatprep.subr.mxu0 0.0
  %479 = vmatpush2.msra.mxu0 %v349
  %480 = vmatprep.subr.mxu0 0.0
  %481 = vmatpush2.msra.mxu0 %v348
  %482 = vmatprep.subr.mxu0 0.0
  %483 = vmatpush2.msra.mxu0 %v347
  %484 = vmatprep.subr.mxu0 0.0
  %485 = vmatpush2.msra.mxu0 %v346
  %486 = vmatprep.subr.mxu0 0.0
  %487 = vmatpush2.msra.mxu0 %v345
  %488 = vmatprep.subr.mxu0 0.0
  %489 = vmatpush2.msra.mxu0 %v344
  %490 = vmatprep.subr.mxu0 0.0
  %491 = vmatpush2.msra.mxu0 %v343
  %492 = vmatprep.subr.mxu0 0.0
  %493 = vmatpush2.msra.mxu0 %v342
  %494 = vmatprep.subr.mxu0 0.0
  %495 = vmatpush2.msra.mxu0 %v341
  %496 = vmatprep.subr.mxu0 0.0
  %497 = vmatpush2.msra.mxu0 %v340
  %498 = vmatprep.subr.mxu0 0.0
  %499 = vmatpush2.msra.mxu0 %v339
  %500 = vmatprep.subr.mxu0 0.0
  %501 = vmatpush2.msra.mxu0 %v338
  %502 = vmatprep.subr.mxu0 0.0
  %503 = vmatpush2.msra.mxu0 %v337
  %504 = vmatprep.mubr.f32.mxu0 %v320
  %505 = vmatmul.mubr.f32.gmra.mxu0 %v319
  %v506 = vpop.f32.mrf.mxu0
  %v507 = vadd.f32 %v439, %v506
  %v508 = vpop.f32.mrf.mxu0
  %509 = vdwg.mxu0
  %v510 = vld [vmem:[%s9] sm:$0x1]
  %v512 = vlaneseq
  %v513 = vshrl.u32 %v512, 7
  %v514 = vsub.s32 0, %v513
  %v515 = vrot.slane %v510, %v514
  %v517 = vadd.f32 %v507, %v515
  %v518 = vmax.f32 %v517, 0.0
  %v519 = vld [vmem:[%s10] sm:$0x1]
  %v521 = vlaneseq
  %v522 = vshrl.u32 %v521, 7
  %v523 = vsub.s32 0, %v522
  %v524 = vrot.slane %v519, %v523
  %v526 = vmul.f32 %v518, %v524
  %v527 = vsel %vm170, %v526, 0.0
  %528 = vadd.xlane.f32.xlu0 %v527
  %v529 = vpop.xlane.xlu0 %528
  %531 = vrot.lane.b32.xlu0 %v526, 112
  %v532 = vpop.permute.xlu0 %531
  %v534 = vsel %vm170, %v532, 0.0
  %535 = vadd.xlane.f32.xlu0 %v534
  %v536 = vpop.xlane.xlu0 %535
  %537 = vrot.lane.b32.xlu0 %v526, 96
  %v538 = vpop.permute.xlu0 %537
  %v540 = vsel %vm170, %v538, 0.0
  %541 = vadd.xlane.f32.xlu0 %v540
  %v542 = vpop.xlane.xlu0 %541
  %543 = vrot.lane.b32.xlu0 %v526, 80
  %v544 = vpop.permute.xlu0 %543
  %v546 = vsel %vm170, %v544, 0.0
  %547 = vadd.xlane.f32.xlu0 %v546
  %v548 = vpop.xlane.xlu0 %547
  %v549 = vmax.f32 %v529, %v536
  %v550 = vmax.f32 %v549, %v542
  %v551 = vmax.f32 %v550, %v548
  %v552 = vsub.f32 %v529, %v551
  %v553 = vmul.f32 %v552, 1.442695
  %v554 = vpow.pop %v553
  %v555 = vsub.f32 %v536, %v551
  %v556 = vmul.f32 %v555, 1.442695
  %v557 = vpow.pop %v556
  %v558 = vsub.f32 %v542, %v551
  %v559 = vmul.f32 %v558, 1.442695
  %v560 = vpow.pop %v559
  %v561 = vsub.f32 %v548, %v551
  %v562 = vmul.f32 %v561, 1.442695
  %v563 = vpow.pop %v562
  %v564 = vadd.f32 %v554, %v557
  %v565 = vadd.f32 %v564, %v560
  %v566 = vadd.f32 %v565, %v563
  %v567 = vrcp.pop %v566
  %v568 = vmul.f32 %v554, %v319
  %v569 = vmul.f32 %v557, %v319
  %571 = vrot.lane.b32.xlu0 %v569, 64
  %v572 = vpop.permute.xlu0 %571
  %v574 = vadd.f32 %v568, %v572
  %v575 = vmul.f32 %v560, %v320
  %v576 = vadd.f32 %v574, %v575
  %v577 = vmul.f32 %v563, %v320
  %579 = vrot.lane.b32.xlu0 %v577, 64
  %v580 = vpop.permute.xlu0 %579
  %v582 = vadd.f32 %v576, %v580
  %v583 = vmul.f32 %v582, %v567
  %v584 = vld [vmem:[%s11] sm:$0xff]
  %v585 = vld [vmem:[%s11 + $0x8] sm:$0xff]
  %v586 = vld [vmem:[%s11 + $0x10] sm:$0xff]
  %v587 = vld [vmem:[%s11 + $0x18] sm:$0xff]
  %v588 = vld [vmem:[%s12] sm:$0x1]
  %v590 = vlaneseq
  %v591 = vshrl.u32 %v590, 7
  %v592 = vsub.s32 0, %v591
  %v593 = vrot.slane %v588, %v592
  %v596 = vsel %vm86, %v318, 0
  %v599 = vsel %vm86, %v583, 0
  %601 = vmatprep.subr.mxu0 0.0
  %602 = vmatpush1.msra.mxu0 0.0
  %603 = vmatprep.subr.mxu0 0.0
  %604 = vmatpush1.msra.mxu0 0.0
  %605 = vmatprep.subr.mxu0 0.0
  %606 = vmatpush1.msra.mxu0 0.0
  %607 = vmatprep.subr.mxu0 0.0
  %608 = vmatpush1.msra.mxu0 0.0
  %609 = vmatprep.subr.mxu0 0.0
  %610 = vmatpush1.msra.mxu0 0.0
  %611 = vmatprep.subr.mxu0 0.0
  %612 = vmatpush1.msra.mxu0 0.0
  %613 = vmatprep.subr.mxu0 0.0
  %614 = vmatpush1.msra.mxu0 0.0
  %615 = vmatprep.subr.mxu0 0.0
  %616 = vmatpush1.msra.mxu0 0.0
  %617 = vmatprep.subr.mxu0 0.0
  %618 = vmatpush1.msra.mxu0 0.0
  %619 = vmatprep.subr.mxu0 0.0
  %620 = vmatpush1.msra.mxu0 0.0
  %621 = vmatprep.subr.mxu0 0.0
  %622 = vmatpush1.msra.mxu0 0.0
  %623 = vmatprep.subr.mxu0 0.0
  %624 = vmatpush1.msra.mxu0 0.0
  %625 = vmatprep.subr.mxu0 0.0
  %626 = vmatpush1.msra.mxu0 %v587
  %627 = vmatprep.subr.mxu0 0.0
  %628 = vmatpush1.msra.mxu0 %v586
  %629 = vmatprep.subr.mxu0 0.0
  %630 = vmatpush1.msra.mxu0 %v585
  %631 = vmatprep.subr.mxu0 0.0
  %632 = vmatpush1.msra.mxu0 %v584
  %633 = vmatprep.subr.mxu0 0.0
  %634 = vmatpush2.msra.mxu0 0.0
  %635 = vmatprep.subr.mxu0 0.0
  %636 = vmatpush2.msra.mxu0 0.0
  %637 = vmatprep.subr.mxu0 0.0
  %638 = vmatpush2.msra.mxu0 0.0
  %639 = vmatprep.subr.mxu0 0.0
  %640 = vmatpush2.msra.mxu0 0.0
  %641 = vmatprep.subr.mxu0 0.0
  %642 = vmatpush2.msra.mxu0 0.0
  %643 = vmatprep.subr.mxu0 0.0
  %644 = vmatpush2.msra.mxu0 0.0
  %645 = vmatprep.subr.mxu0 0.0
  %646 = vmatpush2.msra.mxu0 0.0
  %647 = vmatprep.subr.mxu0 0.0
  %648 = vmatpush2.msra.mxu0 0.0
  %649 = vmatprep.subr.mxu0 0.0
  %650 = vmatpush2.msra.mxu0 0.0
  %651 = vmatprep.subr.mxu0 0.0
  %652 = vmatpush2.msra.mxu0 0.0
  %653 = vmatprep.subr.mxu0 0.0
  %654 = vmatpush2.msra.mxu0 0.0
  %655 = vmatprep.subr.mxu0 0.0
  %656 = vmatpush2.msra.mxu0 0.0
  %657 = vmatprep.subr.mxu0 0.0
  %658 = vmatpush2.msra.mxu0 0.0
  %659 = vmatprep.subr.mxu0 0.0
  %660 = vmatpush2.msra.mxu0 0.0
  %661 = vmatprep.subr.mxu0 0.0
  %662 = vmatpush2.msra.mxu0 0.0
  %663 = vmatprep.subr.mxu0 0.0
  %664 = vmatpush2.msra.mxu0 0.0
  %665 = vmatprep.mubr.f32.mxu0 0.0
  %666 = vmatmul.mubr.f32.gmra.mxu0 %v88
  %v667 = vpop.f32.mrf.mxu0
  %v668 = vadd.f32 %v593, %v667
  %v669 = vpop.f32.mrf.mxu0
  %670 = vmatprep.mubr.f32.mxu0 0.0
  %671 = vmatmul.mubr.f32.gmra.mxu0 %v596
  %v672 = vpop.f32.mrf.mxu0
  %v673 = vadd.f32 %v593, %v672
  %v674 = vpop.f32.mrf.mxu0
  %675 = vmatprep.mubr.f32.mxu0 0.0
  %676 = vmatmul.mubr.f32.gmra.mxu0 %v599
  %v677 = vpop.f32.mrf.mxu0
  %v678 = vadd.f32 %v593, %v677
  %v679 = vpop.f32.mrf.mxu0
  %680 = vdwg.mxu0
  %v681 = vmax.f32 %v668, 0.0
  %v682 = vmax.f32 %v673, 0.0
  %v683 = vmax.f32 %v678, 0.0
  %v684 = vld [vmem:[%s13] sm:$0x1]
  %v686 = vlaneseq
  %v687 = vshrl.u32 %v686, 7
  %v688 = vsub.s32 0, %v687
  %v689 = vrot.slane %v684, %v688
  %v691 = vmul.f32 %v681, %v689
  %v692 = vmul.f32 %v682, %v689
  %v693 = vmul.f32 %v683, %v689
  %v694 = vsel %vm170, %v691, 0.0
  %695 = vadd.xlane.f32.xlu0 %v694
  %v696 = vpop.xlane.xlu0 %695
  %v697 = vsel %vm170, %v692, 0.0
  %698 = vadd.xlane.f32.xlu0 %v697
  %v699 = vpop.xlane.xlu0 %698
  %v700 = vsel %vm170, %v693, 0.0
  %701 = vadd.xlane.f32.xlu0 %v700
  %v702 = vpop.xlane.xlu0 %701
  %v703 = vmax.f32 %v696, %v699
  %v704 = vmax.f32 %v703, %v702
  %v705 = vsub.f32 %v696, %v704
  %v706 = vmul.f32 %v705, 1.442695
  %v707 = vpow.pop %v706
  %v708 = vsub.f32 %v699, %v704
  %v709 = vmul.f32 %v708, 1.442695
  %v710 = vpow.pop %v709
  %v711 = vsub.f32 %v702, %v704
  %v712 = vmul.f32 %v711, 1.442695
  %v713 = vpow.pop %v712
  %v714 = vadd.f32 %v707, %v710
  %v715 = vadd.f32 %v714, %v713
  %v716 = vrcp.pop %v715
  %v717 = vmul.f32 %v707, %v47
  %v718 = vmul.f32 %v710, %v318
  %v719 = vadd.f32 %v717, %v718
  %v720 = vmul.f32 %v713, %v583
  %v721 = vadd.f32 %v719, %v720
  %v722 = vmul.f32 %v721, %v716
  %v723 = vmul.f32 %v722, %v722
  %v724 = vsel %vm86, %v723, 0.0
  %725 = vadd.xlane.f32.xlu0 %v724
  %v726 = vpop.xlane.xlu0 %725
  %v727 = vrsqrt.pop %v726
  %v728 = vmul.f32 %v726, %v727
  %vm729 = vcmp.eq.f32.partialorder %v726, inf
  %v730 = vsel %vm729, %v726, %v728
  %vm731 = vcmp.eq.f32.partialorder %v726, 0.0
  %v732 = vand.u32 %v726, 2147483648
  %v733 = vsel %vm731, %v732, %v730
  %v734 = vmax.f32 %v733, 1e-12
  %v735 = vrcp.pop %v734
  %v736 = vmul.f32 %v722, %v735
  %738 = vrot.lane.b32.xlu0 %v736, 32
  %v739 = vpop.permute.xlu0 %738
  %v741 = vsel %vm86, %v47, %v739
  %vm742 = vcmask 523264
  %743 = vst.msk [vmem:[%s14] sm:$0xff] %vm742, %v741
  // Predicated region
  $region58: #{taggcn_forward.4} parent=0 // pred_check
    _
  $region59: #{taggcn_forward.4} parent=0 // pred_check_branch
    %745 = sbr.rel (0) target = $region61
  $region60: #{taggcn_forward.4} parent=0 // pred_region
    _
  $region61: #{taggcn_forward.4} parent=0 // pred_fallthru
    _
  // Predicated region
  $region62: #{taggcn_forward.4} parent=0 // pred_check
    _
  $region63: #{taggcn_forward.4} parent=0 // pred_check_branch
    %747 = sbr.rel (0) target = $region65
  $region64: #{taggcn_forward.4} parent=0 // pred_region
    _
  $region65: #{taggcn_forward.4} parent=0 // pred_fallthru
    _

// kernel: taggcn_forward.5
$region0: #{taggcn_forward.5}
  #allocation0 [shape = 'u32[]', space=smem, size = 0x4, offset = 0x4, fixed_abs, tag = 'smem constant byte address 0x4 - core index']
  #allocation1 [shape = 'u32[144,128]{1,0:T(1,128)}', space=vmem, size = 0x12000, scoped, tag = 'internal scratch']
  %s0 = inlined_call_operand.vmem [shape: f32[16,32], index: 0, kind: input, shape index: {}]
  %s1 = inlined_call_operand.vmem [shape: f32[16,256], index: 1, kind: input, shape index: {}]
  %s2 = inlined_call_operand.vmem [shape: f32[16,256], index: 2, kind: input, shape index: {}]
  %s3 = inlined_call_operand.vmem [shape: f32[256,64], index: 3, kind: input, shape index: {}]
  %s4 = inlined_call_operand.vmem [shape: f32[32,16], index: 4, kind: input, shape index: {}]
  %s5 = inlined_call_operand.vmem [shape: f32[1,64], index: 5, kind: input, shape index: {}]
  %s6 = inlined_call_operand.vmem [shape: f32[1,64], index: 6, kind: input, shape index: {}]
  %s7 = inlined_call_operand.vmem [shape: f32[256,64], index: 7, kind: input, shape index: {}]
  %s8 = inlined_call_operand.vmem [shape: f32[32,16], index: 8, kind: input, shape index: {}]
  %s9 = inlined_call_operand.vmem [shape: f32[1,64], index: 9, kind: input, shape index: {}]
  %s10 = inlined_call_operand.vmem [shape: f32[1,64], index: 10, kind: input, shape index: {}]
  %s11 = inlined_call_operand.vmem [shape: f32[32,16], index: 11, kind: input, shape index: {}]
  %s12 = inlined_call_operand.vmem [shape: f32[1,16], index: 12, kind: input, shape index: {}]
  %s13 = inlined_call_operand.vmem [shape: f32[1,16], index: 13, kind: input, shape index: {}]
  %s14 = inlined_call_operand.vmem [shape: f32[16,64], index: 14, kind: output, shape index: {}]
  %s15 = sld [smem:[#allocation0]]
  $region89: #{taggcn_forward.5} parent=0
    _
  %s17 = ssub.s32 1, %s15
  %s18 = scalar_select 0, %s17, %s15
  loop: start=0, step=1, limit=4
  $region2: #{taggcn_forward.5} parent=0 // loop_pre_header
    _
  $region3: #{taggcn_forward.5} parent=0 // loop_header
    %s20 = sphi 0, %s24
    %p21 = scmp.ge.s32.totalorder %s20, 4
    %s30 = sphi 0, %s32
    %s33 = sphi 0, %s30
    %s34 = sphi 0, %s33
    %s50 = sphi 0, %s34
    %s56 = sphi 0, %s58
    %s59 = sphi 0, %s56
    %s60 = sphi 0, %s59
    %s76 = sphi 0, %s60
    %s82 = sphi 0, %s84
    %s85 = sphi 0, %s82
    %s86 = sphi 0, %s85
    %s102 = sphi 0, %s86
    %s106 = sphi 0, %s106
    %s108 = sphi 0, %s106
    %s109 = sphi 0, %s108
    %s123 = sphi 0, %s109
    %s127 = sphi 0, %s127
    %s129 = sphi 0, %s127
    %s130 = sphi 0, %s129
    %s144 = sphi 0, %s130
    %s148 = sphi 0, %s148
    %s150 = sphi 0, %s148
    %s151 = sphi 0, %s150
    %s165 = sphi 0, %s151
    %s169 = sphi 0, %s169
    %s171 = sphi 0, %s169
    %s172 = sphi 0, %s171
    %s186 = sphi 0, %s172
    %s190 = sphi 0, %s190
    %s192 = sphi 0, %s190
    %s193 = sphi 0, %s192
    %s207 = sphi 0, %s193
    %s211 = sphi 0, %s211
    %s213 = sphi 0, %s211
    %s214 = sphi 0, %s213
    %s228 = sphi 0, %s214
    %s232 = sphi 0, %s232
    %s234 = sphi 0, %s232
    %s235 = sphi 0, %s234
    %s249 = sphi 0, %s235
    %s253 = sphi 0, %s253
    %s255 = sphi 0, %s253
    %s256 = sphi 0, %s255
    %s270 = sphi 0, %s256
    %s274 = sphi 0, %s274
    %s276 = sphi 0, %s274
    %s277 = sphi 0, %s276
    %s291 = sphi 0, %s277
    %s295 = sphi 0, %s295
    %s297 = sphi 0, %s295
    %s298 = sphi 0, %s297
    %s312 = sphi 0, %s298
    %s316 = sphi 0, %s316
    %s318 = sphi 0, %s316
    %s319 = sphi 0, %s318
    %s333 = sphi 0, %s319
    %s339 = sphi 0, %s341
    %s342 = sphi 0, %s339
    %s343 = sphi 0, %s342
    %s359 = sphi 0, %s343
  $region4: #{taggcn_forward.5} parent=0 // loop_header_branch
    %23 = sbr.rel (%p21) target = $region8
  $region5: #{taggcn_forward.5} parent=0 // loop_body
    %s25 = ssub.s32 %s20, 1
    %s26 = ssub.s32 %s20, 2
    %s27 = sadd.s32 %s20, 1
    %s28 = ssub.s32 %s20, %s27
    %p29 = scmp.eq.s32.totalorder %s28, 0
    %s31 = sadd.s32 %s30, 1
    %s32 = scalar_select %p29, %s30, %s31
    %p35 = pneg %p29
    %p36 = scmp.eq.s32.totalorder %s20, 1
    %p37 = por %p35, %p36
    %p38 = scmp.ne.s32.totalorder %s30, %s33
    %p39 = scmp.eq.s32.totalorder %s20, 0
    %p40 = por %p38, %p39
    %p41 = scmp.ne.s32.totalorder %s30, %s33
    %p42 = scmp.eq.s32.totalorder %s25, 1
    %p43 = por %p41, %p42
    %p44 = scmp.ne.s32.totalorder %s33, %s34
    %p45 = scmp.eq.s32.totalorder %s25, 0
    %p46 = por %p44, %p45
    %p47 = scmp.ne.s32.totalorder %s33, %s34
    %p48 = scmp.eq.s32.totalorder %s26, 1
    %p49 = por %p47, %p48
    %p51 = scmp.ne.s32.totalorder %s34, %s50
    %p52 = scmp.eq.s32.totalorder %s26, 0
    %p53 = por %p51, %p52
    %s54 = ssub.s32 %s20, %s27
    %p55 = scmp.eq.s32.totalorder %s54, 0
    %s57 = sadd.s32 %s56, 1
    %s58 = scalar_select %p55, %s56, %s57
    %p61 = pneg %p55
    %p62 = scmp.eq.s32.totalorder %s20, 1
    %p63 = por %p61, %p62
    %p64 = scmp.ne.s32.totalorder %s56, %s59
    %p65 = scmp.eq.s32.totalorder %s20, 0
    %p66 = por %p64, %p65
    %p67 = scmp.ne.s32.totalorder %s56, %s59
    %p68 = scmp.eq.s32.totalorder %s25, 1
    %p69 = por %p67, %p68
    %p70 = scmp.ne.s32.totalorder %s59, %s60
    %p71 = scmp.eq.s32.totalorder %s25, 0
    %p72 = por %p70, %p71
    %p73 = scmp.ne.s32.totalorder %s59, %s60
    %p74 = scmp.eq.s32.totalorder %s26, 1
    %p75 = por %p73, %p74
    %p77 = scmp.ne.s32.totalorder %s60, %s76
    %p78 = scmp.eq.s32.totalorder %s26, 0
    %p79 = por %p77, %p78
    %s80 = ssub.s32 %s20, %s27
    %p81 = scmp.eq.s32.totalorder %s80, 0
    %s83 = sadd.s32 %s82, 1
    %s84 = scalar_select %p81, %s82, %s83
    %p87 = pneg %p81
    %p88 = scmp.eq.s32.totalorder %s20, 1
    %p89 = por %p87, %p88
    %p90 = scmp.ne.s32.totalorder %s82, %s85
    %p91 = scmp.eq.s32.totalorder %s20, 0
    %p92 = por %p90, %p91
    %p93 = scmp.ne.s32.totalorder %s82, %s85
    %p94 = scmp.eq.s32.totalorder %s25, 1
    %p95 = por %p93, %p94
    %p96 = scmp.ne.s32.totalorder %s85, %s86
    %p97 = scmp.eq.s32.totalorder %s25, 0
    %p98 = por %p96, %p97
    %p99 = scmp.ne.s32.totalorder %s85, %s86
    %p100 = scmp.eq.s32.totalorder %s26, 1
    %p101 = por %p99, %p100
    %p103 = scmp.ne.s32.totalorder %s86, %s102
    %p104 = scmp.eq.s32.totalorder %s26, 0
    %p105 = por %p103, %p104
    %s107 = sadd.s32 %s106, 1
    %p110 = scmp.eq.s32.totalorder %s20, 1
    %p111 = scmp.ne.s32.totalorder %s106, %s108
    %p112 = scmp.eq.s32.totalorder %s20, 0
    %p113 = por %p111, %p112
    %p114 = scmp.ne.s32.totalorder %s106, %s108
    %p115 = scmp.eq.s32.totalorder %s25, 1
    %p116 = por %p114, %p115
    %p117 = scmp.ne.s32.totalorder %s108, %s109
    %p118 = scmp.eq.s32.totalorder %s25, 0
    %p119 = por %p117, %p118
    %p120 = scmp.ne.s32.totalorder %s108, %s109
    %p121 = scmp.eq.s32.totalorder %s26, 1
    %p122 = por %p120, %p121
    %p124 = scmp.ne.s32.totalorder %s109, %s123
    %p125 = scmp.eq.s32.totalorder %s26, 0
    %p126 = por %p124, %p125
    %s128 = sadd.s32 %s127, 1
    %p131 = scmp.eq.s32.totalorder %s20, 1
    %p132 = scmp.ne.s32.totalorder %s127, %s129
    %p133 = scmp.eq.s32.totalorder %s20, 0
    %p134 = por %p132, %p133
    %p135 = scmp.ne.s32.totalorder %s127, %s129
    %p136 = scmp.eq.s32.totalorder %s25, 1
    %p137 = por %p135, %p136
    %p138 = scmp.ne.s32.totalorder %s129, %s130
    %p139 = scmp.eq.s32.totalorder %s25, 0
    %p140 = por %p138, %p139
    %p141 = scmp.ne.s32.totalorder %s129, %s130
    %p142 = scmp.eq.s32.totalorder %s26, 1
    %p143 = por %p141, %p142
    %p145 = scmp.ne.s32.totalorder %s130, %s144
    %p146 = scmp.eq.s32.totalorder %s26, 0
    %p147 = por %p145, %p146
    %s149 = sadd.s32 %s148, 1
    %p152 = scmp.eq.s32.totalorder %s20, 1
    %p153 = scmp.ne.s32.totalorder %s148, %s150
    %p154 = scmp.eq.s32.totalorder %s20, 0
    %p155 = por %p153, %p154
    %p156 = scmp.ne.s32.totalorder %s148, %s150
    %p157 = scmp.eq.s32.totalorder %s25, 1
    %p158 = por %p156, %p157
    %p159 = scmp.ne.s32.totalorder %s150, %s151
    %p160 = scmp.eq.s32.totalorder %s25, 0
    %p161 = por %p159, %p160
    %p162 = scmp.ne.s32.totalorder %s150, %s151
    %p163 = scmp.eq.s32.totalorder %s26, 1
    %p164 = por %p162, %p163
    %p166 = scmp.ne.s32.totalorder %s151, %s165
    %p167 = scmp.eq.s32.totalorder %s26, 0
    %p168 = por %p166, %p167
    %s170 = sadd.s32 %s169, 1
    %p173 = scmp.eq.s32.totalorder %s20, 1
    %p174 = scmp.ne.s32.totalorder %s169, %s171
    %p175 = scmp.eq.s32.totalorder %s20, 0
    %p176 = por %p174, %p175
    %p177 = scmp.ne.s32.totalorder %s169, %s171
    %p178 = scmp.eq.s32.totalorder %s25, 1
    %p179 = por %p177, %p178
    %p180 = scmp.ne.s32.totalorder %s171, %s172
    %p181 = scmp.eq.s32.totalorder %s25, 0
    %p182 = por %p180, %p181
    %p183 = scmp.ne.s32.totalorder %s171, %s172
    %p184 = scmp.eq.s32.totalorder %s26, 1
    %p185 = por %p183, %p184
    %p187 = scmp.ne.s32.totalorder %s172, %s186
    %p188 = scmp.eq.s32.totalorder %s26, 0
    %p189 = por %p187, %p188
    %s191 = sadd.s32 %s190, 1
    %p194 = scmp.eq.s32.totalorder %s20, 1
    %p195 = scmp.ne.s32.totalorder %s190, %s192
    %p196 = scmp.eq.s32.totalorder %s20, 0
    %p197 = por %p195, %p196
    %p198 = scmp.ne.s32.totalorder %s190, %s192
    %p199 = scmp.eq.s32.totalorder %s25, 1
    %p200 = por %p198, %p199
    %p201 = scmp.ne.s32.totalorder %s192, %s193
    %p202 = scmp.eq.s32.totalorder %s25, 0
    %p203 = por %p201, %p202
    %p204 = scmp.ne.s32.totalorder %s192, %s193
    %p205 = scmp.eq.s32.totalorder %s26, 1
    %p206 = por %p204, %p205
    %p208 = scmp.ne.s32.totalorder %s193, %s207
    %p209 = scmp.eq.s32.totalorder %s26, 0
    %p210 = por %p208, %p209
    %s212 = sadd.s32 %s211, 1
    %p215 = scmp.eq.s32.totalorder %s20, 1
    %p216 = scmp.ne.s32.totalorder %s211, %s213
    %p217 = scmp.eq.s32.totalorder %s20, 0
    %p218 = por %p216, %p217
    %p219 = scmp.ne.s32.totalorder %s211, %s213
    %p220 = scmp.eq.s32.totalorder %s25, 1
    %p221 = por %p219, %p220
    %p222 = scmp.ne.s32.totalorder %s213, %s214
    %p223 = scmp.eq.s32.totalorder %s25, 0
    %p224 = por %p222, %p223
    %p225 = scmp.ne.s32.totalorder %s213, %s214
    %p226 = scmp.eq.s32.totalorder %s26, 1
    %p227 = por %p225, %p226
    %p229 = scmp.ne.s32.totalorder %s214, %s228
    %p230 = scmp.eq.s32.totalorder %s26, 0
    %p231 = por %p229, %p230
    %s233 = sadd.s32 %s232, 1
    %p236 = scmp.eq.s32.totalorder %s20, 1
    %p237 = scmp.ne.s32.totalorder %s232, %s234
    %p238 = scmp.eq.s32.totalorder %s20, 0
    %p239 = por %p237, %p238
    %p240 = scmp.ne.s32.totalorder %s232, %s234
    %p241 = scmp.eq.s32.totalorder %s25, 1
    %p242 = por %p240, %p241
    %p243 = scmp.ne.s32.totalorder %s234, %s235
    %p244 = scmp.eq.s32.totalorder %s25, 0
    %p245 = por %p243, %p244
    %p246 = scmp.ne.s32.totalorder %s234, %s235
    %p247 = scmp.eq.s32.totalorder %s26, 1
    %p248 = por %p246, %p247
    %p250 = scmp.ne.s32.totalorder %s235, %s249
    %p251 = scmp.eq.s32.totalorder %s26, 0
    %p252 = por %p250, %p251
    %s254 = sadd.s32 %s253, 1
    %p257 = scmp.eq.s32.totalorder %s20, 1
    %p258 = scmp.ne.s32.totalorder %s253, %s255
    %p259 = scmp.eq.s32.totalorder %s20, 0
    %p260 = por %p258, %p259
    %p261 = scmp.ne.s32.totalorder %s253, %s255
    %p262 = scmp.eq.s32.totalorder %s25, 1
    %p263 = por %p261, %p262
    %p264 = scmp.ne.s32.totalorder %s255, %s256
    %p265 = scmp.eq.s32.totalorder %s25, 0
    %p266 = por %p264, %p265
    %p267 = scmp.ne.s32.totalorder %s255, %s256
    %p268 = scmp.eq.s32.totalorder %s26, 1
    %p269 = por %p267, %p268
    %p271 = scmp.ne.s32.totalorder %s256, %s270
    %p272 = scmp.eq.s32.totalorder %s26, 0
    %p273 = por %p271, %p272
    %s275 = sadd.s32 %s274, 1
    %p278 = scmp.eq.s32.totalorder %s20, 1
    %p279 = scmp.ne.s32.totalorder %s274, %s276
    %p280 = scmp.eq.s32.totalorder %s20, 0
    %p281 = por %p279, %p280
    %p282 = scmp.ne.s32.totalorder %s274, %s276
    %p283 = scmp.eq.s32.totalorder %s25, 1
    %p284 = por %p282, %p283
    %p285 = scmp.ne.s32.totalorder %s276, %s277
    %p286 = scmp.eq.s32.totalorder %s25, 0
    %p287 = por %p285, %p286
    %p288 = scmp.ne.s32.totalorder %s276, %s277
    %p289 = scmp.eq.s32.totalorder %s26, 1
    %p290 = por %p288, %p289
    %p292 = scmp.ne.s32.totalorder %s277, %s291
    %p293 = scmp.eq.s32.totalorder %s26, 0
    %p294 = por %p292, %p293
    %s296 = sadd.s32 %s295, 1
    %p299 = scmp.eq.s32.totalorder %s20, 1
    %p300 = scmp.ne.s32.totalorder %s295, %s297
    %p301 = scmp.eq.s32.totalorder %s20, 0
    %p302 = por %p300, %p301
    %p303 = scmp.ne.s32.totalorder %s295, %s297
    %p304 = scmp.eq.s32.totalorder %s25, 1
    %p305 = por %p303, %p304
    %p306 = scmp.ne.s32.totalorder %s297, %s298
    %p307 = scmp.eq.s32.totalorder %s25, 0
    %p308 = por %p306, %p307
    %p309 = scmp.ne.s32.totalorder %s297, %s298
    %p310 = scmp.eq.s32.totalorder %s26, 1
    %p311 = por %p309, %p310
    %p313 = scmp.ne.s32.totalorder %s298, %s312
    %p314 = scmp.eq.s32.totalorder %s26, 0
    %p315 = por %p313, %p314
    %s317 = sadd.s32 %s316, 1
    %p320 = scmp.eq.s32.totalorder %s20, 1
    %p321 = scmp.ne.s32.totalorder %s316, %s318
    %p322 = scmp.eq.s32.totalorder %s20, 0
    %p323 = por %p321, %p322
    %p324 = scmp.ne.s32.totalorder %s316, %s318
    %p325 = scmp.eq.s32.totalorder %s25, 1
    %p326 = por %p324, %p325
    %p327 = scmp.ne.s32.totalorder %s318, %s319
    %p328 = scmp.eq.s32.totalorder %s25, 0
    %p329 = por %p327, %p328
    %p330 = scmp.ne.s32.totalorder %s318, %s319
    %p331 = scmp.eq.s32.totalorder %s26, 1
    %p332 = por %p330, %p331
    %p334 = scmp.ne.s32.totalorder %s319, %s333
    %p335 = scmp.eq.s32.totalorder %s26, 0
    %p336 = por %p334, %p335
    %s337 = ssub.s32 %s20, %s27
    %p338 = scmp.eq.s32.totalorder %s337, 0
    %s340 = sadd.s32 %s339, 1
    %s341 = scalar_select %p338, %s339, %s340
    %p344 = pneg %p338
    %p345 = scmp.eq.s32.totalorder %s20, 1
    %p346 = por %p344, %p345
    %p347 = scmp.ne.s32.totalorder %s339, %s342
    %p348 = scmp.eq.s32.totalorder %s20, 0
    %p349 = por %p347, %p348
    %p350 = scmp.ne.s32.totalorder %s339, %s342
    %p351 = scmp.eq.s32.totalorder %s25, 1
    %p352 = por %p350, %p351
    %p353 = scmp.ne.s32.totalorder %s342, %s343
    %p354 = scmp.eq.s32.totalorder %s25, 0
    %p355 = por %p353, %p354
    %p356 = scmp.ne.s32.totalorder %s342, %s343
    %p357 = scmp.eq.s32.totalorder %s26, 1
    %p358 = por %p356, %p357
    %p360 = scmp.ne.s32.totalorder %s343, %s359
    %p361 = scmp.eq.s32.totalorder %s26, 0
    %p362 = por %p360, %p361
    %p363 = scmp.le.s32.totalorder 1, %s20
    %p364 = scmp.lt.s32.totalorder %s20, 3
    %p365 = pnand %p363, %p364
    %p366 = pneg %p365
    // Predicated region
    $region9: #{taggcn_forward.5} parent=5 // pred_check
      _
    $region10: #{taggcn_forward.5} parent=5 // pred_check_branch
      %368 = sbr.rel (%p365) target = $region12
    $region11: #{taggcn_forward.5} parent=5 // pred_region
      %s369 = ssub.s32 %s20, 1
      // Predicated region
      $region13: #{taggcn_forward.5} parent=11 // pred_check
        %p370 = pneg %p119
      $region14: #{taggcn_forward.5} parent=11 // pred_check_branch
        %372 = sbr.rel (%p370) target = $region16
      $region15: #{taggcn_forward.5} parent=11 // pred_region
        _
      $region16: #{taggcn_forward.5} parent=11 // pred_fallthru
        _
      // Predicated region
      $region17: #{taggcn_forward.5} parent=11 // pred_check
        %p373 = pneg %p140
      $region18: #{taggcn_forward.5} parent=11 // pred_check_branch
        %375 = sbr.rel (%p373) target = $region20
      $region19: #{taggcn_forward.5} parent=11 // pred_region
        _
      $region20: #{taggcn_forward.5} parent=11 // pred_fallthru
        _
      // Predicated region
      $region21: #{taggcn_forward.5} parent=11 // pred_check
        %p376 = pneg %p161
      $region22: #{taggcn_forward.5} parent=11 // pred_check_branch
        %378 = sbr.rel (%p376) target = $region24
      $region23: #{taggcn_forward.5} parent=11 // pred_region
        _
      $region24: #{taggcn_forward.5} parent=11 // pred_fallthru
        _
      // Predicated region
      $region25: #{taggcn_forward.5} parent=11 // pred_check
        %p379 = pneg %p182
      $region26: #{taggcn_forward.5} parent=11 // pred_check_branch
        %381 = sbr.rel (%p379) target = $region28
      $region27: #{taggcn_forward.5} parent=11 // pred_region
        _
      $region28: #{taggcn_forward.5} parent=11 // pred_fallthru
        _
      // Predicated region
      $region29: #{taggcn_forward.5} parent=11 // pred_check
        %p382 = pneg %p203
      $region30: #{taggcn_forward.5} parent=11 // pred_check_branch
        %384 = sbr.rel (%p382) target = $region32
      $region31: #{taggcn_forward.5} parent=11 // pred_region
        _
      $region32: #{taggcn_forward.5} parent=11 // pred_fallthru
        _
      // Predicated region
      $region33: #{taggcn_forward.5} parent=11 // pred_check
        %p385 = pneg %p224
      $region34: #{taggcn_forward.5} parent=11 // pred_check_branch
        %387 = sbr.rel (%p385) target = $region36
      $region35: #{taggcn_forward.5} parent=11 // pred_region
        _
      $region36: #{taggcn_forward.5} parent=11 // pred_fallthru
        _
      // Predicated region
      $region37: #{taggcn_forward.5} parent=11 // pred_check
        %p388 = pneg %p245
      $region38: #{taggcn_forward.5} parent=11 // pred_check_branch
        %390 = sbr.rel (%p388) target = $region40
      $region39: #{taggcn_forward.5} parent=11 // pred_region
        _
      $region40: #{taggcn_forward.5} parent=11 // pred_fallthru
        _
      // Predicated region
      $region41: #{taggcn_forward.5} parent=11 // pred_check
        %p391 = pneg %p266
      $region42: #{taggcn_forward.5} parent=11 // pred_check_branch
        %393 = sbr.rel (%p391) target = $region44
      $region43: #{taggcn_forward.5} parent=11 // pred_region
        _
      $region44: #{taggcn_forward.5} parent=11 // pred_fallthru
        _
      // Predicated region
      $region45: #{taggcn_forward.5} parent=11 // pred_check
        %p394 = pneg %p287
      $region46: #{taggcn_forward.5} parent=11 // pred_check_branch
        %396 = sbr.rel (%p394) target = $region48
      $region47: #{taggcn_forward.5} parent=11 // pred_region
        _
      $region48: #{taggcn_forward.5} parent=11 // pred_fallthru
        _
      // Predicated region
      $region49: #{taggcn_forward.5} parent=11 // pred_check
        %p397 = pneg %p308
      $region50: #{taggcn_forward.5} parent=11 // pred_check_branch
        %399 = sbr.rel (%p397) target = $region52
      $region51: #{taggcn_forward.5} parent=11 // pred_region
        _
      $region52: #{taggcn_forward.5} parent=11 // pred_fallthru
        _
      // Predicated region
      $region53: #{taggcn_forward.5} parent=11 // pred_check
        %p400 = pneg %p329
      $region54: #{taggcn_forward.5} parent=11 // pred_check_branch
        %402 = sbr.rel (%p400) target = $region56
      $region55: #{taggcn_forward.5} parent=11 // pred_region
        _
      $region56: #{taggcn_forward.5} parent=11 // pred_fallthru
        _
    $region12: #{taggcn_forward.5} parent=5 // pred_fallthru
      _
    %p403 = scmp.lt.s32.totalorder %s20, 2
    // Predicated region
    $region57: #{taggcn_forward.5} parent=5 // pred_check
      %p404 = pneg %p403
    $region58: #{taggcn_forward.5} parent=5 // pred_check_branch
      %406 = sbr.rel (%p404) target = $region60
    $region59: #{taggcn_forward.5} parent=5 // pred_region
      // Predicated region
      $region61: #{taggcn_forward.5} parent=59 // pred_check
        %p407 = pneg %p40
      $region62: #{taggcn_forward.5} parent=59 // pred_check_branch
        %409 = sbr.rel (%p407) target = $region64
      $region63: #{taggcn_forward.5} parent=59 // pred_region
        %p410 = scmp.lt.s32.totalorder %s20, 1
        %s411 = scalar_select %p410, %s20, 1
        %s412 = smul.addr %s411, 8
        %s413 = scalar_lea.vmem %s0, %s412
      $region64: #{taggcn_forward.5} parent=59 // pred_fallthru
        _
      // Predicated region
      $region65: #{taggcn_forward.5} parent=59 // pred_check
        %p414 = pneg %p66
      $region66: #{taggcn_forward.5} parent=59 // pred_check_branch
        %416 = sbr.rel (%p414) target = $region68
      $region67: #{taggcn_forward.5} parent=59 // pred_region
        %p417 = scmp.lt.s32.totalorder %s20, 1
        %s418 = scalar_select %p417, %s20, 1
        %s419 = smul.addr %s418, 2
        %s420 = smul.addr %s419, 8
        %s421 = scalar_lea.vmem %s1, %s420
      $region68: #{taggcn_forward.5} parent=59 // pred_fallthru
        _
      // Predicated region
      $region69: #{taggcn_forward.5} parent=59 // pred_check
        %p422 = pneg %p92
      $region70: #{taggcn_forward.5} parent=59 // pred_check_branch
        %424 = sbr.rel (%p422) target = $region72
      $region71: #{taggcn_forward.5} parent=59 // pred_region
        %p425 = scmp.lt.s32.totalorder %s20, 1
        %s426 = scalar_select %p425, %s20, 1
        %s427 = smul.addr %s426, 2
        %s428 = smul.addr %s427, 8
        %s429 = scalar_lea.vmem %s2, %s428
      $region72: #{taggcn_forward.5} parent=59 // pred_fallthru
        _
    $region60: #{taggcn_forward.5} parent=5 // pred_fallthru
      _
    %p430 = scmp.le.s32.totalorder 1, %s20
    %p431 = scmp.lt.s32.totalorder %s20, 3
    %p432 = pnand %p430, %p431
    %p433 = pneg %p432
    // Predicated region
    $region73: #{taggcn_forward.5} parent=5 // pred_check
      _
    $region74: #{taggcn_forward.5} parent=5 // pred_check_branch
      %435 = sbr.rel (%p432) target = $region76
    $region75: #{taggcn_forward.5} parent=5 // pred_region
      %s436 = ssub.s32 %s20, 1
      %p437 = scmp.lt.s32.totalorder %s25, 1
      %s438 = scalar_select %p437, %s25, 1
      %s439 = smul.addr %s438, 8
      %s440 = scalar_lea.vmem %s0, %s439
      %p441 = pneg %p46
      %p442 = pneg %p43
      %p443 = scmp.lt.s32.totalorder %s25, 1
      %s444 = scalar_select %p443, %s25, 1
      %s445 = smul.addr %s444, 2
      %s446 = smul.addr %s445, 8
      %s447 = scalar_lea.vmem %s1, %s446
      %p448 = pneg %p72
      %p449 = pneg %p69
      %p450 = scmp.lt.s32.totalorder %s25, 1
      %s451 = scalar_select %p450, %s25, 1
      %s452 = smul.addr %s451, 2
      %s453 = smul.addr %s452, 8
      %s454 = scalar_lea.vmem %s2, %s453
      %p455 = pneg %p98
      %p456 = pneg %p95
      %p457 = pneg %p119
      %p458 = pneg %p116
      %p459 = pneg %p140
      %p460 = pneg %p137
      %p461 = pneg %p161
      %p462 = pneg %p158
      %p463 = pneg %p182
      %p464 = pneg %p179
      %p465 = pneg %p203
      %p466 = pneg %p200
      %p467 = pneg %p224
      %p468 = pneg %p221
      %p469 = pneg %p245
      %p470 = pneg %p242
      %p471 = pneg %p266
      %p472 = pneg %p263
      %p473 = pneg %p287
      %p474 = pneg %p284
      %p475 = pneg %p308
      %p476 = pneg %p305
      %p477 = pneg %p329
      %p478 = pneg %p326
      %p479 = pneg %p355
      %p480 = pneg %p352
      %p481 = scmp.lt.s32.totalorder %s25, 1
      %s482 = scalar_select %p481, %s25, 1
      %s483 = smul.addr %s482, 8
      %s484 = scalar_lea.vmem %s14, %s483
      %p485 = scmp.lt.s32.totalorder %s25, 1
      %s486 = scalar_select %p485, %s25, 1
      %s487 = smul.addr %s486, 8
      %s488 = scalar_lea.vmem %s0, %s487
      %p489 = scmp.lt.s32.totalorder %s25, 1
      %s490 = scalar_select %p489, %s25, 1
      %s491 = smul.addr %s490, 2
      %s492 = smul.addr %s491, 8
      %s493 = scalar_lea.vmem %s1, %s492
      %p494 = scmp.lt.s32.totalorder %s25, 1
      %s495 = scalar_select %p494, %s25, 1
      %s496 = smul.addr %s495, 2
      %s497 = smul.addr %s496, 8
      %s498 = scalar_lea.vmem %s2, %s497
      %p499 = scmp.lt.s32.totalorder %s25, 1
      %s500 = scalar_select %p499, %s25, 1
      %s501 = smul.addr %s500, 8
      %s502 = scalar_lea.vmem %s14, %s501
      %v503 = vld [vmem:[%s488] sm:$0xff]
      %v504 = vld [vmem:[%s493] sm:$0xff]
      %v505 = vld [vmem:[%s493 + $0x8] sm:$0xff]
      %v506 = vld [vmem:[%s3] sm:$0xff]
      %v507 = vld [vmem:[%s3 + $0x8] sm:$0xff]
      %v508 = vld [vmem:[%s3 + $0x10] sm:$0xff]
      %v509 = vld [vmem:[%s3 + $0x18] sm:$0xff]
      %v510 = vld [vmem:[%s3 + $0x20] sm:$0xff]
      %v511 = vld [vmem:[%s3 + $0x28] sm:$0xff]
      %v512 = vld [vmem:[%s3 + $0x30] sm:$0xff]
      %v513 = vld [vmem:[%s3 + $0x38] sm:$0xff]
      %v514 = vld [vmem:[%s3 + $0x40] sm:$0xff]
      %v515 = vld [vmem:[%s3 + $0x48] sm:$0xff]
      %v516 = vld [vmem:[%s3 + $0x50] sm:$0xff]
      %v517 = vld [vmem:[%s3 + $0x58] sm:$0xff]
      %v518 = vld [vmem:[%s3 + $0x60] sm:$0xff]
      %v519 = vld [vmem:[%s3 + $0x68] sm:$0xff]
      %v520 = vld [vmem:[%s3 + $0x70] sm:$0xff]
      %v521 = vld [vmem:[%s3 + $0x78] sm:$0xff]
      %v522 = vld [vmem:[%s3 + $0x80] sm:$0xff]
      %v523 = vld [vmem:[%s3 + $0x88] sm:$0xff]
      %v524 = vld [vmem:[%s3 + $0x90] sm:$0xff]
      %v525 = vld [vmem:[%s3 + $0x98] sm:$0xff]
      %v526 = vld [vmem:[%s3 + $0xa0] sm:$0xff]
      %v527 = vld [vmem:[%s3 + $0xa8] sm:$0xff]
      %v528 = vld [vmem:[%s3 + $0xb0] sm:$0xff]
      %v529 = vld [vmem:[%s3 + $0xb8] sm:$0xff]
      %v530 = vld [vmem:[%s3 + $0xc0] sm:$0xff]
      %v531 = vld [vmem:[%s3 + $0xc8] sm:$0xff]
      %v532 = vld [vmem:[%s3 + $0xd0] sm:$0xff]
      %v533 = vld [vmem:[%s3 + $0xd8] sm:$0xff]
      %v534 = vld [vmem:[%s3 + $0xe0] sm:$0xff]
      %v535 = vld [vmem:[%s3 + $0xe8] sm:$0xff]
      %v536 = vld [vmem:[%s3 + $0xf0] sm:$0xff]
      %v537 = vld [vmem:[%s3 + $0xf8] sm:$0xff]
      %v538 = vld [vmem:[%s4] sm:$0xff]
      %v539 = vld [vmem:[%s4 + $0x8] sm:$0xff]
      %v540 = vld [vmem:[%s4 + $0x10] sm:$0xff]
      %v541 = vld [vmem:[%s4 + $0x18] sm:$0xff]
      %vm542 = vcmask 261120
      %v544 = vsel %vm542, %v503, 0
      %546 = vmatprep.subr.mxu0 0.0
      %547 = vmatpush1.msra.mxu0 0.0
      %548 = vmatprep.subr.mxu0 0.0
      %549 = vmatpush1.msra.mxu0 0.0
      %550 = vmatprep.subr.mxu0 0.0
      %551 = vmatpush1.msra.mxu0 0.0
      %552 = vmatprep.subr.mxu0 0.0
      %553 = vmatpush1.msra.mxu0 0.0
      %554 = vmatprep.subr.mxu0 0.0
      %555 = vmatpush1.msra.mxu0 0.0
      %556 = vmatprep.subr.mxu0 0.0
      %557 = vmatpush1.msra.mxu0 0.0
      %558 = vmatprep.subr.mxu0 0.0
      %559 = vmatpush1.msra.mxu0 0.0
      %560 = vmatprep.subr.mxu0 0.0
      %561 = vmatpush1.msra.mxu0 0.0
      %562 = vmatprep.subr.mxu0 0.0
      %563 = vmatpush1.msra.mxu0 0.0
      %564 = vmatprep.subr.mxu0 0.0
      %565 = vmatpush1.msra.mxu0 0.0
      %566 = vmatprep.subr.mxu0 0.0
      %567 = vmatpush1.msra.mxu0 0.0
      %568 = vmatprep.subr.mxu0 0.0
      %569 = vmatpush1.msra.mxu0 0.0
      %570 = vmatprep.subr.mxu0 0.0
      %571 = vmatpush1.msra.mxu0 %v541
      %572 = vmatprep.subr.mxu0 0.0
      %573 = vmatpush1.msra.mxu0 %v540
      %574 = vmatprep.subr.mxu0 0.0
      %575 = vmatpush1.msra.mxu0 %v539
      %576 = vmatprep.subr.mxu0 0.0
      %577 = vmatpush1.msra.mxu0 %v538
      %578 = vmatprep.subr.mxu0 0.0
      %579 = vmatpush2.msra.mxu0 0.0
      %580 = vmatprep.subr.mxu0 0.0
      %581 = vmatpush2.msra.mxu0 0.0
      %582 = vmatprep.subr.mxu0 0.0
      %583 = vmatpush2.msra.mxu0 0.0
      %584 = vmatprep.subr.mxu0 0.0
      %585 = vmatpush2.msra.mxu0 0.0
      %586 = vmatprep.subr.mxu0 0.0
      %587 = vmatpush2.msra.mxu0 0.0
      %588 = vmatprep.subr.mxu0 0.0
      %589 = vmatpush2.msra.mxu0 0.0
      %590 = vmatprep.subr.mxu0 0.0
      %591 = vmatpush2.msra.mxu0 0.0
      %592 = vmatprep.subr.mxu0 0.0
      %593 = vmatpush2.msra.mxu0 0.0
      %594 = vmatprep.subr.mxu0 0.0
      %595 = vmatpush2.msra.mxu0 0.0
      %596 = vmatprep.subr.mxu0 0.0
      %597 = vmatpush2.msra.mxu0 0.0
      %598 = vmatprep.subr.mxu0 0.0
      %599 = vmatpush2.msra.mxu0 0.0
      %600 = vmatprep.subr.mxu0 0.0
      %601 = vmatpush2.msra.mxu0 0.0
      %602 = vmatprep.subr.mxu0 0.0
      %603 = vmatpush2.msra.mxu0 0.0
      %604 = vmatprep.subr.mxu0 0.0
      %605 = vmatpush2.msra.mxu0 0.0
      %606 = vmatprep.subr.mxu0 0.0
      %607 = vmatpush2.msra.mxu0 0.0
      %608 = vmatprep.subr.mxu0 0.0
      %609 = vmatpush2.msra.mxu0 0.0
      %610 = vmatprep.mubr.f32.mxu0 0.0
      %611 = vmatmul.mubr.f32.gmra.mxu0 %v544
      %v612 = vpop.f32.mrf.mxu0
      %v613 = vadd.f32 0.0, %v612
      %v614 = vpop.f32.mrf.mxu0
      %615 = vdwg.mxu0
      %617 = vrot.lane.b32.xlu0 %v613, 16
      %v618 = vpop.permute.xlu0 %617
      %620 = vrot.lane.b32.xlu0 %v613, 32
      %v621 = vpop.permute.xlu0 %620
      %623 = vrot.lane.b32.xlu0 %v613, 48
      %v624 = vpop.permute.xlu0 %623
      %vm626 = vcmask 130048
      %v627 = vsel %vm626, %v613, %v618
      %v628 = vsel %vm542, %v627, %v621
      %vm629 = vcmask 392192
      %v630 = vsel %vm629, %v628, %v624
      %631 = vmatprep.subr.mxu0 0.0
      %632 = vmatpush1.msra.mxu0 %v521
      %633 = vmatprep.subr.mxu0 0.0
      %634 = vmatpush1.msra.mxu0 %v520
      %635 = vmatprep.subr.mxu0 0.0
      %636 = vmatpush1.msra.mxu0 %v519
      %637 = vmatprep.subr.mxu0 0.0
      %638 = vmatpush1.msra.mxu0 %v518
      %639 = vmatprep.subr.mxu0 0.0
      %640 = vmatpush1.msra.mxu0 %v517
      %641 = vmatprep.subr.mxu0 0.0
      %642 = vmatpush1.msra.mxu0 %v516
      %643 = vmatprep.subr.mxu0 0.0
      %644 = vmatpush1.msra.mxu0 %v515
      %645 = vmatprep.subr.mxu0 0.0
      %646 = vmatpush1.msra.mxu0 %v514
      %647 = vmatprep.subr.mxu0 0.0
      %648 = vmatpush1.msra.mxu0 %v513
      %649 = vmatprep.subr.mxu0 0.0
      %650 = vmatpush1.msra.mxu0 %v512
      %651 = vmatprep.subr.mxu0 0.0
      %652 = vmatpush1.msra.mxu0 %v511
      %653 = vmatprep.subr.mxu0 0.0
      %654 = vmatpush1.msra.mxu0 %v510
      %655 = vmatprep.subr.mxu0 0.0
      %656 = vmatpush1.msra.mxu0 %v509
      %657 = vmatprep.subr.mxu0 0.0
      %658 = vmatpush1.msra.mxu0 %v508
      %659 = vmatprep.subr.mxu0 0.0
      %660 = vmatpush1.msra.mxu0 %v507
      %661 = vmatprep.subr.mxu0 0.0
      %662 = vmatpush1.msra.mxu0 %v506
      %663 = vmatprep.subr.mxu0 0.0
      %664 = vmatpush2.msra.mxu0 %v537
      %665 = vmatprep.subr.mxu0 0.0
      %666 = vmatpush2.msra.mxu0 %v536
      %667 = vmatprep.subr.mxu0 0.0
      %668 = vmatpush2.msra.mxu0 %v535
      %669 = vmatprep.subr.mxu0 0.0
      %670 = vmatpush2.msra.mxu0 %v534
      %671 = vmatprep.subr.mxu0 0.0
      %672 = vmatpush2.msra.mxu0 %v533
      %673 = vmatprep.subr.mxu0 0.0
      %674 = vmatpush2.msra.mxu0 %v532
      %675 = vmatprep.subr.mxu0 0.0
      %676 = vmatpush2.msra.mxu0 %v531
      %677 = vmatprep.subr.mxu0 0.0
      %678 = vmatpush2.msra.mxu0 %v530
      %679 = vmatprep.subr.mxu0 0.0
      %680 = vmatpush2.msra.mxu0 %v529
      %681 = vmatprep.subr.mxu0 0.0
      %682 = vmatpush2.msra.mxu0 %v528
      %683 = vmatprep.subr.mxu0 0.0
      %684 = vmatpush2.msra.mxu0 %v527
      %685 = vmatprep.subr.mxu0 0.0
      %686 = vmatpush2.msra.mxu0 %v526
      %687 = vmatprep.subr.mxu0 0.0
      %688 = vmatpush2.msra.mxu0 %v525
      %689 = vmatprep.subr.mxu0 0.0
      %690 = vmatpush2.msra.mxu0 %v524
      %691 = vmatprep.subr.mxu0 0.0
      %692 = vmatpush2.msra.mxu0 %v523
      %693 = vmatprep.subr.mxu0 0.0
      %694 = vmatpush2.msra.mxu0 %v522
      %695 = vmatprep.mubr.f32.mxu0 %v505
      %696 = vmatmul.mubr.f32.gmra.mxu0 %v504
      %v697 = vpop.f32.mrf.mxu0
      %v698 = vadd.f32 %v630, %v697
      %v699 = vpop.f32.mrf.mxu0
      %700 = vdwg.mxu0
      %v701 = vld [vmem:[%s5] sm:$0x1]
      %v703 = vlaneseq
      %v704 = vshrl.u32 %v703, 7
      %v705 = vsub.s32 0, %v704
      %v706 = vrot.slane %v701, %v705
      %v708 = vadd.f32 %v698, %v706
      %v709 = vmax.f32 %v708, 0.0
      %v710 = vld [vmem:[%s6] sm:$0x1]
      %v712 = vlaneseq
      %v713 = vshrl.u32 %v712, 7
      %v714 = vsub.s32 0, %v713
      %v715 = vrot.slane %v710, %v714
      %v717 = vmul.f32 %v709, %v715
      %v718 = vsel %vm626, %v717, 0.0
      %719 = vadd.xlane.f32.xlu0 %v718
      %v720 = vpop.xlane.xlu0 %719
      %722 = vrot.lane.b32.xlu0 %v717, 112
      %v723 = vpop.permute.xlu0 %722
      %v725 = vsel %vm626, %v723, 0.0
      %726 = vadd.xlane.f32.xlu0 %v725
      %v727 = vpop.xlane.xlu0 %726
      %728 = vrot.lane.b32.xlu0 %v717, 96
      %v729 = vpop.permute.xlu0 %728
      %v731 = vsel %vm626, %v729, 0.0
      %732 = vadd.xlane.f32.xlu0 %v731
      %v733 = vpop.xlane.xlu0 %732
      %734 = vrot.lane.b32.xlu0 %v717, 80
      %v735 = vpop.permute.xlu0 %734
      %v737 = vsel %vm626, %v735, 0.0
      %738 = vadd.xlane.f32.xlu0 %v737
      %v739 = vpop.xlane.xlu0 %738
      %v740 = vmax.f32 %v720, %v727
      %v741 = vmax.f32 %v740, %v733
      %v742 = vmax.f32 %v741, %v739
      %v743 = vsub.f32 %v720, %v742
      %v744 = vmul.f32 %v743, 1.442695
      %v745 = vpow.pop %v744
      %v746 = vsub.f32 %v727, %v742
      %v747 = vmul.f32 %v746, 1.442695
      %v748 = vpow.pop %v747
      %v749 = vsub.f32 %v733, %v742
      %v750 = vmul.f32 %v749, 1.442695
      %v751 = vpow.pop %v750
      %v752 = vsub.f32 %v739, %v742
      %v753 = vmul.f32 %v752, 1.442695
      %v754 = vpow.pop %v753
      %v755 = vadd.f32 %v745, %v748
      %v756 = vadd.f32 %v755, %v751
      %v757 = vadd.f32 %v756, %v754
      %v758 = vrcp.pop %v757
      %v759 = vmul.f32 %v745, %v504
      %v760 = vmul.f32 %v748, %v504
      %762 = vrot.lane.b32.xlu0 %v760, 64
      %v763 = vpop.permute.xlu0 %762
      %v765 = vadd.f32 %v759, %v763
      %v766 = vmul.f32 %v751, %v505
      %v767 = vadd.f32 %v765, %v766
      %v768 = vmul.f32 %v754, %v505
      %770 = vrot.lane.b32.xlu0 %v768, 64
      %v771 = vpop.permute.xlu0 %770
      %v773 = vadd.f32 %v767, %v771
      %v774 = vmul.f32 %v773, %v758
      %v775 = vld [vmem:[%s498] sm:$0xff]
      %v776 = vld [vmem:[%s498 + $0x8] sm:$0xff]
      %v777 = vld [vmem:[%s7] sm:$0xff]
      %v778 = vld [vmem:[%s7 + $0x8] sm:$0xff]
      %v779 = vld [vmem:[%s7 + $0x10] sm:$0xff]
      %v780 = vld [vmem:[%s7 + $0x18] sm:$0xff]
      %v781 = vld [vmem:[%s7 + $0x20] sm:$0xff]
      %v782 = vld [vmem:[%s7 + $0x28] sm:$0xff]
      %v783 = vld [vmem:[%s7 + $0x30] sm:$0xff]
      %v784 = vld [vmem:[%s7 + $0x38] sm:$0xff]
      %v785 = vld [vmem:[%s7 + $0x40] sm:$0xff]
      %v786 = vld [vmem:[%s7 + $0x48] sm:$0xff]
      %v787 = vld [vmem:[%s7 + $0x50] sm:$0xff]
      %v788 = vld [vmem:[%s7 + $0x58] sm:$0xff]
      %v789 = vld [vmem:[%s7 + $0x60] sm:$0xff]
      %v790 = vld [vmem:[%s7 + $0x68] sm:$0xff]
      %v791 = vld [vmem:[%s7 + $0x70] sm:$0xff]
      %v792 = vld [vmem:[%s7 + $0x78] sm:$0xff]
      %v793 = vld [vmem:[%s7 + $0x80] sm:$0xff]
      %v794 = vld [vmem:[%s7 + $0x88] sm:$0xff]
      %v795 = vld [vmem:[%s7 + $0x90] sm:$0xff]
      %v796 = vld [vmem:[%s7 + $0x98] sm:$0xff]
      %v797 = vld [vmem:[%s7 + $0xa0] sm:$0xff]
      %v798 = vld [vmem:[%s7 + $0xa8] sm:$0xff]
      %v799 = vld [vmem:[%s7 + $0xb0] sm:$0xff]
      %v800 = vld [vmem:[%s7 + $0xb8] sm:$0xff]
      %v801 = vld [vmem:[%s7 + $0xc0] sm:$0xff]
      %v802 = vld [vmem:[%s7 + $0xc8] sm:$0xff]
      %v803 = vld [vmem:[%s7 + $0xd0] sm:$0xff]
      %v804 = vld [vmem:[%s7 + $0xd8] sm:$0xff]
      %v805 = vld [vmem:[%s7 + $0xe0] sm:$0xff]
      %v806 = vld [vmem:[%s7 + $0xe8] sm:$0xff]
      %v807 = vld [vmem:[%s7 + $0xf0] sm:$0xff]
      %v808 = vld [vmem:[%s7 + $0xf8] sm:$0xff]
      %v809 = vld [vmem:[%s8] sm:$0xff]
      %v810 = vld [vmem:[%s8 + $0x8] sm:$0xff]
      %v811 = vld [vmem:[%s8 + $0x10] sm:$0xff]
      %v812 = vld [vmem:[%s8 + $0x18] sm:$0xff]
      %813 = vmatprep.subr.mxu0 0.0
      %814 = vmatpush1.msra.mxu0 0.0
      %815 = vmatprep.subr.mxu0 0.0
      %816 = vmatpush1.msra.mxu0 0.0
      %817 = vmatprep.subr.mxu0 0.0
      %818 = vmatpush1.msra.mxu0 0.0
      %819 = vmatprep.subr.mxu0 0.0
      %820 = vmatpush1.msra.mxu0 0.0
      %821 = vmatprep.subr.mxu0 0.0
      %822 = vmatpush1.msra.mxu0 0.0
      %823 = vmatprep.subr.mxu0 0.0
      %824 = vmatpush1.msra.mxu0 0.0
      %825 = vmatprep.subr.mxu0 0.0
      %826 = vmatpush1.msra.mxu0 0.0
      %827 = vmatprep.subr.mxu0 0.0
      %828 = vmatpush1.msra.mxu0 0.0
      %829 = vmatprep.subr.mxu0 0.0
      %830 = vmatpush1.msra.mxu0 0.0
      %831 = vmatprep.subr.mxu0 0.0
      %832 = vmatpush1.msra.mxu0 0.0
      %833 = vmatprep.subr.mxu0 0.0
      %834 = vmatpush1.msra.mxu0 0.0
      %835 = vmatprep.subr.mxu0 0.0
      %836 = vmatpush1.msra.mxu0 0.0
      %837 = vmatprep.subr.mxu0 0.0
      %838 = vmatpush1.msra.mxu0 %v812
      %839 = vmatprep.subr.mxu0 0.0
      %840 = vmatpush1.msra.mxu0 %v811
      %841 = vmatprep.subr.mxu0 0.0
      %842 = vmatpush1.msra.mxu0 %v810
      %843 = vmatprep.subr.mxu0 0.0
      %844 = vmatpush1.msra.mxu0 %v809
      %845 = vmatprep.subr.mxu0 0.0
      %846 = vmatpush2.msra.mxu0 0.0
      %847 = vmatprep.subr.mxu0 0.0
      %848 = vmatpush2.msra.mxu0 0.0
      %849 = vmatprep.subr.mxu0 0.0
      %850 = vmatpush2.msra.mxu0 0.0
      %851 = vmatprep.subr.mxu0 0.0
      %852 = vmatpush2.msra.mxu0 0.0
      %853 = vmatprep.subr.mxu0 0.0
      %854 = vmatpush2.msra.mxu0 0.0
      %855 = vmatprep.subr.mxu0 0.0
      %856 = vmatpush2.msra.mxu0 0.0
      %857 = vmatprep.subr.mxu0 0.0
      %858 = vmatpush2.msra.mxu0 0.0
      %859 = vmatprep.subr.mxu0 0.0
      %860 = vmatpush2.msra.mxu0 0.0
      %861 = vmatprep.subr.mxu0 0.0
      %862 = vmatpush2.msra.mxu0 0.0
      %863 = vmatprep.subr.mxu0 0.0
      %864 = vmatpush2.msra.mxu0 0.0
      %865 = vmatprep.subr.mxu0 0.0
      %866 = vmatpush2.msra.mxu0 0.0
      %867 = vmatprep.subr.mxu0 0.0
      %868 = vmatpush2.msra.mxu0 0.0
      %869 = vmatprep.subr.mxu0 0.0
      %870 = vmatpush2.msra.mxu0 0.0
      %871 = vmatprep.subr.mxu0 0.0
      %872 = vmatpush2.msra.mxu0 0.0
      %873 = vmatprep.subr.mxu0 0.0
      %874 = vmatpush2.msra.mxu0 0.0
      %875 = vmatprep.subr.mxu0 0.0
      %876 = vmatpush2.msra.mxu0 0.0
      %877 = vmatprep.mubr.f32.mxu0 0.0
      %878 = vmatmul.mubr.f32.gmra.mxu0 %v544
      %v879 = vpop.f32.mrf.mxu0
      %v880 = vadd.f32 0.0, %v879
      %v881 = vpop.f32.mrf.mxu0
      %882 = vdwg.mxu0
      %884 = vrot.lane.b32.xlu0 %v880, 16
      %v885 = vpop.permute.xlu0 %884
      %887 = vrot.lane.b32.xlu0 %v880, 32
      %v888 = vpop.permute.xlu0 %887
      %890 = vrot.lane.b32.xlu0 %v880, 48
      %v891 = vpop.permute.xlu0 %890
      %v893 = vsel %vm626, %v880, %v885
      %v894 = vsel %vm542, %v893, %v888
      %v895 = vsel %vm629, %v894, %v891
      %896 = vmatprep.subr.mxu0 0.0
      %897 = vmatpush1.msra.mxu0 %v792
      %898 = vmatprep.subr.mxu0 0.0
      %899 = vmatpush1.msra.mxu0 %v791
      %900 = vmatprep.subr.mxu0 0.0
      %901 = vmatpush1.msra.mxu0 %v790
      %902 = vmatprep.subr.mxu0 0.0
      %903 = vmatpush1.msra.mxu0 %v789
      %904 = vmatprep.subr.mxu0 0.0
      %905 = vmatpush1.msra.mxu0 %v788
      %906 = vmatprep.subr.mxu0 0.0
      %907 = vmatpush1.msra.mxu0 %v787
      %908 = vmatprep.subr.mxu0 0.0
      %909 = vmatpush1.msra.mxu0 %v786
      %910 = vmatprep.subr.mxu0 0.0
      %911 = vmatpush1.msra.mxu0 %v785
      %912 = vmatprep.subr.mxu0 0.0
      %913 = vmatpush1.msra.mxu0 %v784
      %914 = vmatprep.subr.mxu0 0.0
      %915 = vmatpush1.msra.mxu0 %v783
      %916 = vmatprep.subr.mxu0 0.0
      %917 = vmatpush1.msra.mxu0 %v782
      %918 = vmatprep.subr.mxu0 0.0
      %919 = vmatpush1.msra.mxu0 %v781
      %920 = vmatprep.subr.mxu0 0.0
      %921 = vmatpush1.msra.mxu0 %v780
      %922 = vmatprep.subr.mxu0 0.0
      %923 = vmatpush1.msra.mxu0 %v779
      %924 = vmatprep.subr.mxu0 0.0
      %925 = vmatpush1.msra.mxu0 %v778
      %926 = vmatprep.subr.mxu0 0.0
      %927 = vmatpush1.msra.mxu0 %v777
      %928 = vmatprep.subr.mxu0 0.0
      %929 = vmatpush2.msra.mxu0 %v808
      %930 = vmatprep.subr.mxu0 0.0
      %931 = vmatpush2.msra.mxu0 %v807
      %932 = vmatprep.subr.mxu0 0.0
      %933 = vmatpush2.msra.mxu0 %v806
      %934 = vmatprep.subr.mxu0 0.0
      %935 = vmatpush2.msra.mxu0 %v805
      %936 = vmatprep.subr.mxu0 0.0
      %937 = vmatpush2.msra.mxu0 %v804
      %938 = vmatprep.subr.mxu0 0.0
      %939 = vmatpush2.msra.mxu0 %v803
      %940 = vmatprep.subr.mxu0 0.0
      %941 = vmatpush2.msra.mxu0 %v802
      %942 = vmatprep.subr.mxu0 0.0
      %943 = vmatpush2.msra.mxu0 %v801
      %944 = vmatprep.subr.mxu0 0.0
      %945 = vmatpush2.msra.mxu0 %v800
      %946 = vmatprep.subr.mxu0 0.0
      %947 = vmatpush2.msra.mxu0 %v799
      %948 = vmatprep.subr.mxu0 0.0
      %949 = vmatpush2.msra.mxu0 %v798
      %950 = vmatprep.subr.mxu0 0.0
      %951 = vmatpush2.msra.mxu0 %v797
      %952 = vmatprep.subr.mxu0 0.0
      %953 = vmatpush2.msra.mxu0 %v796
      %954 = vmatprep.subr.mxu0 0.0
      %955 = vmatpush2.msra.mxu0 %v795
      %956 = vmatprep.subr.mxu0 0.0
      %957 = vmatpush2.msra.mxu0 %v794
      %958 = vmatprep.subr.mxu0 0.0
      %959 = vmatpush2.msra.mxu0 %v793
      %960 = vmatprep.mubr.f32.mxu0 %v776
      %961 = vmatmul.mubr.f32.gmra.mxu0 %v775
      %v962 = vpop.f32.mrf.mxu0
      %v963 = vadd.f32 %v895, %v962
      %v964 = vpop.f32.mrf.mxu0
      %965 = vdwg.mxu0
      %v966 = vld [vmem:[%s9] sm:$0x1]
      %v968 = vlaneseq
      %v969 = vshrl.u32 %v968, 7
      %v970 = vsub.s32 0, %v969
      %v971 = vrot.slane %v966, %v970
      %v973 = vadd.f32 %v963, %v971
      %v974 = vmax.f32 %v973, 0.0
      %v975 = vld [vmem:[%s10] sm:$0x1]
      %v977 = vlaneseq
      %v978 = vshrl.u32 %v977, 7
      %v979 = vsub.s32 0, %v978
      %v980 = vrot.slane %v975, %v979
      %v982 = vmul.f32 %v974, %v980
      %v983 = vsel %vm626, %v982, 0.0
      %984 = vadd.xlane.f32.xlu0 %v983
      %v985 = vpop.xlane.xlu0 %984
      %987 = vrot.lane.b32.xlu0 %v982, 112
      %v988 = vpop.permute.xlu0 %987
      %v990 = vsel %vm626, %v988, 0.0
      %991 = vadd.xlane.f32.xlu0 %v990
      %v992 = vpop.xlane.xlu0 %991
      %993 = vrot.lane.b32.xlu0 %v982, 96
      %v994 = vpop.permute.xlu0 %993
      %v996 = vsel %vm626, %v994, 0.0
      %997 = vadd.xlane.f32.xlu0 %v996
      %v998 = vpop.xlane.xlu0 %997
      %999 = vrot.lane.b32.xlu0 %v982, 80
      %v1000 = vpop.permute.xlu0 %999
      %v1002 = vsel %vm626, %v1000, 0.0
      %1003 = vadd.xlane.f32.xlu0 %v1002
      %v1004 = vpop.xlane.xlu0 %1003
      %v1005 = vmax.f32 %v985, %v992
      %v1006 = vmax.f32 %v1005, %v998
      %v1007 = vmax.f32 %v1006, %v1004
      %v1008 = vsub.f32 %v985, %v1007
      %v1009 = vmul.f32 %v1008, 1.442695
      %v1010 = vpow.pop %v1009
      %v1011 = vsub.f32 %v992, %v1007
      %v1012 = vmul.f32 %v1011, 1.442695
      %v1013 = vpow.pop %v1012
      %v1014 = vsub.f32 %v998, %v1007
      %v1015 = vmul.f32 %v1014, 1.442695
      %v1016 = vpow.pop %v1015
      %v1017 = vsub.f32 %v1004, %v1007
      %v1018 = vmul.f32 %v1017, 1.442695
      %v1019 = vpow.pop %v1018
      %v1020 = vadd.f32 %v1010, %v1013
      %v1021 = vadd.f32 %v1020, %v1016
      %v1022 = vadd.f32 %v1021, %v1019
      %v1023 = vrcp.pop %v1022
      %v1024 = vmul.f32 %v1010, %v775
      %v1025 = vmul.f32 %v1013, %v775
      %1027 = vrot.lane.b32.xlu0 %v1025, 64
      %v1028 = vpop.permute.xlu0 %1027
      %v1030 = vadd.f32 %v1024, %v1028
      %v1031 = vmul.f32 %v1016, %v776
      %v1032 = vadd.f32 %v1030, %v1031
      %v1033 = vmul.f32 %v1019, %v776
      %1035 = vrot.lane.b32.xlu0 %v1033, 64
      %v1036 = vpop.permute.xlu0 %1035
      %v1038 = vadd.f32 %v1032, %v1036
      %v1039 = vmul.f32 %v1038, %v1023
      %v1040 = vld [vmem:[%s11] sm:$0xff]
      %v1041 = vld [vmem:[%s11 + $0x8] sm:$0xff]
      %v1042 = vld [vmem:[%s11 + $0x10] sm:$0xff]
      %v1043 = vld [vmem:[%s11 + $0x18] sm:$0xff]
      %v1044 = vld [vmem:[%s12] sm:$0x1]
      %v1046 = vlaneseq
      %v1047 = vshrl.u32 %v1046, 7
      %v1048 = vsub.s32 0, %v1047
      %v1049 = vrot.slane %v1044, %v1048
      %v1052 = vsel %vm542, %v774, 0
      %v1055 = vsel %vm542, %v1039, 0
      %1057 = vmatprep.subr.mxu0 0.0
      %1058 = vmatpush1.msra.mxu0 0.0
      %1059 = vmatprep.subr.mxu0 0.0
      %1060 = vmatpush1.msra.mxu0 0.0
      %1061 = vmatprep.subr.mxu0 0.0
      %1062 = vmatpush1.msra.mxu0 0.0
      %1063 = vmatprep.subr.mxu0 0.0
      %1064 = vmatpush1.msra.mxu0 0.0
      %1065 = vmatprep.subr.mxu0 0.0
      %1066 = vmatpush1.msra.mxu0 0.0
      %1067 = vmatprep.subr.mxu0 0.0
      %1068 = vmatpush1.msra.mxu0 0.0
      %1069 = vmatprep.subr.mxu0 0.0
      %1070 = vmatpush1.msra.mxu0 0.0
      %1071 = vmatprep.subr.mxu0 0.0
      %1072 = vmatpush1.msra.mxu0 0.0
      %1073 = vmatprep.subr.mxu0 0.0
      %1074 = vmatpush1.msra.mxu0 0.0
      %1075 = vmatprep.subr.mxu0 0.0
      %1076 = vmatpush1.msra.mxu0 0.0
      %1077 = vmatprep.subr.mxu0 0.0
      %1078 = vmatpush1.msra.mxu0 0.0
      %1079 = vmatprep.subr.mxu0 0.0
      %1080 = vmatpush1.msra.mxu0 0.0
      %1081 = vmatprep.subr.mxu0 0.0
      %1082 = vmatpush1.msra.mxu0 %v1043
      %1083 = vmatprep.subr.mxu0 0.0
      %1084 = vmatpush1.msra.mxu0 %v1042
      %1085 = vmatprep.subr.mxu0 0.0
      %1086 = vmatpush1.msra.mxu0 %v1041
      %1087 = vmatprep.subr.mxu0 0.0
      %1088 = vmatpush1.msra.mxu0 %v1040
      %1089 = vmatprep.subr.mxu0 0.0
      %1090 = vmatpush2.msra.mxu0 0.0
      %1091 = vmatprep.subr.mxu0 0.0
      %1092 = vmatpush2.msra.mxu0 0.0
      %1093 = vmatprep.subr.mxu0 0.0
      %1094 = vmatpush2.msra.mxu0 0.0
      %1095 = vmatprep.subr.mxu0 0.0
      %1096 = vmatpush2.msra.mxu0 0.0
      %1097 = vmatprep.subr.mxu0 0.0
      %1098 = vmatpush2.msra.mxu0 0.0
      %1099 = vmatprep.subr.mxu0 0.0
      %1100 = vmatpush2.msra.mxu0 0.0
      %1101 = vmatprep.subr.mxu0 0.0
      %1102 = vmatpush2.msra.mxu0 0.0
      %1103 = vmatprep.subr.mxu0 0.0
      %1104 = vmatpush2.msra.mxu0 0.0
      %1105 = vmatprep.subr.mxu0 0.0
      %1106 = vmatpush2.msra.mxu0 0.0
      %1107 = vmatprep.subr.mxu0 0.0
      %1108 = vmatpush2.msra.mxu0 0.0
      %1109 = vmatprep.subr.mxu0 0.0
      %1110 = vmatpush2.msra.mxu0 0.0
      %1111 = vmatprep.subr.mxu0 0.0
      %1112 = vmatpush2.msra.mxu0 0.0
      %1113 = vmatprep.subr.mxu0 0.0
      %1114 = vmatpush2.msra.mxu0 0.0
      %1115 = vmatprep.subr.mxu0 0.0
      %1116 = vmatpush2.msra.mxu0 0.0
      %1117 = vmatprep.subr.mxu0 0.0
      %1118 = vmatpush2.msra.mxu0 0.0
      %1119 = vmatprep.subr.mxu0 0.0
      %1120 = vmatpush2.msra.mxu0 0.0
      %1121 = vmatprep.mubr.f32.mxu0 0.0
      %1122 = vmatmul.mubr.f32.gmra.mxu0 %v544
      %v1123 = vpop.f32.mrf.mxu0
      %v1124 = vadd.f32 %v1049, %v1123
      %v1125 = vpop.f32.mrf.mxu0
      %1126 = vmatprep.mubr.f32.mxu0 0.0
      %1127 = vmatmul.mubr.f32.gmra.mxu0 %v1052
      %v1128 = vpop.f32.mrf.mxu0
      %v1129 = vadd.f32 %v1049, %v1128
      %v1130 = vpop.f32.mrf.mxu0
      %1131 = vmatprep.mubr.f32.mxu0 0.0
      %1132 = vmatmul.mubr.f32.gmra.mxu0 %v1055
      %v1133 = vpop.f32.mrf.mxu0
      %v1134 = vadd.f32 %v1049, %v1133
      %v1135 = vpop.f32.mrf.mxu0
      %1136 = vdwg.mxu0
      %v1137 = vmax.f32 %v1124, 0.0
      %v1138 = vmax.f32 %v1129, 0.0
      %v1139 = vmax.f32 %v1134, 0.0
      %v1140 = vld [vmem:[%s13] sm:$0x1]
      %v1142 = vlaneseq
      %v1143 = vshrl.u32 %v1142, 7
      %v1144 = vsub.s32 0, %v1143
      %v1145 = vrot.slane %v1140, %v1144
      %v1147 = vmul.f32 %v1137, %v1145
      %v1148 = vmul.f32 %v1138, %v1145
      %v1149 = vmul.f32 %v1139, %v1145
      %v1150 = vsel %vm626, %v1147, 0.0
      %1151 = vadd.xlane.f32.xlu0 %v1150
      %v1152 = vpop.xlane.xlu0 %1151
      %v1153 = vsel %vm626, %v1148, 0.0
      %1154 = vadd.xlane.f32.xlu0 %v1153
      %v1155 = vpop.xlane.xlu0 %1154
      %v1156 = vsel %vm626, %v1149, 0.0
      %1157 = vadd.xlane.f32.xlu0 %v1156
      %v1158 = vpop.xlane.xlu0 %1157
      %v1159 = vmax.f32 %v1152, %v1155
      %v1160 = vmax.f32 %v1159, %v1158
      %v1161 = vsub.f32 %v1152, %v1160
      %v1162 = vmul.f32 %v1161, 1.442695
      %v1163 = vpow.pop %v1162
      %v1164 = vsub.f32 %v1155, %v1160
      %v1165 = vmul.f32 %v1164, 1.442695
      %v1166 = vpow.pop %v1165
      %v1167 = vsub.f32 %v1158, %v1160
      %v1168 = vmul.f32 %v1167, 1.442695
      %v1169 = vpow.pop %v1168
      %v1170 = vadd.f32 %v1163, %v1166
      %v1171 = vadd.f32 %v1170, %v1169
      %v1172 = vrcp.pop %v1171
      %v1173 = vmul.f32 %v1163, %v503
      %v1174 = vmul.f32 %v1166, %v774
      %v1175 = vadd.f32 %v1173, %v1174
      %v1176 = vmul.f32 %v1169, %v1039
      %v1177 = vadd.f32 %v1175, %v1176
      %v1178 = vmul.f32 %v1177, %v1172
      %v1179 = vmul.f32 %v1178, %v1178
      %v1180 = vsel %vm542, %v1179, 0.0
      %1181 = vadd.xlane.f32.xlu0 %v1180
      %v1182 = vpop.xlane.xlu0 %1181
      %v1183 = vrsqrt.pop %v1182
      %v1184 = vmul.f32 %v1182, %v1183
      %vm1185 = vcmp.eq.f32.partialorder %v1182, inf
      %v1186 = vsel %vm1185, %v1182, %v1184
      %vm1187 = vcmp.eq.f32.partialorder %v1182, 0.0
      %v1188 = vand.u32 %v1182, 2147483648
      %v1189 = vsel %vm1187, %v1188, %v1186
      %v1190 = vmax.f32 %v1189, 1e-12
      %v1191 = vrcp.pop %v1190
      %v1192 = vmul.f32 %v1178, %v1191
      %1194 = vrot.lane.b32.xlu0 %v1192, 32
      %v1195 = vpop.permute.xlu0 %1194
      %v1197 = vsel %vm542, %v503, %v1195
      %vm1198 = vcmask 523264
      %1199 = vst.msk [vmem:[%s502] sm:$0xff] %vm1198, %v1197
      %p1200 = scmp.lt.s32.totalorder %s25, 1
      %s1201 = scalar_select %p1200, %s25, 1
      %s1202 = smul.addr %s1201, 8
      %s1203 = scalar_lea.vmem %s14, %s1202
      // Predicated region
      $region77: #{taggcn_forward.5} parent=75 // pred_check
        %p1204 = pneg %p352
      $region78: #{taggcn_forward.5} parent=75 // pred_check_branch
        %1206 = sbr.rel (%p1204) target = $region80
      $region79: #{taggcn_forward.5} parent=75 // pred_region
        _
      $region80: #{taggcn_forward.5} parent=75 // pred_fallthru
        _
    $region76: #{taggcn_forward.5} parent=5 // pred_fallthru
      _
    %p1207 = scmp.le.s32.totalorder 2, %s20
    // Predicated region
    $region81: #{taggcn_forward.5} parent=5 // pred_check
      %p1208 = pneg %p1207
    $region82: #{taggcn_forward.5} parent=5 // pred_check_branch
      %1210 = sbr.rel (%p1208) target = $region84
    $region83: #{taggcn_forward.5} parent=5 // pred_region
      %s1211 = ssub.s32 %s20, 2
      // Predicated region
      $region85: #{taggcn_forward.5} parent=83 // pred_check
        %p1212 = pneg %p358
      $region86: #{taggcn_forward.5} parent=83 // pred_check_branch
        %1214 = sbr.rel (%p1212) target = $region88
      $region87: #{taggcn_forward.5} parent=83 // pred_region
        %p1215 = scmp.lt.s32.totalorder %s26, 1
        %s1216 = scalar_select %p1215, %s26, 1
        %s1217 = smul.addr %s1216, 8
        %s1218 = scalar_lea.vmem %s14, %s1217
      $region88: #{taggcn_forward.5} parent=83 // pred_fallthru
        _
    $region84: #{taggcn_forward.5} parent=5 // pred_fallthru
      _
  $region6: #{taggcn_forward.5} parent=0 // loop_footer
    %s24 = sadd.s32 1, %s20
  $region7: #{taggcn_forward.5} parent=0 // loop_footer_branch
    %19 = sbr.rel target = $region3
  $region8: #{taggcn_forward.5} parent=0 // loop_exit
    _

// kernel: taggcn_forward.7
$region0: #{taggcn_forward.7}
  #allocation0 [shape = 'u32[]', space=smem, size = 0x4, offset = 0x4, fixed_abs, tag = 'smem constant byte address 0x4 - core index']
  #allocation1 [shape = 'u32[144,128]{1,0:T(1,128)}', space=vmem, size = 0x12000, scoped, tag = 'internal scratch']
  #allocation2 [shape = 'f32[8,64]{1,0:T(8,128)}', space=vmem, size = 0x1000, scoped, tag = 'scratch operand']
  %s0 = inlined_call_operand.vmem [shape: f32[32,128], index: 0, kind: input, shape index: {}]
  %s1 = inlined_call_operand.vmem [shape: f32[128,64], index: 1, kind: input, shape index: {}]
  %s2 = inlined_call_operand.vmem [shape: f32[32,64], index: 2, kind: output, shape index: {}]
  %s3 = sld [smem:[#allocation0]]
  $region49: #{taggcn_forward.7} parent=0
    _
  %s5 = ssub.s32 1, %s3
  %s6 = scalar_select 0, %s5, %s3
  loop: start=0, step=1, limit=6
  $region2: #{taggcn_forward.7} parent=0 // loop_pre_header
    _
  $region3: #{taggcn_forward.7} parent=0 // loop_header
    %s8 = sphi 0, %s12
    %p9 = scmp.ge.s32.totalorder %s8, 6
    %s15 = sphi 0, %s27
    %s16 = sphi 0, %s23
    %s17 = sphi 0, %s15
    %s18 = sphi 0, %s16
    %s19 = sphi 0, %s17
    %s20 = sphi 0, %s18
    %s32 = sphi 0, %s34
    %s35 = sphi 0, %s32
    %s36 = sphi 0, %s35
    %s52 = sphi 0, %s36
    %s58 = sphi 0, %s60
    %s61 = sphi 0, %s58
    %s62 = sphi 0, %s61
    %s78 = sphi 0, %s62
    %s84 = sphi 0, %s86
    %s87 = sphi 0, %s84
    %s88 = sphi 0, %s87
    %s104 = sphi 0, %s88
  $region4: #{taggcn_forward.7} parent=0 // loop_header_branch
    %11 = sbr.rel (%p9) target = $region8
  $region5: #{taggcn_forward.7} parent=0 // loop_body
    %s13 = ssub.s32 %s8, 1
    %s14 = ssub.s32 %s8, 2
    %s21 = sadd.s32 1, %s16
    %p22 = scmp.ge.s32.totalorder %s21, 1
    %s23 = scalar_select %p22, 0, %s21
    %s24 = sadd.s32 1, %s15
    %s25 = scalar_select %p22, %s24, %s15
    %p26 = scmp.ge.s32.totalorder %s25, 4
    %s27 = scalar_select %p26, 0, %s25
    %s28 = ssub.s32 %s15, %s27
    %s29 = ssub.s32 %s16, %s23
    %s30 = sor.u32 %s28, %s29
    %p31 = scmp.eq.s32.totalorder %s30, 0
    %s33 = sadd.s32 %s32, 1
    %s34 = scalar_select %p31, %s32, %s33
    %p37 = pneg %p31
    %p38 = scmp.eq.s32.totalorder %s8, 3
    %p39 = por %p37, %p38
    %p40 = scmp.ne.s32.totalorder %s32, %s35
    %p41 = scmp.eq.s32.totalorder %s8, 0
    %p42 = por %p40, %p41
    %p43 = scmp.ne.s32.totalorder %s32, %s35
    %p44 = scmp.eq.s32.totalorder %s13, 3
    %p45 = por %p43, %p44
    %p46 = scmp.ne.s32.totalorder %s35, %s36
    %p47 = scmp.eq.s32.totalorder %s13, 0
    %p48 = por %p46, %p47
    %p49 = scmp.ne.s32.totalorder %s35, %s36
    %p50 = scmp.eq.s32.totalorder %s14, 3
    %p51 = por %p49, %p50
    %p53 = scmp.ne.s32.totalorder %s36, %s52
    %p54 = scmp.eq.s32.totalorder %s14, 0
    %p55 = por %p53, %p54
    %s56 = ssub.s32 %s16, %s23
    %p57 = scmp.eq.s32.totalorder %s56, 0
    %s59 = sadd.s32 %s58, 1
    %s60 = scalar_select %p57, %s58, %s59
    %p63 = pneg %p57
    %p64 = scmp.eq.s32.totalorder %s8, 3
    %p65 = por %p63, %p64
    %p66 = scmp.ne.s32.totalorder %s58, %s61
    %p67 = scmp.eq.s32.totalorder %s8, 0
    %p68 = por %p66, %p67
    %p69 = scmp.ne.s32.totalorder %s58, %s61
    %p70 = scmp.eq.s32.totalorder %s13, 3
    %p71 = por %p69, %p70
    %p72 = scmp.ne.s32.totalorder %s61, %s62
    %p73 = scmp.eq.s32.totalorder %s13, 0
    %p74 = por %p72, %p73
    %p75 = scmp.ne.s32.totalorder %s61, %s62
    %p76 = scmp.eq.s32.totalorder %s14, 3
    %p77 = por %p75, %p76
    %p79 = scmp.ne.s32.totalorder %s62, %s78
    %p80 = scmp.eq.s32.totalorder %s14, 0
    %p81 = por %p79, %p80
    %s82 = ssub.s32 %s15, %s27
    %p83 = scmp.eq.s32.totalorder %s82, 0
    %s85 = sadd.s32 %s84, 1
    %s86 = scalar_select %p83, %s84, %s85
    %p89 = pneg %p83
    %p90 = scmp.eq.s32.totalorder %s8, 3
    %p91 = por %p89, %p90
    %p92 = scmp.ne.s32.totalorder %s84, %s87
    %p93 = scmp.eq.s32.totalorder %s8, 0
    %p94 = por %p92, %p93
    %p95 = scmp.ne.s32.totalorder %s84, %s87
    %p96 = scmp.eq.s32.totalorder %s13, 3
    %p97 = por %p95, %p96
    %p98 = scmp.ne.s32.totalorder %s87, %s88
    %p99 = scmp.eq.s32.totalorder %s13, 0
    %p100 = por %p98, %p99
    %p101 = scmp.ne.s32.totalorder %s87, %s88
    %p102 = scmp.eq.s32.totalorder %s14, 3
    %p103 = por %p101, %p102
    %p105 = scmp.ne.s32.totalorder %s88, %s104
    %p106 = scmp.eq.s32.totalorder %s14, 0
    %p107 = por %p105, %p106
    %p108 = scmp.le.s32.totalorder 1, %s8
    %p109 = scmp.lt.s32.totalorder %s8, 5
    %p110 = pnand %p108, %p109
    %p111 = pneg %p110
    // Predicated region
    $region9: #{taggcn_forward.7} parent=5 // pred_check
      _
    $region10: #{taggcn_forward.7} parent=5 // pred_check_branch
      %113 = sbr.rel (%p110) target = $region12
    $region11: #{taggcn_forward.7} parent=5 // pred_region
      %s114 = ssub.s32 %s8, 1
      // Predicated region
      $region13: #{taggcn_forward.7} parent=11 // pred_check
        %p115 = pneg %p74
      $region14: #{taggcn_forward.7} parent=11 // pred_check_branch
        %117 = sbr.rel (%p115) target = $region16
      $region15: #{taggcn_forward.7} parent=11 // pred_region
        %s118 = smul.u32 16, %s18
        %p119 = scmp.lt.s32.totalorder %s118, 15
        %s120 = scalar_select %p119, %s118, 15
        %s121 = smul.addr %s120, 8
        %s122 = scalar_lea.vmem %s1, %s121
        %s123 = smul.u32 16, %s18
      $region16: #{taggcn_forward.7} parent=11 // pred_fallthru
        _
    $region12: #{taggcn_forward.7} parent=5 // pred_fallthru
      _
    %p124 = scmp.lt.s32.totalorder %s8, 4
    // Predicated region
    $region17: #{taggcn_forward.7} parent=5 // pred_check
      %p125 = pneg %p124
    $region18: #{taggcn_forward.7} parent=5 // pred_check_branch
      %127 = sbr.rel (%p125) target = $region20
    $region19: #{taggcn_forward.7} parent=5 // pred_region
      // Predicated region
      $region21: #{taggcn_forward.7} parent=19 // pred_check
        %p128 = pneg %p42
      $region22: #{taggcn_forward.7} parent=19 // pred_check_branch
        %130 = sbr.rel (%p128) target = $region24
      $region23: #{taggcn_forward.7} parent=19 // pred_region
        %p131 = scmp.lt.s32.totalorder %s15, 3
        %s132 = scalar_select %p131, %s15, 3
        %p133 = scmp.lt.s32.totalorder %s16, 0
        %s134 = scalar_select %p133, %s16, 0
        %s135 = sadd.s32 %s134, %s132
        %s136 = smul.addr %s135, 8
        %s137 = scalar_lea.vmem %s0, %s136
      $region24: #{taggcn_forward.7} parent=19 // pred_fallthru
        _
    $region20: #{taggcn_forward.7} parent=5 // pred_fallthru
      _
    %p138 = scmp.le.s32.totalorder 1, %s8
    %p139 = scmp.lt.s32.totalorder %s8, 5
    %p140 = pnand %p138, %p139
    %p141 = pneg %p140
    // Predicated region
    $region25: #{taggcn_forward.7} parent=5 // pred_check
      _
    $region26: #{taggcn_forward.7} parent=5 // pred_check_branch
      %143 = sbr.rel (%p140) target = $region28
    $region27: #{taggcn_forward.7} parent=5 // pred_region
      %s144 = ssub.s32 %s8, 1
      %p145 = scmp.lt.s32.totalorder %s17, 3
      %s146 = scalar_select %p145, %s17, 3
      %p147 = scmp.lt.s32.totalorder %s18, 0
      %s148 = scalar_select %p147, %s18, 0
      %s149 = sadd.s32 %s148, %s146
      %s150 = smul.addr %s149, 8
      %s151 = scalar_lea.vmem %s0, %s150
      %p152 = pneg %p48
      %p153 = pneg %p45
      %s154 = smul.u32 16, %s18
      %p155 = scmp.lt.s32.totalorder %s154, 15
      %s156 = scalar_select %p155, %s154, 15
      %s157 = smul.addr %s156, 8
      %s158 = scalar_lea.vmem %s1, %s157
      %p159 = pneg %p74
      %p160 = pneg %p71
      %p161 = pneg %p100
      %p162 = pneg %p97
      %p163 = scmp.lt.s32.totalorder %s17, 3
      %s164 = scalar_select %p163, %s17, 3
      %s165 = smul.addr %s164, 8
      %s166 = scalar_lea.vmem %s2, %s165
      %p167 = scmp.lt.s32.totalorder %s17, 3
      %s168 = scalar_select %p167, %s17, 3
      %p169 = scmp.lt.s32.totalorder %s18, 0
      %s170 = scalar_select %p169, %s18, 0
      %s171 = sadd.s32 %s170, %s168
      %s172 = smul.addr %s171, 8
      %s173 = scalar_lea.vmem %s0, %s172
      %s174 = smul.u32 16, %s18
      %p175 = scmp.lt.s32.totalorder %s174, 15
      %s176 = scalar_select %p175, %s174, 15
      %s177 = smul.addr %s176, 8
      %s178 = scalar_lea.vmem %s1, %s177
      %s179 = smul.u32 16, %s18
      %p180 = scmp.lt.s32.totalorder %s17, 3
      %s181 = scalar_select %p180, %s17, 3
      %s182 = smul.addr %s181, 8
      %s183 = scalar_lea.vmem %s2, %s182
      %p184 = scmp.eq.s32.totalorder %s18, 0
      // Predicated region
      $region29: #{taggcn_forward.7} parent=27 // pred_check
        %p185 = pneg %p184
      $region30: #{taggcn_forward.7} parent=27 // pred_check_branch
        %187 = sbr.rel (%p185) target = $region32
      $region31: #{taggcn_forward.7} parent=27 // pred_region
        %vm188 = vcmask 523264
        %189 = vst.msk [vmem:[#allocation2] sm:$0xff] %vm188, 0.0
      $region32: #{taggcn_forward.7} parent=27 // pred_fallthru
        _
      %v190 = vld [vmem:[#allocation2] sm:$0xff]
      %v191 = vld [vmem:[%s173] sm:$0xff]
      %v192 = vld [vmem:[%s178] sm:$0xff]
      %v193 = vld [vmem:[%s178 + $0x8] sm:$0xff]
      %v194 = vld [vmem:[%s178 + $0x10] sm:$0xff]
      %v195 = vld [vmem:[%s178 + $0x18] sm:$0xff]
      %v196 = vld [vmem:[%s178 + $0x20] sm:$0xff]
      %v197 = vld [vmem:[%s178 + $0x28] sm:$0xff]
      %v198 = vld [vmem:[%s178 + $0x30] sm:$0xff]
      %v199 = vld [vmem:[%s178 + $0x38] sm:$0xff]
      %v200 = vld [vmem:[%s178 + $0x40] sm:$0xff]
      %v201 = vld [vmem:[%s178 + $0x48] sm:$0xff]
      %v202 = vld [vmem:[%s178 + $0x50] sm:$0xff]
      %v203 = vld [vmem:[%s178 + $0x58] sm:$0xff]
      %v204 = vld [vmem:[%s178 + $0x60] sm:$0xff]
      %v205 = vld [vmem:[%s178 + $0x68] sm:$0xff]
      %v206 = vld [vmem:[%s178 + $0x70] sm:$0xff]
      %v207 = vld [vmem:[%s178 + $0x78] sm:$0xff]
      %208 = vmatprep.subr.mxu0 0.0
      %209 = vmatpush1.msra.mxu0 %v207
      %210 = vmatprep.subr.mxu0 0.0
      %211 = vmatpush1.msra.mxu0 %v206
      %212 = vmatprep.subr.mxu0 0.0
      %213 = vmatpush1.msra.mxu0 %v205
      %214 = vmatprep.subr.mxu0 0.0
      %215 = vmatpush1.msra.mxu0 %v204
      %216 = vmatprep.subr.mxu0 0.0
      %217 = vmatpush1.msra.mxu0 %v203
      %218 = vmatprep.subr.mxu0 0.0
      %219 = vmatpush1.msra.mxu0 %v202
      %220 = vmatprep.subr.mxu0 0.0
      %221 = vmatpush1.msra.mxu0 %v201
      %222 = vmatprep.subr.mxu0 0.0
      %223 = vmatpush1.msra.mxu0 %v200
      %224 = vmatprep.subr.mxu0 0.0
      %225 = vmatpush1.msra.mxu0 %v199
      %226 = vmatprep.subr.mxu0 0.0
      %227 = vmatpush1.msra.mxu0 %v198
      %228 = vmatprep.subr.mxu0 0.0
      %229 = vmatpush1.msra.mxu0 %v197
      %230 = vmatprep.subr.mxu0 0.0
      %231 = vmatpush1.msra.mxu0 %v196
      %232 = vmatprep.subr.mxu0 0.0
      %233 = vmatpush1.msra.mxu0 %v195
      %234 = vmatprep.subr.mxu0 0.0
      %235 = vmatpush1.msra.mxu0 %v194
      %236 = vmatprep.subr.mxu0 0.0
      %237 = vmatpush1.msra.mxu0 %v193
      %238 = vmatprep.subr.mxu0 0.0
      %239 = vmatpush1.msra.mxu0 %v192
      %240 = vmatprep.subr.mxu0 0.0
      %241 = vmatpush2.msra.mxu0 0.0
      %242 = vmatprep.subr.mxu0 0.0
      %243 = vmatpush2.msra.mxu0 0.0
      %244 = vmatprep.subr.mxu0 0.0
      %245 = vmatpush2.msra.mxu0 0.0
      %246 = vmatprep.subr.mxu0 0.0
      %247 = vmatpush2.msra.mxu0 0.0
      %248 = vmatprep.subr.mxu0 0.0
      %249 = vmatpush2.msra.mxu0 0.0
      %250 = vmatprep.subr.mxu0 0.0
      %251 = vmatpush2.msra.mxu0 0.0
      %252 = vmatprep.subr.mxu0 0.0
      %253 = vmatpush2.msra.mxu0 0.0
      %254 = vmatprep.subr.mxu0 0.0
      %255 = vmatpush2.msra.mxu0 0.0
      %256 = vmatprep.subr.mxu0 0.0
      %257 = vmatpush2.msra.mxu0 0.0
      %258 = vmatprep.subr.mxu0 0.0
      %259 = vmatpush2.msra.mxu0 0.0
      %260 = vmatprep.subr.mxu0 0.0
      %261 = vmatpush2.msra.mxu0 0.0
      %262 = vmatprep.subr.mxu0 0.0
      %263 = vmatpush2.msra.mxu0 0.0
      %264 = vmatprep.subr.mxu0 0.0
      %265 = vmatpush2.msra.mxu0 0.0
      %266 = vmatprep.subr.mxu0 0.0
      %267 = vmatpush2.msra.mxu0 0.0
      %268 = vmatprep.subr.mxu0 0.0
      %269 = vmatpush2.msra.mxu0 0.0
      %270 = vmatprep.subr.mxu0 0.0
      %271 = vmatpush2.msra.mxu0 0.0
      %272 = vmatprep.mubr.f32.mxu0 0.0
      %273 = vmatmul.mubr.f32.gmra.mxu0 %v191
      %v274 = vpop.f32.mrf.mxu0
      %v275 = vadd.f32 0.0, %v274
      %v276 = vpop.f32.mrf.mxu0
      %277 = vdwg.mxu0
      %v278 = vadd.f32 %v190, %v275
      %vm279 = vcmask 523264
      %280 = vst.msk [vmem:[#allocation2] sm:$0xff] %vm279, %v278
      // Predicated region
      $region33: #{taggcn_forward.7} parent=27 // pred_check
        %p281 = pneg %p184
      $region34: #{taggcn_forward.7} parent=27 // pred_check_branch
        %283 = sbr.rel (%p281) target = $region36
      $region35: #{taggcn_forward.7} parent=27 // pred_region
        %v284 = vld [vmem:[#allocation2] sm:$0xff]
        %285 = vst.msk [vmem:[%s183] sm:$0xff] %vm279, %v284
      $region36: #{taggcn_forward.7} parent=27 // pred_fallthru
        _
      %p286 = scmp.lt.s32.totalorder %s17, 3
      %s287 = scalar_select %p286, %s17, 3
      %s288 = smul.addr %s287, 8
      %s289 = scalar_lea.vmem %s2, %s288
      // Predicated region
      $region37: #{taggcn_forward.7} parent=27 // pred_check
        %p290 = pneg %p97
      $region38: #{taggcn_forward.7} parent=27 // pred_check_branch
        %292 = sbr.rel (%p290) target = $region40
      $region39: #{taggcn_forward.7} parent=27 // pred_region
        _
      $region40: #{taggcn_forward.7} parent=27 // pred_fallthru
        _
    $region28: #{taggcn_forward.7} parent=5 // pred_fallthru
      _
    %p293 = scmp.le.s32.totalorder 2, %s8
    // Predicated region
    $region41: #{taggcn_forward.7} parent=5 // pred_check
      %p294 = pneg %p293
    $region42: #{taggcn_forward.7} parent=5 // pred_check_branch
      %296 = sbr.rel (%p294) target = $region44
    $region43: #{taggcn_forward.7} parent=5 // pred_region
      %s297 = ssub.s32 %s8, 2
      // Predicated region
      $region45: #{taggcn_forward.7} parent=43 // pred_check
        %p298 = pneg %p103
      $region46: #{taggcn_forward.7} parent=43 // pred_check_branch
        %300 = sbr.rel (%p298) target = $region48
      $region47: #{taggcn_forward.7} parent=43 // pred_region
        %p301 = scmp.lt.s32.totalorder %s19, 3
        %s302 = scalar_select %p301, %s19, 3
        %s303 = smul.addr %s302, 8
        %s304 = scalar_lea.vmem %s2, %s303
      $region48: #{taggcn_forward.7} parent=43 // pred_fallthru
        _
    $region44: #{taggcn_forward.7} parent=5 // pred_fallthru
      _
  $region6: #{taggcn_forward.7} parent=0 // loop_footer
    %s12 = sadd.s32 1, %s8
  $region7: #{taggcn_forward.7} parent=0 // loop_footer_branch
    %7 = sbr.rel target = $region3
  $region8: #{taggcn_forward.7} parent=0 // loop_exit
    _

</llo_original>
